<compile_context>
chip_gen: v5e
topology: v5e:2x2
jax: 0.10.0
libtpu: 0.0.40
codegen_flags: <defaults>
</compile_context>

<pallas_src>
import functools

import jax
import jax.numpy as jnp
from jax.experimental import pallas as pl
from jax.experimental.pallas import tpu as pltpu


# ============================================================================
# The fused kernel: one grid step == one En/De ST-block (+ gated extras)
# ============================================================================

def fused_autoencoder_kernel(
    # ---- inputs -------------------------------------------------------
    inp_ref,       # (1, M)         f32   model input, (n,v,t) folded into lanes
    tmask_ref,     # (k_max, 1, M)  f32   valid-time mask per temporal tap
    gk_ref,        # (N, VT, VT)    bf16  per-batch graph operator A_n (x) I_T
    wfg_ref,       # (2C, k_max*C)  bf16  this block's fused temporal conv weight
    bfg_ref,       # (2C, 1)        f32
    wm_ref,        # (C, 3C)        bf16  gcn 1x1 mlp weight
    bm_ref,        # (C, 1)         f32
    gam_ref,       # (C, 1)         f32   BatchNorm2d gamma
    bet_ref,       # (C, 1)         f32   BatchNorm2d beta
    start_w_ref,   # (C, 1)         f32
    start_b_ref,   # (C, 1)         f32
    down_w_ref,    # (E, C)         f32
    down_b_ref,    # (E, 1)         f32
    up_w_ref,      # (C, E)         f32
    up_b_ref,      # (C, 1)         f32
    end_w_ref,     # (C, 1)         f32
    end_b_ref,     # (1, 1)         f32
    # ---- outputs ------------------------------------------------------
    out_vec_ref,   # (C, M)         f32   this en-block's activation
    emb_ref,       # (E, M)         f32   bottleneck embedding
    regress_ref,   # (1, M)         f32   reconstruction
    # ---- scratch (persists across grid steps) --------------------------
    x_ref,         # (C, M)         f32   running activation
    xcol_ref,      # (k_max*C, M)   bf16  in-VMEM time-im2col staging
    *, n_batch, vt, k_max, en_blocks):
  b = pl.program_id(0)
  n_steps = pl.num_programs(0)
  c = x_ref.shape[0]
  m_lanes = x_ref.shape[1]
  p_max = (k_max - 1) // 2
  bf16 = jnp.bfloat16

  # ---- step-0 prologue: start 1x1 conv (C_in == 1) -> pure VPU broadcast ---
  @pl.when(b == 0)
  def _():
    x_ref[...] = start_w_ref[...] * inp_ref[...] + start_b_ref[...]

  x = x_ref[...]                                   # block input == residual

  # ---- (a) gated temporal conv ---------------------------------------------
  # Build the k_max time-shifted copies of x directly in VMEM with lane
  # rotations (pltpu.roll == jnp.roll semantics: shift=-s gives y[l]=x[l+s]);
  # the wrap across v / batch / array boundaries is zeroed by tmask (matching
  # the 'same' zero padding of the reference convs).  One (2C, k_max*C) matmul
  # then covers all four kernel-size branches AND the filter/gate pair.
  for j in range(k_max):
    s = j - p_max
    xs = x if s == 0 else pltpu.roll(x, (-s) % m_lanes, axis=1)
    xs = xs * tmask_ref[j]
    xcol_ref[j * c:(j + 1) * c, :] = xs.astype(bf16)
  fg = jnp.dot(wfg_ref[...], xcol_ref[...],
               preferred_element_type=jnp.float32) + bfg_ref[...]
  xt = jnp.tanh(fg[:c]) * jax.nn.sigmoid(fg[c:])   # (C, M) f32

  # ---- (b) two graph-propagation hops ---------------------------------------
  # 'ncvt,nvw->ncwt' == per-batch right-multiply of the (C, VT) slab by
  # A_n (x) I_T (block-diagonal structure of the full (M, M) operator).
  xtb = xt.astype(bf16)
  x1_parts, x2_parts = [], []
  for nb in range(n_batch):
    gn = gk_ref[nb]                                # (VT, VT) bf16
    lo, hi = nb * vt, (nb + 1) * vt
    x1n = jnp.dot(xtb[:, lo:hi], gn, preferred_element_type=jnp.float32)
    x2n = jnp.dot(x1n.astype(bf16), gn, preferred_element_type=jnp.float32)
    x1_parts.append(x1n)
    x2_parts.append(x2n)
  x1 = jnp.concatenate(x1_parts, axis=1)
  x2 = jnp.concatenate(x2_parts, axis=1)

  # ---- (c) gcn 1x1 mlp on the virtual [xt, x1, x2] concat (K = 3C) ----------
  cat = jnp.concatenate([xtb, x1.astype(bf16), x2.astype(bf16)], axis=0)
  h = jnp.dot(wm_ref[...], cat, preferred_element_type=jnp.float32) + bm_ref[...]
  # TODO(synk): F.dropout(p) in the reference is stochastic (torch RNG);
  # implemented as identity here.

  # ---- (d) residual add + train-mode BatchNorm2d (batch statistics) ---------
  y = h + x
  mean = jnp.mean(y, axis=1, keepdims=True)
  var = jnp.mean(jnp.square(y - mean), axis=1, keepdims=True)
  y = (y - mean) * jax.lax.rsqrt(var + 1e-5) * gam_ref[...] + bet_ref[...]
  x_ref[...] = y

  # Encoder blocks emit their activation (out_vec_list in the reference).
  @pl.when(b < en_blocks)
  def _():
    out_vec_ref[...] = y

  # Bottleneck after the last encoder block: down_dim -> embedding -> up_dim.
  @pl.when(b == en_blocks - 1)
  def _():
    emb = jnp.dot(down_w_ref[...], y,
                  preferred_element_type=jnp.float32) + down_b_ref[...]
    emb_ref[...] = emb
    x_ref[...] = jnp.dot(up_w_ref[...], emb,
                         preferred_element_type=jnp.float32) + up_b_ref[...]

  # Final 1x1 end conv (C_out == 1): broadcast multiply + sublane reduction.
  @pl.when(b == n_steps - 1)
  def _():
    regress_ref[...] = (jnp.sum(end_w_ref[...] * y, axis=0, keepdims=True)
                        + end_b_ref[...])


# ============================================================================
# Wrapper: layout prep (graph Kronecker blocks, time masks) + the pallas_call
# ============================================================================

def autoencoder_forward(params, inp, adj, *, k_max):
  # inp: (N, V, T), adj: (N, V, V)
  n, v, t = inp.shape
  vt = v * t
  m = n * vt
  c = params["start_w"].shape[0]
  e = params["down_w"].shape[0]
  n_steps = params["wfg"].shape[0]
  en_blocks = n_steps // 2
  p_max = (k_max - 1) // 2

  inp_row = inp.reshape(1, m).astype(jnp.float32)

  # Per-batch graph operator G_n = A_n (x) I_T: right-multiplying the
  # channel-major (C, VT) slab of batch n performs 'ncvt,nvw->ncwt'.
  eye_t = jnp.eye(t, dtype=jnp.float32)
  gkron = jnp.einsum('nvw,ts->nvtws', adj.astype(jnp.float32), eye_t)
  gkron = gkron.reshape(n, vt, vt).astype(jnp.bfloat16)

  # Valid-time mask for each temporal tap ('same' zero padding at T boundary).
  t_idx = jnp.tile(jnp.arange(t, dtype=jnp.int32), n * v)          # (M,)
  shifts = jnp.arange(k_max, dtype=jnp.int32) - p_max              # (k_max,)
  tsh = t_idx[None, :] + shifts[:, None]
  tmask = ((tsh >= 0) & (tsh < t)).astype(jnp.float32).reshape(k_max, 1, m)

  kernel = functools.partial(fused_autoencoder_kernel,
                             n_batch=n, vt=vt, k_max=k_max,
                             en_blocks=en_blocks)

  grid_spec = pltpu.PrefetchScalarGridSpec(
      num_scalar_prefetch=0,
      grid=(n_steps,),
      in_specs=[
          pl.BlockSpec((1, m), lambda b: (0, 0)),                       # inp
          pl.BlockSpec((k_max, 1, m), lambda b: (0, 0, 0)),             # tmask
          pl.BlockSpec((n, vt, vt), lambda b: (0, 0, 0)),               # gkron
          pl.BlockSpec((None, 2 * c, k_max * c), lambda b: (b, 0, 0)),  # wfg
          pl.BlockSpec((None, 2 * c, 1), lambda b: (b, 0, 0)),          # bfg
          pl.BlockSpec((None, c, 3 * c), lambda b: (b, 0, 0)),          # wm
          pl.BlockSpec((None, c, 1), lambda b: (b, 0, 0)),              # bm
          pl.BlockSpec((None, c, 1), lambda b: (b, 0, 0)),              # gamma
          pl.BlockSpec((None, c, 1), lambda b: (b, 0, 0)),              # beta
          pl.BlockSpec((c, 1), lambda b: (0, 0)),                       # start_w
          pl.BlockSpec((c, 1), lambda b: (0, 0)),                       # start_b
          pl.BlockSpec((e, c), lambda b: (0, 0)),                       # down_w
          pl.BlockSpec((e, 1), lambda b: (0, 0)),                       # down_b
          pl.BlockSpec((c, e), lambda b: (0, 0)),                       # up_w
          pl.BlockSpec((c, 1), lambda b: (0, 0)),                       # up_b
          pl.BlockSpec((c, 1), lambda b: (0, 0)),                       # end_w
          pl.BlockSpec((1, 1), lambda b: (0, 0)),                       # end_b
      ],
      out_specs=[
          # Encoder steps write block b; decoder steps leave block B-1 alone
          # (revisited, flushed at the end with the last encoder value).
          pl.BlockSpec((None, c, m),
                       lambda b: (jnp.minimum(b, en_blocks - 1), 0, 0)),
          pl.BlockSpec((e, m), lambda b: (0, 0)),                       # embedding
          pl.BlockSpec((1, m), lambda b: (0, 0)),                       # regress
      ],
      scratch_shapes=[
          pltpu.VMEM((c, m), jnp.float32),                # running activation
          pltpu.VMEM((k_max * c, m), jnp.bfloat16),       # im2col staging
      ],
  )

  out_vecs, emb, regress_row = pl.pallas_call(
      kernel,
      grid_spec=grid_spec,
      out_shape=(
          jax.ShapeDtypeStruct((en_blocks, c, m), jnp.float32),
          jax.ShapeDtypeStruct((e, m), jnp.float32),
          jax.ShapeDtypeStruct((1, m), jnp.float32),
      ),
      compiler_params=pltpu.CompilerParams(
          dimension_semantics=("arbitrary",)),   # blocks are sequential
  )(inp_row, tmask, gkron,
    params["wfg"], params["bfg"], params["wm"], params["bm"],
    params["gamma"], params["beta"],
    params["start_w"], params["start_b"], params["down_w"], params["down_b"],
    params["up_w"], params["up_b"], params["end_w"], params["end_b"])

  # Channel-major (·, N*V*T) -> NCHW-style layouts for the user-facing outputs.
  def to_ncvt(a):
    return jnp.transpose(a.reshape(a.shape[0], n, v, t), (1, 0, 2, 3))

  out_vec_list = [to_ncvt(out_vecs[i]) for i in range(en_blocks)]
  embedding = to_ncvt(emb)
  # torch .squeeze(): with in_dim == 1 (and N, V, T > 1) only channel drops.
  regress = regress_row.reshape(n, v, t)
  return regress, embedding, out_vec_list


# ============================================================================
# Deterministic parameter init (PyTorch layouts) + fusion into kernel layouts
# ============================================================================

def _normal(key, shape, scale=0.1):
  return scale * jax.random.normal(key, shape, dtype=jnp.float32)


def init_branch(key, c_in, c_sp, k, transposed):
  kf, kg, kbf, kbg = jax.random.split(key, 4)
  if transposed:
    # ConvTranspose2d weight (c_in, c_out, 1, k); the centre-sliced transposed
    # conv of the De blocks equals a 'same' conv with the channel-transposed,
    # time-flipped weight.
    wf = jnp.flip(jnp.transpose(_normal(kf, (c_in, c_sp, k)), (1, 0, 2)), axis=-1)
    wg = jnp.flip(jnp.transpose(_normal(kg, (c_in, c_sp, k)), (1, 0, 2)), axis=-1)
  else:
    wf = _normal(kf, (c_sp, c_in, k))
    wg = _normal(kg, (c_sp, c_in, k))
  return {"wf": wf, "wg": wg,
          "bf": _normal(kbf, (c_sp,), 0.05),
          "bg": _normal(kbg, (c_sp,), 0.05)}


def init_block(key, hidden, kernel_list, transposed):
  c_sp = hidden // len(kernel_list)
  keys = jax.random.split(key, len(kernel_list) + 2)
  branches = [init_branch(keys[i], hidden, c_sp, kernel_list[i], transposed)
              for i in range(len(kernel_list))]
  return {"branches": branches,
          "mlp_w": _normal(keys[-2], (hidden, 3 * hidden)),
          "mlp_b": _normal(keys[-1], (hidden,), 0.05),
          "bn_gamma": jnp.ones((hidden,), jnp.float32),
          "bn_beta": jnp.zeros((hidden,), jnp.float32)}


def init_params(key, in_dim, embed_dim, hidden, kernel_list, block_num):
  keys = jax.random.split(key, 2 * block_num + 8)
  en = [init_block(keys[i], hidden, kernel_list, False) for i in range(block_num)]
  de = [init_block(keys[block_num + i], hidden, kernel_list, True)
        for i in range(block_num)]
  k = keys[2 * block_num:]
  return {"en_blocks": en, "de_blocks": de,
          "start_w": _normal(k[0], (hidden, in_dim)),
          "start_b": _normal(k[1], (hidden,), 0.05),
          "down_w": _normal(k[2], (embed_dim, hidden)),
          "down_b": _normal(k[3], (embed_dim,), 0.05),
          "up_w": _normal(k[4], (hidden, embed_dim)),
          "up_b": _normal(k[5], (hidden,), 0.05),
          "end_w": _normal(k[6], (in_dim, hidden)),
          "end_b": _normal(k[7], (in_dim,), 0.05)}


def _fuse_block(blk, kernel_list, hidden, k_max):
  """Fuse the 4 branches + filter/gate into one (2C, k_max*C) 'same'-conv weight."""
  c = hidden
  c_sp = c // len(kernel_list)
  wf9 = jnp.zeros((c, c, k_max), jnp.float32)
  wg9 = jnp.zeros((c, c, k_max), jnp.float32)
  bf, bg = [], []
  for i, (br, k) in enumerate(zip(blk["branches"], kernel_list)):
    off = (k_max - k) // 2          # centre the k-tap kernel in the k_max frame
    r0 = i * c_sp
    wf9 = wf9.at[r0:r0 + c_sp, :, off:off + k].set(br["wf"])
    wg9 = wg9.at[r0:r0 + c_sp, :, off:off + k].set(br["wg"])
    bf.append(br["bf"])
    bg.append(br["bg"])
  # column index = tap * C + c_in, matching the in-kernel im2col row ordering
  wf_col = jnp.transpose(wf9, (0, 2, 1)).reshape(c, k_max * c)
  wg_col = jnp.transpose(wg9, (0, 2, 1)).reshape(c, k_max * c)
  return {"wfg": jnp.concatenate([wf_col, wg_col], axis=0),
          "bfg": jnp.concatenate(bf + bg).reshape(2 * c, 1),
          "wm": blk["mlp_w"],
          "bm": blk["mlp_b"].reshape(c, 1),
          "gamma": blk["bn_gamma"].reshape(c, 1),
          "beta": blk["bn_beta"].reshape(c, 1)}


def prepare_params(raw, kernel_list, hidden):
  k_max = max(kernel_list)
  fused = [_fuse_block(b, kernel_list, hidden, k_max)
           for b in raw["en_blocks"] + raw["de_blocks"]]
  stack = lambda key: jnp.stack([f[key] for f in fused], axis=0)
  return {
      # Per-block weights stacked over (en_blocks + de_blocks); MXU operands
      # stored in bf16 (f32 accumulation in-kernel), everything else in f32.
      "wfg": stack("wfg").astype(jnp.bfloat16),
      "bfg": stack("bfg"),
      "wm": stack("wm").astype(jnp.bfloat16),
      "bm": stack("bm"),
      "gamma": stack("gamma"),
      "beta": stack("beta"),
      # global 1x1 convs
      "start_w": raw["start_w"].reshape(hidden, 1),   # in_dim == 1
      "start_b": raw["start_b"].reshape(hidden, 1),
      "down_w": raw["down_w"],
      "down_b": raw["down_b"].reshape(-1, 1),
      "up_w": raw["up_w"],
      "up_b": raw["up_b"].reshape(hidden, 1),
      "end_w": raw["end_w"].reshape(hidden, 1),       # (1, hidden) -> column
      "end_b": raw["end_b"].reshape(1, 1),
  }


# ============================================================================
# Main
# ============================================================================

if __name__ == "__main__":
  N, V, T = 2, 8, 16                 # batch, num_nodes, time  (M = 256 lanes)
  hidden, embed, in_dim = 32, 8, 1
  kernel_list = (3, 5, 7, 9)
  block_num = 2                      # small block count for the example

  key = jax.random.PRNGKey(0)
  kp, kx, ka = jax.random.split(key, 3)
  raw_params = init_params(kp, in_dim, embed, hidden, kernel_list, block_num)
  params = prepare_params(raw_params, kernel_list, hidden)

  inp = jax.random.normal(kx, (N, V, T), dtype=jnp.float32)
  adj = jax.nn.softmax(jax.random.normal(ka, (N, V, V), dtype=jnp.float32), axis=-1)

  fwd = jax.jit(functools.partial(autoencoder_forward, k_max=max(kernel_list)))
  regress, embedding, out_vecs = fwd(params, inp, adj)
  jax.block_until_ready((regress, embedding, out_vecs))

  assert regress.shape == (N, V, T)
  assert embedding.shape == (N, embed, V, T)
  assert len(out_vecs) == block_num and out_vecs[0].shape == (N, hidden, V, T)
  assert bool(jnp.all(jnp.isfinite(regress)))
  assert bool(jnp.all(jnp.isfinite(embedding)))
  print("KERNEL_OK")
</pallas_src>

<mosaic_0001>
module attributes {stable_mosaic.version = 11 : i64} {
  func.func @fused_autoencoder_kernel(%arg0: i32, %arg1: memref<1x256xf32, #tpu.memory_space<vmem>>, %arg2: memref<9x1x256xf32, #tpu.memory_space<vmem>>, %arg3: memref<2x128x128xbf16, #tpu.memory_space<vmem>>, %arg4: memref<1x64x288xbf16, #tpu.memory_space<vmem>>, %arg5: memref<1x64x1xf32, #tpu.memory_space<vmem>>, %arg6: memref<1x32x96xbf16, #tpu.memory_space<vmem>>, %arg7: memref<1x32x1xf32, #tpu.memory_space<vmem>>, %arg8: memref<1x32x1xf32, #tpu.memory_space<vmem>>, %arg9: memref<1x32x1xf32, #tpu.memory_space<vmem>>, %arg10: memref<32x1xf32, #tpu.memory_space<vmem>>, %arg11: memref<32x1xf32, #tpu.memory_space<vmem>>, %arg12: memref<8x32xf32, #tpu.memory_space<vmem>>, %arg13: memref<8x1xf32, #tpu.memory_space<vmem>>, %arg14: memref<32x8xf32, #tpu.memory_space<vmem>>, %arg15: memref<32x1xf32, #tpu.memory_space<vmem>>, %arg16: memref<32x1xf32, #tpu.memory_space<vmem>>, %arg17: memref<1x1xf32, #tpu.memory_space<vmem>>, %arg18: memref<1x32x256xf32, #tpu.memory_space<vmem>>, %arg19: memref<8x256xf32, #tpu.memory_space<vmem>>, %arg20: memref<1x256xf32, #tpu.memory_space<vmem>>, %arg21: memref<32x256xf32, #tpu.memory_space<vmem>>, %arg22: memref<288x256xbf16, #tpu.memory_space<vmem>>) attributes {dimension_semantics = [#tpu.dimension_semantics<arbitrary>], iteration_bounds = array<i64: 4>, scalar_prefetch = 0 : i64, scratch_operands = 2 : i64, tpu.core_type = #tpu.core_type<tc>, window_params = [{pipeline_mode = #tpu.pipeline_mode<synchronous>, transform_indices = @transform_0, window_bounds = array<i64: 1, 256>}, {pipeline_mode = #tpu.pipeline_mode<synchronous>, transform_indices = @transform_1, window_bounds = array<i64: 9, 1, 256>}, {pipeline_mode = #tpu.pipeline_mode<synchronous>, transform_indices = @transform_2, window_bounds = array<i64: 2, 128, 128>}, {transform_indices = @transform_3, window_bounds = array<i64: 1, 64, 288>}, {transform_indices = @transform_4, window_bounds = array<i64: 1, 64, 1>}, {transform_indices = @transform_5, window_bounds = array<i64: 1, 32, 96>}, {transform_indices = @transform_6, window_bounds = array<i64: 1, 32, 1>}, {transform_indices = @transform_7, window_bounds = array<i64: 1, 32, 1>}, {transform_indices = @transform_8, window_bounds = array<i64: 1, 32, 1>}, {pipeline_mode = #tpu.pipeline_mode<synchronous>, transform_indices = @transform_9, window_bounds = array<i64: 32, 1>}, {pipeline_mode = #tpu.pipeline_mode<synchronous>, transform_indices = @transform_10, window_bounds = array<i64: 32, 1>}, {pipeline_mode = #tpu.pipeline_mode<synchronous>, transform_indices = @transform_11, window_bounds = array<i64: 8, 32>}, {pipeline_mode = #tpu.pipeline_mode<synchronous>, transform_indices = @transform_12, window_bounds = array<i64: 8, 1>}, {pipeline_mode = #tpu.pipeline_mode<synchronous>, transform_indices = @transform_13, window_bounds = array<i64: 32, 8>}, {pipeline_mode = #tpu.pipeline_mode<synchronous>, transform_indices = @transform_14, window_bounds = array<i64: 32, 1>}, {pipeline_mode = #tpu.pipeline_mode<synchronous>, transform_indices = @transform_15, window_bounds = array<i64: 32, 1>}, {pipeline_mode = #tpu.pipeline_mode<synchronous>, transform_indices = @transform_16, window_bounds = array<i64: 1, 1>}, {transform_indices = @transform_17, window_bounds = array<i64: 1, 32, 256>}, {pipeline_mode = #tpu.pipeline_mode<synchronous>, transform_indices = @transform_18, window_bounds = array<i64: 8, 256>}, {pipeline_mode = #tpu.pipeline_mode<synchronous>, transform_indices = @transform_19, window_bounds = array<i64: 1, 256>}]} {
    %c0_i32 = arith.constant 0 : i32
    %0 = arith.cmpi eq, %arg0, %c0_i32 : i32
    %1 = arith.extui %0 : i1 to i32
    %c0_i32_0 = arith.constant 0 : i32
    %2 = arith.cmpi ne, %1, %c0_i32_0 : i32
    scf.if %2 {
      %c0_76 = arith.constant 0 : index
      %c0_77 = arith.constant 0 : index
      %145 = vector.load %arg10[%c0_76, %c0_77] : memref<32x1xf32, #tpu.memory_space<vmem>>, vector<32x1xf32>
      %c0_78 = arith.constant 0 : index
      %c0_79 = arith.constant 0 : index
      %146 = vector.load %arg1[%c0_78, %c0_79] : memref<1x256xf32, #tpu.memory_space<vmem>>, vector<1x256xf32>
      %147 = vector.broadcast %145 : vector<32x1xf32> to vector<32x256xf32>
      %148 = vector.broadcast %146 : vector<1x256xf32> to vector<32x256xf32>
      %149 = arith.mulf %147, %148 : vector<32x256xf32>
      %c0_80 = arith.constant 0 : index
      %c0_81 = arith.constant 0 : index
      %150 = vector.load %arg11[%c0_80, %c0_81] : memref<32x1xf32, #tpu.memory_space<vmem>>, vector<32x1xf32>
      %151 = vector.broadcast %150 : vector<32x1xf32> to vector<32x256xf32>
      %152 = arith.addf %149, %151 : vector<32x256xf32>
      %c0_82 = arith.constant 0 : index
      %c0_83 = arith.constant 0 : index
      %153 = vector.load %arg21[%c0_82, %c0_83] : memref<32x256xf32, #tpu.memory_space<vmem>>, vector<32x256xf32>
      tpu.vector_store %arg21[%c0_82, %c0_83], %152 {strides = array<i32>} : memref<32x256xf32, #tpu.memory_space<vmem>>, vector<32x256xf32>,
    } else {
    }
    %c0 = arith.constant 0 : index
    %c0_1 = arith.constant 0 : index
    %3 = vector.load %arg21[%c0, %c0_1] : memref<32x256xf32, #tpu.memory_space<vmem>>, vector<32x256xf32>
    %c4_i32 = arith.constant 4 : i32
    %4 = tpu.dynamic_rotate %3 by %c4_i32 dim 1 : vector<32x256xf32>, i32 -> vector<32x256xf32>
    %c0_2 = arith.constant 0 : index
    %c0_3 = arith.constant 0 : index
    %c0_4 = arith.constant 0 : index
    %5 = vector.load %arg2[%c0_2, %c0_3, %c0_4] : memref<9x1x256xf32, #tpu.memory_space<vmem>>, vector<1x1x256xf32>
    %6 = vector.shape_cast %5 : vector<1x1x256xf32> to vector<1x256xf32>
    %7 = vector.broadcast %6 : vector<1x256xf32> to vector<32x256xf32>
    %8 = arith.mulf %4, %7 : vector<32x256xf32>
    %9 = arith.truncf %8 : vector<32x256xf32> to vector<32x256xbf16>
    %c0_5 = arith.constant 0 : index
    %c0_6 = arith.constant 0 : index
    %10 = vector.load %arg22[%c0_5, %c0_6] : memref<288x256xbf16, #tpu.memory_space<vmem>>, vector<32x256xbf16>
    tpu.vector_store %arg22[%c0_5, %c0_6], %9 {strides = array<i32>} : memref<288x256xbf16, #tpu.memory_space<vmem>>, vector<32x256xbf16>,
    %c3_i32 = arith.constant 3 : i32
    %11 = tpu.dynamic_rotate %3 by %c3_i32 dim 1 : vector<32x256xf32>, i32 -> vector<32x256xf32>
    %c1 = arith.constant 1 : index
    %c0_7 = arith.constant 0 : index
    %c0_8 = arith.constant 0 : index
    %12 = vector.load %arg2[%c1, %c0_7, %c0_8] : memref<9x1x256xf32, #tpu.memory_space<vmem>>, vector<1x1x256xf32>
    %13 = vector.shape_cast %12 : vector<1x1x256xf32> to vector<1x256xf32>
    %14 = vector.broadcast %13 : vector<1x256xf32> to vector<32x256xf32>
    %15 = arith.mulf %11, %14 : vector<32x256xf32>
    %16 = arith.truncf %15 : vector<32x256xf32> to vector<32x256xbf16>
    %c32 = arith.constant 32 : index
    %c0_9 = arith.constant 0 : index
    %17 = vector.load %arg22[%c32, %c0_9] : memref<288x256xbf16, #tpu.memory_space<vmem>>, vector<32x256xbf16>
    tpu.vector_store %arg22[%c32, %c0_9], %16 {strides = array<i32>} : memref<288x256xbf16, #tpu.memory_space<vmem>>, vector<32x256xbf16>,
    %c2_i32 = arith.constant 2 : i32
    %18 = tpu.dynamic_rotate %3 by %c2_i32 dim 1 : vector<32x256xf32>, i32 -> vector<32x256xf32>
    %c2 = arith.constant 2 : index
    %c0_10 = arith.constant 0 : index
    %c0_11 = arith.constant 0 : index
    %19 = vector.load %arg2[%c2, %c0_10, %c0_11] : memref<9x1x256xf32, #tpu.memory_space<vmem>>, vector<1x1x256xf32>
    %20 = vector.shape_cast %19 : vector<1x1x256xf32> to vector<1x256xf32>
    %21 = vector.broadcast %20 : vector<1x256xf32> to vector<32x256xf32>
    %22 = arith.mulf %18, %21 : vector<32x256xf32>
    %23 = arith.truncf %22 : vector<32x256xf32> to vector<32x256xbf16>
    %c64 = arith.constant 64 : index
    %c0_12 = arith.constant 0 : index
    %24 = vector.load %arg22[%c64, %c0_12] : memref<288x256xbf16, #tpu.memory_space<vmem>>, vector<32x256xbf16>
    tpu.vector_store %arg22[%c64, %c0_12], %23 {strides = array<i32>} : memref<288x256xbf16, #tpu.memory_space<vmem>>, vector<32x256xbf16>,
    %c1_i32 = arith.constant 1 : i32
    %25 = tpu.dynamic_rotate %3 by %c1_i32 dim 1 : vector<32x256xf32>, i32 -> vector<32x256xf32>
    %c3 = arith.constant 3 : index
    %c0_13 = arith.constant 0 : index
    %c0_14 = arith.constant 0 : index
    %26 = vector.load %arg2[%c3, %c0_13, %c0_14] : memref<9x1x256xf32, #tpu.memory_space<vmem>>, vector<1x1x256xf32>
    %27 = vector.shape_cast %26 : vector<1x1x256xf32> to vector<1x256xf32>
    %28 = vector.broadcast %27 : vector<1x256xf32> to vector<32x256xf32>
    %29 = arith.mulf %25, %28 : vector<32x256xf32>
    %30 = arith.truncf %29 : vector<32x256xf32> to vector<32x256xbf16>
    %c96 = arith.constant 96 : index
    %c0_15 = arith.constant 0 : index
    %31 = vector.load %arg22[%c96, %c0_15] : memref<288x256xbf16, #tpu.memory_space<vmem>>, vector<32x256xbf16>
    tpu.vector_store %arg22[%c96, %c0_15], %30 {strides = array<i32>} : memref<288x256xbf16, #tpu.memory_space<vmem>>, vector<32x256xbf16>,
    %c4 = arith.constant 4 : index
    %c0_16 = arith.constant 0 : index
    %c0_17 = arith.constant 0 : index
    %32 = vector.load %arg2[%c4, %c0_16, %c0_17] : memref<9x1x256xf32, #tpu.memory_space<vmem>>, vector<1x1x256xf32>
    %33 = vector.shape_cast %32 : vector<1x1x256xf32> to vector<1x256xf32>
    %34 = vector.broadcast %33 : vector<1x256xf32> to vector<32x256xf32>
    %35 = arith.mulf %3, %34 : vector<32x256xf32>
    %36 = arith.truncf %35 : vector<32x256xf32> to vector<32x256xbf16>
    %c128 = arith.constant 128 : index
    %c0_18 = arith.constant 0 : index
    %37 = vector.load %arg22[%c128, %c0_18] : memref<288x256xbf16, #tpu.memory_space<vmem>>, vector<32x256xbf16>
    tpu.vector_store %arg22[%c128, %c0_18], %36 {strides = array<i32>} : memref<288x256xbf16, #tpu.memory_space<vmem>>, vector<32x256xbf16>,
    %c255_i32 = arith.constant 255 : i32
    %38 = tpu.dynamic_rotate %3 by %c255_i32 dim 1 : vector<32x256xf32>, i32 -> vector<32x256xf32>
    %c5 = arith.constant 5 : index
    %c0_19 = arith.constant 0 : index
    %c0_20 = arith.constant 0 : index
    %39 = vector.load %arg2[%c5, %c0_19, %c0_20] : memref<9x1x256xf32, #tpu.memory_space<vmem>>, vector<1x1x256xf32>
    %40 = vector.shape_cast %39 : vector<1x1x256xf32> to vector<1x256xf32>
    %41 = vector.broadcast %40 : vector<1x256xf32> to vector<32x256xf32>
    %42 = arith.mulf %38, %41 : vector<32x256xf32>
    %43 = arith.truncf %42 : vector<32x256xf32> to vector<32x256xbf16>
    %c160 = arith.constant 160 : index
    %c0_21 = arith.constant 0 : index
    %44 = vector.load %arg22[%c160, %c0_21] : memref<288x256xbf16, #tpu.memory_space<vmem>>, vector<32x256xbf16>
    tpu.vector_store %arg22[%c160, %c0_21], %43 {strides = array<i32>} : memref<288x256xbf16, #tpu.memory_space<vmem>>, vector<32x256xbf16>,
    %c254_i32 = arith.constant 254 : i32
    %45 = tpu.dynamic_rotate %3 by %c254_i32 dim 1 : vector<32x256xf32>, i32 -> vector<32x256xf32>
    %c6 = arith.constant 6 : index
    %c0_22 = arith.constant 0 : index
    %c0_23 = arith.constant 0 : index
    %46 = vector.load %arg2[%c6, %c0_22, %c0_23] : memref<9x1x256xf32, #tpu.memory_space<vmem>>, vector<1x1x256xf32>
    %47 = vector.shape_cast %46 : vector<1x1x256xf32> to vector<1x256xf32>
    %48 = vector.broadcast %47 : vector<1x256xf32> to vector<32x256xf32>
    %49 = arith.mulf %45, %48 : vector<32x256xf32>
    %50 = arith.truncf %49 : vector<32x256xf32> to vector<32x256xbf16>
    %c192 = arith.constant 192 : index
    %c0_24 = arith.constant 0 : index
    %51 = vector.load %arg22[%c192, %c0_24] : memref<288x256xbf16, #tpu.memory_space<vmem>>, vector<32x256xbf16>
    tpu.vector_store %arg22[%c192, %c0_24], %50 {strides = array<i32>} : memref<288x256xbf16, #tpu.memory_space<vmem>>, vector<32x256xbf16>,
    %c253_i32 = arith.constant 253 : i32
    %52 = tpu.dynamic_rotate %3 by %c253_i32 dim 1 : vector<32x256xf32>, i32 -> vector<32x256xf32>
    %c7 = arith.constant 7 : index
    %c0_25 = arith.constant 0 : index
    %c0_26 = arith.constant 0 : index
    %53 = vector.load %arg2[%c7, %c0_25, %c0_26] : memref<9x1x256xf32, #tpu.memory_space<vmem>>, vector<1x1x256xf32>
    %54 = vector.shape_cast %53 : vector<1x1x256xf32> to vector<1x256xf32>
    %55 = vector.broadcast %54 : vector<1x256xf32> to vector<32x256xf32>
    %56 = arith.mulf %52, %55 : vector<32x256xf32>
    %57 = arith.truncf %56 : vector<32x256xf32> to vector<32x256xbf16>
    %c224 = arith.constant 224 : index
    %c0_27 = arith.constant 0 : index
    %58 = vector.load %arg22[%c224, %c0_27] : memref<288x256xbf16, #tpu.memory_space<vmem>>, vector<32x256xbf16>
    tpu.vector_store %arg22[%c224, %c0_27], %57 {strides = array<i32>} : memref<288x256xbf16, #tpu.memory_space<vmem>>, vector<32x256xbf16>,
    %c252_i32 = arith.constant 252 : i32
    %59 = tpu.dynamic_rotate %3 by %c252_i32 dim 1 : vector<32x256xf32>, i32 -> vector<32x256xf32>
    %c8 = arith.constant 8 : index
    %c0_28 = arith.constant 0 : index
    %c0_29 = arith.constant 0 : index
    %60 = vector.load %arg2[%c8, %c0_28, %c0_29] : memref<9x1x256xf32, #tpu.memory_space<vmem>>, vector<1x1x256xf32>
    %61 = vector.shape_cast %60 : vector<1x1x256xf32> to vector<1x256xf32>
    %62 = vector.broadcast %61 : vector<1x256xf32> to vector<32x256xf32>
    %63 = arith.mulf %59, %62 : vector<32x256xf32>
    %64 = arith.truncf %63 : vector<32x256xf32> to vector<32x256xbf16>
    %c256 = arith.constant 256 : index
    %c0_30 = arith.constant 0 : index
    %65 = vector.load %arg22[%c256, %c0_30] : memref<288x256xbf16, #tpu.memory_space<vmem>>, vector<32x256xbf16>
    tpu.vector_store %arg22[%c256, %c0_30], %64 {strides = array<i32>} : memref<288x256xbf16, #tpu.memory_space<vmem>>, vector<32x256xbf16>,
    %c0_31 = arith.constant 0 : index
    %c0_32 = arith.constant 0 : index
    %c0_33 = arith.constant 0 : index
    %66 = vector.load %arg4[%c0_31, %c0_32, %c0_33] : memref<1x64x288xbf16, #tpu.memory_space<vmem>>, vector<1x64x288xbf16>
    %67 = vector.shape_cast %66 : vector<1x64x288xbf16> to vector<64x288xbf16>
    %c0_34 = arith.constant 0 : index
    %c0_35 = arith.constant 0 : index
    %68 = vector.load %arg22[%c0_34, %c0_35] : memref<288x256xbf16, #tpu.memory_space<vmem>>, vector<288x256xbf16>
    %cst = arith.constant dense<0.000000e+00> : vector<64x256xf32>
    %69 = tpu.matmul %67, %68, %cst {dimension_numbers = #tpu.dot_dimension_numbers<[1], [0], [0], [1], [0, 0, 1, 1], [], []>} : vector<64x288xbf16>, vector<288x256xbf16>, vector<64x256xf32> -> vector<64x256xf32>
    %c0_36 = arith.constant 0 : index
    %c0_37 = arith.constant 0 : index
    %c0_38 = arith.constant 0 : index
    %70 = vector.load %arg5[%c0_36, %c0_37, %c0_38] : memref<1x64x1xf32, #tpu.memory_space<vmem>>, vector<1x64x1xf32>
    %71 = vector.shape_cast %70 : vector<1x64x1xf32> to vector<64x1xf32>
    %72 = vector.broadcast %71 : vector<64x1xf32> to vector<64x256xf32>
    %73 = arith.addf %69, %72 : vector<64x256xf32>
    %74 = vector.extract_strided_slice %73 {offsets = [0, 0], sizes = [32, 256], strides = [1, 1]} : vector<64x256xf32> to vector<32x256xf32>
    %75 = math.tanh %74 : vector<32x256xf32>
    %76 = vector.extract_strided_slice %73 {offsets = [32, 0], sizes = [32, 256], strides = [1, 1]} : vector<64x256xf32> to vector<32x256xf32>
    %77 = arith.negf %76 : vector<32x256xf32>
    %78 = math.exp %77 : vector<32x256xf32>
    %cst_39 = arith.constant 1.000000e+00 : f32
    %79 = vector.broadcast %cst_39 : f32 to vector<32x256xf32>
    %80 = arith.addf %79, %78 : vector<32x256xf32>
    %81 = arith.divf %79, %80 : vector<32x256xf32>
    %82 = arith.mulf %75, %81 : vector<32x256xf32>
    %83 = arith.truncf %82 : vector<32x256xf32> to vector<32x256xbf16>
    %c0_40 = arith.constant 0 : index
    %c0_41 = arith.constant 0 : index
    %c0_42 = arith.constant 0 : index
    %84 = vector.load %arg3[%c0_40, %c0_41, %c0_42] : memref<2x128x128xbf16, #tpu.memory_space<vmem>>, vector<1x128x128xbf16>
    %85 = vector.shape_cast %84 : vector<1x128x128xbf16> to vector<128x128xbf16>
    %86 = vector.extract_strided_slice %83 {offsets = [0, 0], sizes = [32, 128], strides = [1, 1]} : vector<32x256xbf16> to vector<32x128xbf16>
    %cst_43 = arith.constant dense<0.000000e+00> : vector<32x128xf32>
    %87 = tpu.matmul %86, %85, %cst_43 {dimension_numbers = #tpu.dot_dimension_numbers<[1], [0], [0], [1], [0, 0, 1, 1], [], []>} : vector<32x128xbf16>, vector<128x128xbf16>, vector<32x128xf32> -> vector<32x128xf32>
    %88 = arith.truncf %87 : vector<32x128xf32> to vector<32x128xbf16>
    %cst_44 = arith.constant dense<0.000000e+00> : vector<32x128xf32>
    %89 = tpu.matmul %88, %85, %cst_44 {dimension_numbers = #tpu.dot_dimension_numbers<[1], [0], [0], [1], [0, 0, 1, 1], [], []>} : vector<32x128xbf16>, vector<128x128xbf16>, vector<32x128xf32> -> vector<32x128xf32>
    %c1_45 = arith.constant 1 : index
    %c0_46 = arith.constant 0 : index
    %c0_47 = arith.constant 0 : index
    %90 = vector.load %arg3[%c1_45, %c0_46, %c0_47] : memref<2x128x128xbf16, #tpu.memory_space<vmem>>, vector<1x128x128xbf16>
    %91 = vector.shape_cast %90 : vector<1x128x128xbf16> to vector<128x128xbf16>
    %92 = vector.extract_strided_slice %83 {offsets = [0, 128], sizes = [32, 128], strides = [1, 1]} : vector<32x256xbf16> to vector<32x128xbf16>
    %cst_48 = arith.constant dense<0.000000e+00> : vector<32x128xf32>
    %93 = tpu.matmul %92, %91, %cst_48 {dimension_numbers = #tpu.dot_dimension_numbers<[1], [0], [0], [1], [0, 0, 1, 1], [], []>} : vector<32x128xbf16>, vector<128x128xbf16>, vector<32x128xf32> -> vector<32x128xf32>
    %94 = arith.truncf %93 : vector<32x128xf32> to vector<32x128xbf16>
    %cst_49 = arith.constant dense<0.000000e+00> : vector<32x128xf32>
    %95 = tpu.matmul %94, %91, %cst_49 {dimension_numbers = #tpu.dot_dimension_numbers<[1], [0], [0], [1], [0, 0, 1, 1], [], []>} : vector<32x128xbf16>, vector<128x128xbf16>, vector<32x128xf32> -> vector<32x128xf32>
    %96 = tpu.concatenate %87, %93 in 1 : vector<32x128xf32>, vector<32x128xf32> -> vector<32x256xf32>
    %97 = tpu.concatenate %89, %95 in 1 : vector<32x128xf32>, vector<32x128xf32> -> vector<32x256xf32>
    %98 = arith.truncf %96 : vector<32x256xf32> to vector<32x256xbf16>
    %99 = arith.truncf %97 : vector<32x256xf32> to vector<32x256xbf16>
    %100 = tpu.concatenate %83, %98, %99 in 0 : vector<32x256xbf16>, vector<32x256xbf16>, vector<32x256xbf16> -> vector<96x256xbf16>
    %c0_50 = arith.constant 0 : index
    %c0_51 = arith.constant 0 : index
    %c0_52 = arith.constant 0 : index
    %101 = vector.load %arg6[%c0_50, %c0_51, %c0_52] : memref<1x32x96xbf16, #tpu.memory_space<vmem>>, vector<1x32x96xbf16>
    %102 = vector.shape_cast %101 : vector<1x32x96xbf16> to vector<32x96xbf16>
    %cst_53 = arith.constant dense<0.000000e+00> : vector<32x256xf32>
    %103 = tpu.matmul %102, %100, %cst_53 {dimension_numbers = #tpu.dot_dimension_numbers<[1], [0], [0], [1], [0, 0, 1, 1], [], []>} : vector<32x96xbf16>, vector<96x256xbf16>, vector<32x256xf32> -> vector<32x256xf32>
    %c0_54 = arith.constant 0 : index
    %c0_55 = arith.constant 0 : index
    %c0_56 = arith.constant 0 : index
    %104 = vector.load %arg7[%c0_54, %c0_55, %c0_56] : memref<1x32x1xf32, #tpu.memory_space<vmem>>, vector<1x32x1xf32>
    %105 = vector.shape_cast %104 : vector<1x32x1xf32> to vector<32x1xf32>
    %106 = vector.broadcast %105 : vector<32x1xf32> to vector<32x256xf32>
    %107 = arith.addf %103, %106 : vector<32x256xf32>
    %108 = arith.addf %107, %3 : vector<32x256xf32>
    %cst_57 = arith.constant dense<0.000000e+00> : vector<32xf32>
    %109 = vector.multi_reduction <add>, %108, %cst_57 [1] : vector<32x256xf32> to vector<32xf32>
    %110 = vector.shape_cast %109 : vector<32xf32> to vector<32x1xf32>
    %cst_58 = arith.constant 2.560000e+02 : f32
    %111 = vector.broadcast %cst_58 : f32 to vector<32x1xf32>
    %112 = arith.divf %110, %111 : vector<32x1xf32>
    %113 = vector.broadcast %112 : vector<32x1xf32> to vector<32x256xf32>
    %114 = arith.subf %108, %113 : vector<32x256xf32>
    %115 = arith.mulf %114, %114 : vector<32x256xf32>
    %cst_59 = arith.constant dense<0.000000e+00> : vector<32xf32>
    %116 = vector.multi_reduction <add>, %115, %cst_59 [1] : vector<32x256xf32> to vector<32xf32>
    %117 = vector.shape_cast %116 : vector<32xf32> to vector<32x1xf32>
    %cst_60 = arith.constant 2.560000e+02 : f32
    %118 = vector.broadcast %cst_60 : f32 to vector<32x1xf32>
    %119 = arith.divf %117, %118 : vector<32x1xf32>
    %120 = vector.broadcast %112 : vector<32x1xf32> to vector<32x256xf32>
    %121 = arith.subf %108, %120 : vector<32x256xf32>
    %cst_61 = arith.constant 9.99999974E-6 : f32
    %122 = vector.broadcast %cst_61 : f32 to vector<32x1xf32>
    %123 = arith.addf %119, %122 : vector<32x1xf32>
    %124 = math.rsqrt %123 : vector<32x1xf32>
    %125 = vector.broadcast %124 : vector<32x1xf32> to vector<32x256xf32>
    %126 = arith.mulf %121, %125 : vector<32x256xf32>
    %c0_62 = arith.constant 0 : index
    %c0_63 = arith.constant 0 : index
    %c0_64 = arith.constant 0 : index
    %127 = vector.load %arg8[%c0_62, %c0_63, %c0_64] : memref<1x32x1xf32, #tpu.memory_space<vmem>>, vector<1x32x1xf32>
    %128 = vector.shape_cast %127 : vector<1x32x1xf32> to vector<32x1xf32>
    %129 = vector.broadcast %128 : vector<32x1xf32> to vector<32x256xf32>
    %130 = arith.mulf %126, %129 : vector<32x256xf32>
    %c0_65 = arith.constant 0 : index
    %c0_66 = arith.constant 0 : index
    %c0_67 = arith.constant 0 : index
    %131 = vector.load %arg9[%c0_65, %c0_66, %c0_67] : memref<1x32x1xf32, #tpu.memory_space<vmem>>, vector<1x32x1xf32>
    %132 = vector.shape_cast %131 : vector<1x32x1xf32> to vector<32x1xf32>
    %133 = vector.broadcast %132 : vector<32x1xf32> to vector<32x256xf32>
    %134 = arith.addf %130, %133 : vector<32x256xf32>
    %c0_68 = arith.constant 0 : index
    %c0_69 = arith.constant 0 : index
    %135 = vector.load %arg21[%c0_68, %c0_69] : memref<32x256xf32, #tpu.memory_space<vmem>>, vector<32x256xf32>
    tpu.vector_store %arg21[%c0_68, %c0_69], %134 {strides = array<i32>} : memref<32x256xf32, #tpu.memory_space<vmem>>, vector<32x256xf32>,
    %c2_i32_70 = arith.constant 2 : i32
    %136 = arith.cmpi slt, %arg0, %c2_i32_70 : i32
    %137 = arith.extui %136 : i1 to i32
    %c0_i32_71 = arith.constant 0 : i32
    %138 = arith.cmpi ne, %137, %c0_i32_71 : i32
    scf.if %138 {
      %c0_76 = arith.constant 0 : index
      %c0_77 = arith.constant 0 : index
      %c0_78 = arith.constant 0 : index
      %145 = vector.load %arg18[%c0_76, %c0_77, %c0_78] : memref<1x32x256xf32, #tpu.memory_space<vmem>>, vector<1x32x256xf32>
      %146 = vector.shape_cast %145 : vector<1x32x256xf32> to vector<32x256xf32>
      %147 = vector.shape_cast %134 : vector<32x256xf32> to vector<1x32x256xf32>
      tpu.vector_store %arg18[%c0_76, %c0_77, %c0_78], %147 {strides = array<i32>} : memref<1x32x256xf32, #tpu.memory_space<vmem>>, vector<1x32x256xf32>,
    } else {
    }
    %c1_i32_72 = arith.constant 1 : i32
    %139 = arith.cmpi eq, %arg0, %c1_i32_72 : i32
    %140 = arith.extui %139 : i1 to i32
    %c0_i32_73 = arith.constant 0 : i32
    %141 = arith.cmpi ne, %140, %c0_i32_73 : i32
    scf.if %141 {
      %c0_76 = arith.constant 0 : index
      %c0_77 = arith.constant 0 : index
      %145 = vector.load %arg12[%c0_76, %c0_77] : memref<8x32xf32, #tpu.memory_space<vmem>>, vector<8x32xf32>
      %cst_78 = arith.constant dense<0.000000e+00> : vector<8x256xf32>
      %146 = tpu.matmul %145, %134, %cst_78 {dimension_numbers = #tpu.dot_dimension_numbers<[1], [0], [0], [1], [0, 0, 1, 1], [], []>} : vector<8x32xf32>, vector<32x256xf32>, vector<8x256xf32> -> vector<8x256xf32>
      %c0_79 = arith.constant 0 : index
      %c0_80 = arith.constant 0 : index
      %147 = vector.load %arg13[%c0_79, %c0_80] : memref<8x1xf32, #tpu.memory_space<vmem>>, vector<8x1xf32>
      %148 = vector.broadcast %147 : vector<8x1xf32> to vector<8x256xf32>
      %149 = arith.addf %146, %148 : vector<8x256xf32>
      %c0_81 = arith.constant 0 : index
      %c0_82 = arith.constant 0 : index
      %150 = vector.load %arg19[%c0_81, %c0_82] : memref<8x256xf32, #tpu.memory_space<vmem>>, vector<8x256xf32>
      tpu.vector_store %arg19[%c0_81, %c0_82], %149 {strides = array<i32>} : memref<8x256xf32, #tpu.memory_space<vmem>>, vector<8x256xf32>,
      %c0_83 = arith.constant 0 : index
      %c0_84 = arith.constant 0 : index
      %151 = vector.load %arg14[%c0_83, %c0_84] : memref<32x8xf32, #tpu.memory_space<vmem>>, vector<32x8xf32>
      %cst_85 = arith.constant dense<0.000000e+00> : vector<32x256xf32>
      %152 = tpu.matmul %151, %149, %cst_85 {dimension_numbers = #tpu.dot_dimension_numbers<[1], [0], [0], [1], [0, 0, 1, 1], [], []>} : vector<32x8xf32>, vector<8x256xf32>, vector<32x256xf32> -> vector<32x256xf32>
      %c0_86 = arith.constant 0 : index
      %c0_87 = arith.constant 0 : index
      %153 = vector.load %arg15[%c0_86, %c0_87] : memref<32x1xf32, #tpu.memory_space<vmem>>, vector<32x1xf32>
      %154 = vector.broadcast %153 : vector<32x1xf32> to vector<32x256xf32>
      %155 = arith.addf %152, %154 : vector<32x256xf32>
      %c0_88 = arith.constant 0 : index
      %c0_89 = arith.constant 0 : index
      %156 = vector.load %arg21[%c0_88, %c0_89] : memref<32x256xf32, #tpu.memory_space<vmem>>, vector<32x256xf32>
      tpu.vector_store %arg21[%c0_88, %c0_89], %155 {strides = array<i32>} : memref<32x256xf32, #tpu.memory_space<vmem>>, vector<32x256xf32>,
    } else {
    }
    %c3_i32_74 = arith.constant 3 : i32
    %142 = arith.cmpi eq, %arg0, %c3_i32_74 : i32
    %143 = arith.extui %142 : i1 to i32
    %c0_i32_75 = arith.constant 0 : i32
    %144 = arith.cmpi ne, %143, %c0_i32_75 : i32
    scf.if %144 {
      %c0_76 = arith.constant 0 : index
      %c0_77 = arith.constant 0 : index
      %145 = vector.load %arg16[%c0_76, %c0_77] : memref<32x1xf32, #tpu.memory_space<vmem>>, vector<32x1xf32>
      %146 = vector.broadcast %145 : vector<32x1xf32> to vector<32x256xf32>
      %147 = arith.mulf %146, %134 : vector<32x256xf32>
      %cst_78 = arith.constant dense<0.000000e+00> : vector<256xf32>
      %148 = vector.multi_reduction <add>, %147, %cst_78 [0] : vector<32x256xf32> to vector<256xf32>
      %149 = vector.shape_cast %148 : vector<256xf32> to vector<1x256xf32>
      %c0_79 = arith.constant 0 : index
      %c0_80 = arith.constant 0 : index
      %150 = vector.load %arg17[%c0_79, %c0_80] : memref<1x1xf32, #tpu.memory_space<vmem>>, vector<1x1xf32>
      %151 = vector.broadcast %150 : vector<1x1xf32> to vector<1x256xf32>
      %152 = arith.addf %149, %151 : vector<1x256xf32>
      %c0_81 = arith.constant 0 : index
      %c0_82 = arith.constant 0 : index
      %153 = vector.load %arg20[%c0_81, %c0_82] : memref<1x256xf32, #tpu.memory_space<vmem>>, vector<1x256xf32>
      tpu.vector_store %arg20[%c0_81, %c0_82], %152 {strides = array<i32>} : memref<1x256xf32, #tpu.memory_space<vmem>>, vector<1x256xf32>,
    } else {
    }
    return
  }
  func.func @transform_0(%arg0: i32) -> (i32, i32) {
    %c0_i32 = arith.constant 0 : i32
    %c0_i32_0 = arith.constant 0 : i32
    %c0_i32_1 = arith.constant 0 : i32
    return %c0_i32, %c0_i32_0 : i32, i32
  }
  func.func @transform_1(%arg0: i32) -> (i32, i32, i32) {
    %c0_i32 = arith.constant 0 : i32
    %c0_i32_0 = arith.constant 0 : i32
    %c0_i32_1 = arith.constant 0 : i32
    %c0_i32_2 = arith.constant 0 : i32
    return %c0_i32, %c0_i32_0, %c0_i32_1 : i32, i32, i32
  }
  func.func @transform_2(%arg0: i32) -> (i32, i32, i32) {
    %c0_i32 = arith.constant 0 : i32
    %c0_i32_0 = arith.constant 0 : i32
    %c0_i32_1 = arith.constant 0 : i32
    %c0_i32_2 = arith.constant 0 : i32
    return %c0_i32, %c0_i32_0, %c0_i32_1 : i32, i32, i32
  }
  func.func @transform_3(%arg0: i32) -> (i32, i32, i32) {
    %c0_i32 = arith.constant 0 : i32
    %c0_i32_0 = arith.constant 0 : i32
    %c0_i32_1 = arith.constant 0 : i32
    return %arg0, %c0_i32, %c0_i32_0 : i32, i32, i32
  }
  func.func @transform_4(%arg0: i32) -> (i32, i32, i32) {
    %c0_i32 = arith.constant 0 : i32
    %c0_i32_0 = arith.constant 0 : i32
    %c0_i32_1 = arith.constant 0 : i32
    return %arg0, %c0_i32, %c0_i32_0 : i32, i32, i32
  }
  func.func @transform_5(%arg0: i32) -> (i32, i32, i32) {
    %c0_i32 = arith.constant 0 : i32
    %c0_i32_0 = arith.constant 0 : i32
    %c0_i32_1 = arith.constant 0 : i32
    return %arg0, %c0_i32, %c0_i32_0 : i32, i32, i32
  }
  func.func @transform_6(%arg0: i32) -> (i32, i32, i32) {
    %c0_i32 = arith.constant 0 : i32
    %c0_i32_0 = arith.constant 0 : i32
    %c0_i32_1 = arith.constant 0 : i32
    return %arg0, %c0_i32, %c0_i32_0 : i32, i32, i32
  }
  func.func @transform_7(%arg0: i32) -> (i32, i32, i32) {
    %c0_i32 = arith.constant 0 : i32
    %c0_i32_0 = arith.constant 0 : i32
    %c0_i32_1 = arith.constant 0 : i32
    return %arg0, %c0_i32, %c0_i32_0 : i32, i32, i32
  }
  func.func @transform_8(%arg0: i32) -> (i32, i32, i32) {
    %c0_i32 = arith.constant 0 : i32
    %c0_i32_0 = arith.constant 0 : i32
    %c0_i32_1 = arith.constant 0 : i32
    return %arg0, %c0_i32, %c0_i32_0 : i32, i32, i32
  }
  func.func @transform_9(%arg0: i32) -> (i32, i32) {
    %c0_i32 = arith.constant 0 : i32
    %c0_i32_0 = arith.constant 0 : i32
    %c0_i32_1 = arith.constant 0 : i32
    return %c0_i32, %c0_i32_0 : i32, i32
  }
  func.func @transform_10(%arg0: i32) -> (i32, i32) {
    %c0_i32 = arith.constant 0 : i32
    %c0_i32_0 = arith.constant 0 : i32
    %c0_i32_1 = arith.constant 0 : i32
    return %c0_i32, %c0_i32_0 : i32, i32
  }
  func.func @transform_11(%arg0: i32) -> (i32, i32) {
    %c0_i32 = arith.constant 0 : i32
    %c0_i32_0 = arith.constant 0 : i32
    %c0_i32_1 = arith.constant 0 : i32
    return %c0_i32, %c0_i32_0 : i32, i32
  }
  func.func @transform_12(%arg0: i32) -> (i32, i32) {
    %c0_i32 = arith.constant 0 : i32
    %c0_i32_0 = arith.constant 0 : i32
    %c0_i32_1 = arith.constant 0 : i32
    return %c0_i32, %c0_i32_0 : i32, i32
  }
  func.func @transform_13(%arg0: i32) -> (i32, i32) {
    %c0_i32 = arith.constant 0 : i32
    %c0_i32_0 = arith.constant 0 : i32
    %c0_i32_1 = arith.constant 0 : i32
    return %c0_i32, %c0_i32_0 : i32, i32
  }
  func.func @transform_14(%arg0: i32) -> (i32, i32) {
    %c0_i32 = arith.constant 0 : i32
    %c0_i32_0 = arith.constant 0 : i32
    %c0_i32_1 = arith.constant 0 : i32
    return %c0_i32, %c0_i32_0 : i32, i32
  }
  func.func @transform_15(%arg0: i32) -> (i32, i32) {
    %c0_i32 = arith.constant 0 : i32
    %c0_i32_0 = arith.constant 0 : i32
    %c0_i32_1 = arith.constant 0 : i32
    return %c0_i32, %c0_i32_0 : i32, i32
  }
  func.func @transform_16(%arg0: i32) -> (i32, i32) {
    %c0_i32 = arith.constant 0 : i32
    %c0_i32_0 = arith.constant 0 : i32
    %c0_i32_1 = arith.constant 0 : i32
    return %c0_i32, %c0_i32_0 : i32, i32
  }
  func.func @transform_17(%arg0: i32) -> (i32, i32, i32) {
    %c1_i32 = arith.constant 1 : i32
    %0 = arith.minsi %arg0, %c1_i32 : i32
    %c0_i32 = arith.constant 0 : i32
    %c0_i32_0 = arith.constant 0 : i32
    %c0_i32_1 = arith.constant 0 : i32
    return %0, %c0_i32, %c0_i32_0 : i32, i32, i32
  }
  func.func @transform_18(%arg0: i32) -> (i32, i32) {
    %c0_i32 = arith.constant 0 : i32
    %c0_i32_0 = arith.constant 0 : i32
    %c0_i32_1 = arith.constant 0 : i32
    return %c0_i32, %c0_i32_0 : i32, i32
  }
  func.func @transform_19(%arg0: i32) -> (i32, i32) {
    %c0_i32 = arith.constant 0 : i32
    %c0_i32_0 = arith.constant 0 : i32
    %c0_i32_1 = arith.constant 0 : i32
    return %c0_i32, %c0_i32_0 : i32, i32
  }
}

</mosaic_0001>

<llo_original>
// kernel: autoencoder_forward.1
$region0: #{autoencoder_forward.1}
  #allocation0 [shape = 'u32[]', space=smem, size = 0x4, offset = 0x4, fixed_abs, tag = 'smem constant byte address 0x4 - core index']
  #allocation1 [shape = 'u32[72,128]{1,0:T(1,128)}', space=vmem, size = 0x9000, scoped, tag = 'internal scratch']
  #allocation2 [shape = 'f32[32,256]{1,0:T(8,128)}', space=vmem, size = 0x8000, scoped, tag = 'scratch operand']
  #allocation3 [shape = 'bf16[288,256]{1,0:T(8,128)(2,1)}', space=vmem, size = 0x24000, scoped, tag = 'scratch operand']
  #allocation4 [shape = 'f32[1,1]{1,0:T(1,128)S(1)}', space=vmem, size = 0x200, scoped, tag = 'scoped memory for autoencoder_forward.1']
  %s0 = inlined_call_operand.vmem [shape: f32[1,256], index: 0, kind: input, shape index: {}]
  %s1 = inlined_call_operand.vmem [shape: f32[9,1,256], index: 1, kind: input, shape index: {}]
  %s2 = inlined_call_operand.vmem [shape: bf16[2,128,128], index: 2, kind: input, shape index: {}]
  %s3 = inlined_call_operand.vmem [shape: bf16[4,64,288], index: 3, kind: input, shape index: {}]
  %s4 = inlined_call_operand.vmem [shape: f32[4,64,1], index: 4, kind: input, shape index: {}]
  %s5 = inlined_call_operand.vmem [shape: bf16[4,32,96], index: 5, kind: input, shape index: {}]
  %s6 = inlined_call_operand.vmem [shape: f32[4,32,1], index: 6, kind: input, shape index: {}]
  %s7 = inlined_call_operand.vmem [shape: f32[4,32,1], index: 7, kind: input, shape index: {}]
  %s8 = inlined_call_operand.vmem [shape: f32[4,32,1], index: 8, kind: input, shape index: {}]
  %s9 = inlined_call_operand.vmem [shape: f32[32,1], index: 9, kind: input, shape index: {}]
  %s10 = inlined_call_operand.vmem [shape: f32[32,1], index: 10, kind: input, shape index: {}]
  %s11 = inlined_call_operand.vmem [shape: f32[8,32], index: 11, kind: input, shape index: {}]
  %s12 = inlined_call_operand.vmem [shape: f32[8,1], index: 12, kind: input, shape index: {}]
  %s13 = inlined_call_operand.vmem [shape: f32[32,8], index: 13, kind: input, shape index: {}]
  %s14 = inlined_call_operand.vmem [shape: f32[32,1], index: 14, kind: input, shape index: {}]
  %s15 = inlined_call_operand.vmem [shape: f32[32,1], index: 15, kind: input, shape index: {}]
  %s16 = inlined_call_operand.<no memory space> [shape: f32[1,1], index: 16, kind: input, shape index: {}]
  %s17 = inlined_call_operand.vmem [shape: f32[2,32,256], index: 17, kind: output, shape index: {0}]
  %s18 = inlined_call_operand.vmem [shape: f32[8,256], index: 18, kind: output, shape index: {1}]
  %s19 = inlined_call_operand.vmem [shape: f32[1,256], index: 19, kind: output, shape index: {2}]
  %20 = xla_tuple %s17, %s18, %s19
  %s21 = sld [smem:[#allocation0]]
  $region133: #{autoencoder_forward.1} parent=0
    _
  %s23 = ssub.s32 1, %s21
  %s24 = scalar_select 0, %s23, %s21
  %v25 = vstv %s16
  %26 = vst [vmem:[#allocation4] sm:$0x1] %v25
  loop: start=0, step=1, limit=6
  $region2: #{autoencoder_forward.1} parent=0 // loop_pre_header
    _
  $region3: #{autoencoder_forward.1} parent=0 // loop_header
    %s28 = sphi 0, %s32
    %p29 = scmp.ge.s32.totalorder %s28, 6
    %s36 = sphi 0, %s36
    %s38 = sphi 0, %s36
    %s39 = sphi 0, %s38
    %s53 = sphi 0, %s39
    %s57 = sphi 0, %s57
    %s59 = sphi 0, %s57
    %s60 = sphi 0, %s59
    %s74 = sphi 0, %s60
    %s78 = sphi 0, %s78
    %s80 = sphi 0, %s78
    %s81 = sphi 0, %s80
    %s95 = sphi 0, %s81
    %s101 = sphi 0, %s103
    %s104 = sphi 0, %s101
    %s105 = sphi 0, %s104
    %s121 = sphi 0, %s105
    %s127 = sphi 0, %s129
    %s130 = sphi 0, %s127
    %s131 = sphi 0, %s130
    %s147 = sphi 0, %s131
    %s153 = sphi 0, %s155
    %s156 = sphi 0, %s153
    %s157 = sphi 0, %s156
    %s173 = sphi 0, %s157
    %s179 = sphi 0, %s181
    %s182 = sphi 0, %s179
    %s183 = sphi 0, %s182
    %s199 = sphi 0, %s183
    %s205 = sphi 0, %s207
    %s208 = sphi 0, %s205
    %s209 = sphi 0, %s208
    %s225 = sphi 0, %s209
    %s231 = sphi 0, %s233
    %s234 = sphi 0, %s231
    %s235 = sphi 0, %s234
    %s251 = sphi 0, %s235
    %s255 = sphi 0, %s255
    %s257 = sphi 0, %s255
    %s258 = sphi 0, %s257
    %s272 = sphi 0, %s258
    %s276 = sphi 0, %s276
    %s278 = sphi 0, %s276
    %s279 = sphi 0, %s278
    %s293 = sphi 0, %s279
    %s297 = sphi 0, %s297
    %s299 = sphi 0, %s297
    %s300 = sphi 0, %s299
    %s314 = sphi 0, %s300
    %s318 = sphi 0, %s318
    %s320 = sphi 0, %s318
    %s321 = sphi 0, %s320
    %s335 = sphi 0, %s321
    %s339 = sphi 0, %s339
    %s341 = sphi 0, %s339
    %s342 = sphi 0, %s341
    %s356 = sphi 0, %s342
    %s360 = sphi 0, %s360
    %s362 = sphi 0, %s360
    %s363 = sphi 0, %s362
    %s377 = sphi 0, %s363
    %s381 = sphi 0, %s381
    %s383 = sphi 0, %s381
    %s384 = sphi 0, %s383
    %s398 = sphi 0, %s384
    %s402 = sphi 0, %s402
    %s404 = sphi 0, %s402
    %s405 = sphi 0, %s404
    %s419 = sphi 0, %s405
    %s429 = sphi 0, %s431
    %s432 = sphi 0, %s429
    %s433 = sphi 0, %s432
    %s449 = sphi 0, %s433
    %s453 = sphi 0, %s453
    %s455 = sphi 0, %s453
    %s456 = sphi 0, %s455
    %s470 = sphi 0, %s456
    %s474 = sphi 0, %s474
    %s476 = sphi 0, %s474
    %s477 = sphi 0, %s476
    %s491 = sphi 0, %s477
  $region4: #{autoencoder_forward.1} parent=0 // loop_header_branch
    %31 = sbr.rel (%p29) target = $region8
  $region5: #{autoencoder_forward.1} parent=0 // loop_body
    %s33 = ssub.s32 %s28, 1
    %s34 = ssub.s32 %s28, 2
    %s35 = sadd.s32 %s28, 1
    %s37 = sadd.s32 %s36, 1
    %p40 = scmp.eq.s32.totalorder %s28, 3
    %p41 = scmp.ne.s32.totalorder %s36, %s38
    %p42 = scmp.eq.s32.totalorder %s28, 0
    %p43 = por %p41, %p42
    %p44 = scmp.ne.s32.totalorder %s36, %s38
    %p45 = scmp.eq.s32.totalorder %s33, 3
    %p46 = por %p44, %p45
    %p47 = scmp.ne.s32.totalorder %s38, %s39
    %p48 = scmp.eq.s32.totalorder %s33, 0
    %p49 = por %p47, %p48
    %p50 = scmp.ne.s32.totalorder %s38, %s39
    %p51 = scmp.eq.s32.totalorder %s34, 3
    %p52 = por %p50, %p51
    %p54 = scmp.ne.s32.totalorder %s39, %s53
    %p55 = scmp.eq.s32.totalorder %s34, 0
    %p56 = por %p54, %p55
    %s58 = sadd.s32 %s57, 1
    %p61 = scmp.eq.s32.totalorder %s28, 3
    %p62 = scmp.ne.s32.totalorder %s57, %s59
    %p63 = scmp.eq.s32.totalorder %s28, 0
    %p64 = por %p62, %p63
    %p65 = scmp.ne.s32.totalorder %s57, %s59
    %p66 = scmp.eq.s32.totalorder %s33, 3
    %p67 = por %p65, %p66
    %p68 = scmp.ne.s32.totalorder %s59, %s60
    %p69 = scmp.eq.s32.totalorder %s33, 0
    %p70 = por %p68, %p69
    %p71 = scmp.ne.s32.totalorder %s59, %s60
    %p72 = scmp.eq.s32.totalorder %s34, 3
    %p73 = por %p71, %p72
    %p75 = scmp.ne.s32.totalorder %s60, %s74
    %p76 = scmp.eq.s32.totalorder %s34, 0
    %p77 = por %p75, %p76
    %s79 = sadd.s32 %s78, 1
    %p82 = scmp.eq.s32.totalorder %s28, 3
    %p83 = scmp.ne.s32.totalorder %s78, %s80
    %p84 = scmp.eq.s32.totalorder %s28, 0
    %p85 = por %p83, %p84
    %p86 = scmp.ne.s32.totalorder %s78, %s80
    %p87 = scmp.eq.s32.totalorder %s33, 3
    %p88 = por %p86, %p87
    %p89 = scmp.ne.s32.totalorder %s80, %s81
    %p90 = scmp.eq.s32.totalorder %s33, 0
    %p91 = por %p89, %p90
    %p92 = scmp.ne.s32.totalorder %s80, %s81
    %p93 = scmp.eq.s32.totalorder %s34, 3
    %p94 = por %p92, %p93
    %p96 = scmp.ne.s32.totalorder %s81, %s95
    %p97 = scmp.eq.s32.totalorder %s34, 0
    %p98 = por %p96, %p97
    %s99 = ssub.s32 %s28, %s35
    %p100 = scmp.eq.s32.totalorder %s99, 0
    %s102 = sadd.s32 %s101, 1
    %s103 = scalar_select %p100, %s101, %s102
    %p106 = pneg %p100
    %p107 = scmp.eq.s32.totalorder %s28, 3
    %p108 = por %p106, %p107
    %p109 = scmp.ne.s32.totalorder %s101, %s104
    %p110 = scmp.eq.s32.totalorder %s28, 0
    %p111 = por %p109, %p110
    %p112 = scmp.ne.s32.totalorder %s101, %s104
    %p113 = scmp.eq.s32.totalorder %s33, 3
    %p114 = por %p112, %p113
    %p115 = scmp.ne.s32.totalorder %s104, %s105
    %p116 = scmp.eq.s32.totalorder %s33, 0
    %p117 = por %p115, %p116
    %p118 = scmp.ne.s32.totalorder %s104, %s105
    %p119 = scmp.eq.s32.totalorder %s34, 3
    %p120 = por %p118, %p119
    %p122 = scmp.ne.s32.totalorder %s105, %s121
    %p123 = scmp.eq.s32.totalorder %s34, 0
    %p124 = por %p122, %p123
    %s125 = ssub.s32 %s28, %s35
    %p126 = scmp.eq.s32.totalorder %s125, 0
    %s128 = sadd.s32 %s127, 1
    %s129 = scalar_select %p126, %s127, %s128
    %p132 = pneg %p126
    %p133 = scmp.eq.s32.totalorder %s28, 3
    %p134 = por %p132, %p133
    %p135 = scmp.ne.s32.totalorder %s127, %s130
    %p136 = scmp.eq.s32.totalorder %s28, 0
    %p137 = por %p135, %p136
    %p138 = scmp.ne.s32.totalorder %s127, %s130
    %p139 = scmp.eq.s32.totalorder %s33, 3
    %p140 = por %p138, %p139
    %p141 = scmp.ne.s32.totalorder %s130, %s131
    %p142 = scmp.eq.s32.totalorder %s33, 0
    %p143 = por %p141, %p142
    %p144 = scmp.ne.s32.totalorder %s130, %s131
    %p145 = scmp.eq.s32.totalorder %s34, 3
    %p146 = por %p144, %p145
    %p148 = scmp.ne.s32.totalorder %s131, %s147
    %p149 = scmp.eq.s32.totalorder %s34, 0
    %p150 = por %p148, %p149
    %s151 = ssub.s32 %s28, %s35
    %p152 = scmp.eq.s32.totalorder %s151, 0
    %s154 = sadd.s32 %s153, 1
    %s155 = scalar_select %p152, %s153, %s154
    %p158 = pneg %p152
    %p159 = scmp.eq.s32.totalorder %s28, 3
    %p160 = por %p158, %p159
    %p161 = scmp.ne.s32.totalorder %s153, %s156
    %p162 = scmp.eq.s32.totalorder %s28, 0
    %p163 = por %p161, %p162
    %p164 = scmp.ne.s32.totalorder %s153, %s156
    %p165 = scmp.eq.s32.totalorder %s33, 3
    %p166 = por %p164, %p165
    %p167 = scmp.ne.s32.totalorder %s156, %s157
    %p168 = scmp.eq.s32.totalorder %s33, 0
    %p169 = por %p167, %p168
    %p170 = scmp.ne.s32.totalorder %s156, %s157
    %p171 = scmp.eq.s32.totalorder %s34, 3
    %p172 = por %p170, %p171
    %p174 = scmp.ne.s32.totalorder %s157, %s173
    %p175 = scmp.eq.s32.totalorder %s34, 0
    %p176 = por %p174, %p175
    %s177 = ssub.s32 %s28, %s35
    %p178 = scmp.eq.s32.totalorder %s177, 0
    %s180 = sadd.s32 %s179, 1
    %s181 = scalar_select %p178, %s179, %s180
    %p184 = pneg %p178
    %p185 = scmp.eq.s32.totalorder %s28, 3
    %p186 = por %p184, %p185
    %p187 = scmp.ne.s32.totalorder %s179, %s182
    %p188 = scmp.eq.s32.totalorder %s28, 0
    %p189 = por %p187, %p188
    %p190 = scmp.ne.s32.totalorder %s179, %s182
    %p191 = scmp.eq.s32.totalorder %s33, 3
    %p192 = por %p190, %p191
    %p193 = scmp.ne.s32.totalorder %s182, %s183
    %p194 = scmp.eq.s32.totalorder %s33, 0
    %p195 = por %p193, %p194
    %p196 = scmp.ne.s32.totalorder %s182, %s183
    %p197 = scmp.eq.s32.totalorder %s34, 3
    %p198 = por %p196, %p197
    %p200 = scmp.ne.s32.totalorder %s183, %s199
    %p201 = scmp.eq.s32.totalorder %s34, 0
    %p202 = por %p200, %p201
    %s203 = ssub.s32 %s28, %s35
    %p204 = scmp.eq.s32.totalorder %s203, 0
    %s206 = sadd.s32 %s205, 1
    %s207 = scalar_select %p204, %s205, %s206
    %p210 = pneg %p204
    %p211 = scmp.eq.s32.totalorder %s28, 3
    %p212 = por %p210, %p211
    %p213 = scmp.ne.s32.totalorder %s205, %s208
    %p214 = scmp.eq.s32.totalorder %s28, 0
    %p215 = por %p213, %p214
    %p216 = scmp.ne.s32.totalorder %s205, %s208
    %p217 = scmp.eq.s32.totalorder %s33, 3
    %p218 = por %p216, %p217
    %p219 = scmp.ne.s32.totalorder %s208, %s209
    %p220 = scmp.eq.s32.totalorder %s33, 0
    %p221 = por %p219, %p220
    %p222 = scmp.ne.s32.totalorder %s208, %s209
    %p223 = scmp.eq.s32.totalorder %s34, 3
    %p224 = por %p222, %p223
    %p226 = scmp.ne.s32.totalorder %s209, %s225
    %p227 = scmp.eq.s32.totalorder %s34, 0
    %p228 = por %p226, %p227
    %s229 = ssub.s32 %s28, %s35
    %p230 = scmp.eq.s32.totalorder %s229, 0
    %s232 = sadd.s32 %s231, 1
    %s233 = scalar_select %p230, %s231, %s232
    %p236 = pneg %p230
    %p237 = scmp.eq.s32.totalorder %s28, 3
    %p238 = por %p236, %p237
    %p239 = scmp.ne.s32.totalorder %s231, %s234
    %p240 = scmp.eq.s32.totalorder %s28, 0
    %p241 = por %p239, %p240
    %p242 = scmp.ne.s32.totalorder %s231, %s234
    %p243 = scmp.eq.s32.totalorder %s33, 3
    %p244 = por %p242, %p243
    %p245 = scmp.ne.s32.totalorder %s234, %s235
    %p246 = scmp.eq.s32.totalorder %s33, 0
    %p247 = por %p245, %p246
    %p248 = scmp.ne.s32.totalorder %s234, %s235
    %p249 = scmp.eq.s32.totalorder %s34, 3
    %p250 = por %p248, %p249
    %p252 = scmp.ne.s32.totalorder %s235, %s251
    %p253 = scmp.eq.s32.totalorder %s34, 0
    %p254 = por %p252, %p253
    %s256 = sadd.s32 %s255, 1
    %p259 = scmp.eq.s32.totalorder %s28, 3
    %p260 = scmp.ne.s32.totalorder %s255, %s257
    %p261 = scmp.eq.s32.totalorder %s28, 0
    %p262 = por %p260, %p261
    %p263 = scmp.ne.s32.totalorder %s255, %s257
    %p264 = scmp.eq.s32.totalorder %s33, 3
    %p265 = por %p263, %p264
    %p266 = scmp.ne.s32.totalorder %s257, %s258
    %p267 = scmp.eq.s32.totalorder %s33, 0
    %p268 = por %p266, %p267
    %p269 = scmp.ne.s32.totalorder %s257, %s258
    %p270 = scmp.eq.s32.totalorder %s34, 3
    %p271 = por %p269, %p270
    %p273 = scmp.ne.s32.totalorder %s258, %s272
    %p274 = scmp.eq.s32.totalorder %s34, 0
    %p275 = por %p273, %p274
    %s277 = sadd.s32 %s276, 1
    %p280 = scmp.eq.s32.totalorder %s28, 3
    %p281 = scmp.ne.s32.totalorder %s276, %s278
    %p282 = scmp.eq.s32.totalorder %s28, 0
    %p283 = por %p281, %p282
    %p284 = scmp.ne.s32.totalorder %s276, %s278
    %p285 = scmp.eq.s32.totalorder %s33, 3
    %p286 = por %p284, %p285
    %p287 = scmp.ne.s32.totalorder %s278, %s279
    %p288 = scmp.eq.s32.totalorder %s33, 0
    %p289 = por %p287, %p288
    %p290 = scmp.ne.s32.totalorder %s278, %s279
    %p291 = scmp.eq.s32.totalorder %s34, 3
    %p292 = por %p290, %p291
    %p294 = scmp.ne.s32.totalorder %s279, %s293
    %p295 = scmp.eq.s32.totalorder %s34, 0
    %p296 = por %p294, %p295
    %s298 = sadd.s32 %s297, 1
    %p301 = scmp.eq.s32.totalorder %s28, 3
    %p302 = scmp.ne.s32.totalorder %s297, %s299
    %p303 = scmp.eq.s32.totalorder %s28, 0
    %p304 = por %p302, %p303
    %p305 = scmp.ne.s32.totalorder %s297, %s299
    %p306 = scmp.eq.s32.totalorder %s33, 3
    %p307 = por %p305, %p306
    %p308 = scmp.ne.s32.totalorder %s299, %s300
    %p309 = scmp.eq.s32.totalorder %s33, 0
    %p310 = por %p308, %p309
    %p311 = scmp.ne.s32.totalorder %s299, %s300
    %p312 = scmp.eq.s32.totalorder %s34, 3
    %p313 = por %p311, %p312
    %p315 = scmp.ne.s32.totalorder %s300, %s314
    %p316 = scmp.eq.s32.totalorder %s34, 0
    %p317 = por %p315, %p316
    %s319 = sadd.s32 %s318, 1
    %p322 = scmp.eq.s32.totalorder %s28, 3
    %p323 = scmp.ne.s32.totalorder %s318, %s320
    %p324 = scmp.eq.s32.totalorder %s28, 0
    %p325 = por %p323, %p324
    %p326 = scmp.ne.s32.totalorder %s318, %s320
    %p327 = scmp.eq.s32.totalorder %s33, 3
    %p328 = por %p326, %p327
    %p329 = scmp.ne.s32.totalorder %s320, %s321
    %p330 = scmp.eq.s32.totalorder %s33, 0
    %p331 = por %p329, %p330
    %p332 = scmp.ne.s32.totalorder %s320, %s321
    %p333 = scmp.eq.s32.totalorder %s34, 3
    %p334 = por %p332, %p333
    %p336 = scmp.ne.s32.totalorder %s321, %s335
    %p337 = scmp.eq.s32.totalorder %s34, 0
    %p338 = por %p336, %p337
    %s340 = sadd.s32 %s339, 1
    %p343 = scmp.eq.s32.totalorder %s28, 3
    %p344 = scmp.ne.s32.totalorder %s339, %s341
    %p345 = scmp.eq.s32.totalorder %s28, 0
    %p346 = por %p344, %p345
    %p347 = scmp.ne.s32.totalorder %s339, %s341
    %p348 = scmp.eq.s32.totalorder %s33, 3
    %p349 = por %p347, %p348
    %p350 = scmp.ne.s32.totalorder %s341, %s342
    %p351 = scmp.eq.s32.totalorder %s33, 0
    %p352 = por %p350, %p351
    %p353 = scmp.ne.s32.totalorder %s341, %s342
    %p354 = scmp.eq.s32.totalorder %s34, 3
    %p355 = por %p353, %p354
    %p357 = scmp.ne.s32.totalorder %s342, %s356
    %p358 = scmp.eq.s32.totalorder %s34, 0
    %p359 = por %p357, %p358
    %s361 = sadd.s32 %s360, 1
    %p364 = scmp.eq.s32.totalorder %s28, 3
    %p365 = scmp.ne.s32.totalorder %s360, %s362
    %p366 = scmp.eq.s32.totalorder %s28, 0
    %p367 = por %p365, %p366
    %p368 = scmp.ne.s32.totalorder %s360, %s362
    %p369 = scmp.eq.s32.totalorder %s33, 3
    %p370 = por %p368, %p369
    %p371 = scmp.ne.s32.totalorder %s362, %s363
    %p372 = scmp.eq.s32.totalorder %s33, 0
    %p373 = por %p371, %p372
    %p374 = scmp.ne.s32.totalorder %s362, %s363
    %p375 = scmp.eq.s32.totalorder %s34, 3
    %p376 = por %p374, %p375
    %p378 = scmp.ne.s32.totalorder %s363, %s377
    %p379 = scmp.eq.s32.totalorder %s34, 0
    %p380 = por %p378, %p379
    %s382 = sadd.s32 %s381, 1
    %p385 = scmp.eq.s32.totalorder %s28, 3
    %p386 = scmp.ne.s32.totalorder %s381, %s383
    %p387 = scmp.eq.s32.totalorder %s28, 0
    %p388 = por %p386, %p387
    %p389 = scmp.ne.s32.totalorder %s381, %s383
    %p390 = scmp.eq.s32.totalorder %s33, 3
    %p391 = por %p389, %p390
    %p392 = scmp.ne.s32.totalorder %s383, %s384
    %p393 = scmp.eq.s32.totalorder %s33, 0
    %p394 = por %p392, %p393
    %p395 = scmp.ne.s32.totalorder %s383, %s384
    %p396 = scmp.eq.s32.totalorder %s34, 3
    %p397 = por %p395, %p396
    %p399 = scmp.ne.s32.totalorder %s384, %s398
    %p400 = scmp.eq.s32.totalorder %s34, 0
    %p401 = por %p399, %p400
    %s403 = sadd.s32 %s402, 1
    %p406 = scmp.eq.s32.totalorder %s28, 3
    %p407 = scmp.ne.s32.totalorder %s402, %s404
    %p408 = scmp.eq.s32.totalorder %s28, 0
    %p409 = por %p407, %p408
    %p410 = scmp.ne.s32.totalorder %s402, %s404
    %p411 = scmp.eq.s32.totalorder %s33, 3
    %p412 = por %p410, %p411
    %p413 = scmp.ne.s32.totalorder %s404, %s405
    %p414 = scmp.eq.s32.totalorder %s33, 0
    %p415 = por %p413, %p414
    %p416 = scmp.ne.s32.totalorder %s404, %s405
    %p417 = scmp.eq.s32.totalorder %s34, 3
    %p418 = por %p416, %p417
    %p420 = scmp.ne.s32.totalorder %s405, %s419
    %p421 = scmp.eq.s32.totalorder %s34, 0
    %p422 = por %p420, %p421
    %p423 = scmp.lt.s32.totalorder %s28, 1
    %s424 = scalar_select %p423, %s28, 1
    %p425 = scmp.lt.s32.totalorder %s35, 1
    %s426 = scalar_select %p425, %s35, 1
    %s427 = ssub.s32 %s424, %s426
    %p428 = scmp.eq.s32.totalorder %s427, 0
    %s430 = sadd.s32 %s429, 1
    %s431 = scalar_select %p428, %s429, %s430
    %p434 = pneg %p428
    %p435 = scmp.eq.s32.totalorder %s28, 3
    %p436 = por %p434, %p435
    %p437 = scmp.ne.s32.totalorder %s429, %s432
    %p438 = scmp.eq.s32.totalorder %s28, 0
    %p439 = por %p437, %p438
    %p440 = scmp.ne.s32.totalorder %s429, %s432
    %p441 = scmp.eq.s32.totalorder %s33, 3
    %p442 = por %p440, %p441
    %p443 = scmp.ne.s32.totalorder %s432, %s433
    %p444 = scmp.eq.s32.totalorder %s33, 0
    %p445 = por %p443, %p444
    %p446 = scmp.ne.s32.totalorder %s432, %s433
    %p447 = scmp.eq.s32.totalorder %s34, 3
    %p448 = por %p446, %p447
    %p450 = scmp.ne.s32.totalorder %s433, %s449
    %p451 = scmp.eq.s32.totalorder %s34, 0
    %p452 = por %p450, %p451
    %s454 = sadd.s32 %s453, 1
    %p457 = scmp.eq.s32.totalorder %s28, 3
    %p458 = scmp.ne.s32.totalorder %s453, %s455
    %p459 = scmp.eq.s32.totalorder %s28, 0
    %p460 = por %p458, %p459
    %p461 = scmp.ne.s32.totalorder %s453, %s455
    %p462 = scmp.eq.s32.totalorder %s33, 3
    %p463 = por %p461, %p462
    %p464 = scmp.ne.s32.totalorder %s455, %s456
    %p465 = scmp.eq.s32.totalorder %s33, 0
    %p466 = por %p464, %p465
    %p467 = scmp.ne.s32.totalorder %s455, %s456
    %p468 = scmp.eq.s32.totalorder %s34, 3
    %p469 = por %p467, %p468
    %p471 = scmp.ne.s32.totalorder %s456, %s470
    %p472 = scmp.eq.s32.totalorder %s34, 0
    %p473 = por %p471, %p472
    %s475 = sadd.s32 %s474, 1
    %p478 = scmp.eq.s32.totalorder %s28, 3
    %p479 = scmp.ne.s32.totalorder %s474, %s476
    %p480 = scmp.eq.s32.totalorder %s28, 0
    %p481 = por %p479, %p480
    %p482 = scmp.ne.s32.totalorder %s474, %s476
    %p483 = scmp.eq.s32.totalorder %s33, 3
    %p484 = por %p482, %p483
    %p485 = scmp.ne.s32.totalorder %s476, %s477
    %p486 = scmp.eq.s32.totalorder %s33, 0
    %p487 = por %p485, %p486
    %p488 = scmp.ne.s32.totalorder %s476, %s477
    %p489 = scmp.eq.s32.totalorder %s34, 3
    %p490 = por %p488, %p489
    %p492 = scmp.ne.s32.totalorder %s477, %s491
    %p493 = scmp.eq.s32.totalorder %s34, 0
    %p494 = por %p492, %p493
    %p495 = scmp.le.s32.totalorder 1, %s28
    %p496 = scmp.lt.s32.totalorder %s28, 5
    %p497 = pnand %p495, %p496
    %p498 = pneg %p497
    // Predicated region
    $region9: #{autoencoder_forward.1} parent=5 // pred_check
      _
    $region10: #{autoencoder_forward.1} parent=5 // pred_check_branch
      %500 = sbr.rel (%p497) target = $region12
    $region11: #{autoencoder_forward.1} parent=5 // pred_region
      %s501 = ssub.s32 %s28, 1
      // Predicated region
      $region13: #{autoencoder_forward.1} parent=11 // pred_check
        %p502 = pneg %p49
      $region14: #{autoencoder_forward.1} parent=11 // pred_check_branch
        %504 = sbr.rel (%p502) target = $region16
      $region15: #{autoencoder_forward.1} parent=11 // pred_region
        _
      $region16: #{autoencoder_forward.1} parent=11 // pred_fallthru
        _
      // Predicated region
      $region17: #{autoencoder_forward.1} parent=11 // pred_check
        %p505 = pneg %p70
      $region18: #{autoencoder_forward.1} parent=11 // pred_check_branch
        %507 = sbr.rel (%p505) target = $region20
      $region19: #{autoencoder_forward.1} parent=11 // pred_region
        _
      $region20: #{autoencoder_forward.1} parent=11 // pred_fallthru
        _
      // Predicated region
      $region21: #{autoencoder_forward.1} parent=11 // pred_check
        %p508 = pneg %p91
      $region22: #{autoencoder_forward.1} parent=11 // pred_check_branch
        %510 = sbr.rel (%p508) target = $region24
      $region23: #{autoencoder_forward.1} parent=11 // pred_region
        _
      $region24: #{autoencoder_forward.1} parent=11 // pred_fallthru
        _
      // Predicated region
      $region25: #{autoencoder_forward.1} parent=11 // pred_check
        %p511 = pneg %p268
      $region26: #{autoencoder_forward.1} parent=11 // pred_check_branch
        %513 = sbr.rel (%p511) target = $region28
      $region27: #{autoencoder_forward.1} parent=11 // pred_region
        _
      $region28: #{autoencoder_forward.1} parent=11 // pred_fallthru
        _
      // Predicated region
      $region29: #{autoencoder_forward.1} parent=11 // pred_check
        %p514 = pneg %p289
      $region30: #{autoencoder_forward.1} parent=11 // pred_check_branch
        %516 = sbr.rel (%p514) target = $region32
      $region31: #{autoencoder_forward.1} parent=11 // pred_region
        _
      $region32: #{autoencoder_forward.1} parent=11 // pred_fallthru
        _
      // Predicated region
      $region33: #{autoencoder_forward.1} parent=11 // pred_check
        %p517 = pneg %p310
      $region34: #{autoencoder_forward.1} parent=11 // pred_check_branch
        %519 = sbr.rel (%p517) target = $region36
      $region35: #{autoencoder_forward.1} parent=11 // pred_region
        _
      $region36: #{autoencoder_forward.1} parent=11 // pred_fallthru
        _
      // Predicated region
      $region37: #{autoencoder_forward.1} parent=11 // pred_check
        %p520 = pneg %p331
      $region38: #{autoencoder_forward.1} parent=11 // pred_check_branch
        %522 = sbr.rel (%p520) target = $region40
      $region39: #{autoencoder_forward.1} parent=11 // pred_region
        _
      $region40: #{autoencoder_forward.1} parent=11 // pred_fallthru
        _
      // Predicated region
      $region41: #{autoencoder_forward.1} parent=11 // pred_check
        %p523 = pneg %p352
      $region42: #{autoencoder_forward.1} parent=11 // pred_check_branch
        %525 = sbr.rel (%p523) target = $region44
      $region43: #{autoencoder_forward.1} parent=11 // pred_region
        _
      $region44: #{autoencoder_forward.1} parent=11 // pred_fallthru
        _
      // Predicated region
      $region45: #{autoencoder_forward.1} parent=11 // pred_check
        %p526 = pneg %p373
      $region46: #{autoencoder_forward.1} parent=11 // pred_check_branch
        %528 = sbr.rel (%p526) target = $region48
      $region47: #{autoencoder_forward.1} parent=11 // pred_region
        _
      $region48: #{autoencoder_forward.1} parent=11 // pred_fallthru
        _
      // Predicated region
      $region49: #{autoencoder_forward.1} parent=11 // pred_check
        %p529 = pneg %p394
      $region50: #{autoencoder_forward.1} parent=11 // pred_check_branch
        %531 = sbr.rel (%p529) target = $region52
      $region51: #{autoencoder_forward.1} parent=11 // pred_region
        _
      $region52: #{autoencoder_forward.1} parent=11 // pred_fallthru
        _
      // Predicated region
      $region53: #{autoencoder_forward.1} parent=11 // pred_check
        %p532 = pneg %p415
      $region54: #{autoencoder_forward.1} parent=11 // pred_check_branch
        %534 = sbr.rel (%p532) target = $region56
      $region55: #{autoencoder_forward.1} parent=11 // pred_region
        _
      $region56: #{autoencoder_forward.1} parent=11 // pred_fallthru
        _
    $region12: #{autoencoder_forward.1} parent=5 // pred_fallthru
      _
    %p535 = scmp.lt.s32.totalorder %s28, 4
    // Predicated region
    $region57: #{autoencoder_forward.1} parent=5 // pred_check
      %p536 = pneg %p535
    $region58: #{autoencoder_forward.1} parent=5 // pred_check_branch
      %538 = sbr.rel (%p536) target = $region60
    $region59: #{autoencoder_forward.1} parent=5 // pred_region
      // Predicated region
      $region61: #{autoencoder_forward.1} parent=59 // pred_check
        %p539 = pneg %p111
      $region62: #{autoencoder_forward.1} parent=59 // pred_check_branch
        %541 = sbr.rel (%p539) target = $region64
      $region63: #{autoencoder_forward.1} parent=59 // pred_region
        %p542 = scmp.lt.s32.totalorder %s28, 3
        %s543 = scalar_select %p542, %s28, 3
        %s544 = smul.addr %s543, 24
        %s545 = smul.addr %s544, 4
        %s546 = scalar_lea.vmem %s3, %s545
      $region64: #{autoencoder_forward.1} parent=59 // pred_fallthru
        _
      // Predicated region
      $region65: #{autoencoder_forward.1} parent=59 // pred_check
        %p547 = pneg %p137
      $region66: #{autoencoder_forward.1} parent=59 // pred_check_branch
        %549 = sbr.rel (%p547) target = $region68
      $region67: #{autoencoder_forward.1} parent=59 // pred_region
        %p550 = scmp.lt.s32.totalorder %s28, 3
        %s551 = scalar_select %p550, %s28, 3
        %s552 = smul.addr %s551, 8
        %s553 = smul.addr %s552, 8
        %s554 = scalar_lea.vmem %s4, %s553
      $region68: #{autoencoder_forward.1} parent=59 // pred_fallthru
        _
      // Predicated region
      $region69: #{autoencoder_forward.1} parent=59 // pred_check
        %p555 = pneg %p163
      $region70: #{autoencoder_forward.1} parent=59 // pred_check_branch
        %557 = sbr.rel (%p555) target = $region72
      $region71: #{autoencoder_forward.1} parent=59 // pred_region
        %p558 = scmp.lt.s32.totalorder %s28, 3
        %s559 = scalar_select %p558, %s28, 3
        %s560 = smul.addr %s559, 4
        %s561 = smul.addr %s560, 4
        %s562 = scalar_lea.vmem %s5, %s561
      $region72: #{autoencoder_forward.1} parent=59 // pred_fallthru
        _
      // Predicated region
      $region73: #{autoencoder_forward.1} parent=59 // pred_check
        %p563 = pneg %p189
      $region74: #{autoencoder_forward.1} parent=59 // pred_check_branch
        %565 = sbr.rel (%p563) target = $region76
      $region75: #{autoencoder_forward.1} parent=59 // pred_region
        %p566 = scmp.lt.s32.totalorder %s28, 3
        %s567 = scalar_select %p566, %s28, 3
        %s568 = smul.addr %s567, 4
        %s569 = smul.addr %s568, 8
        %s570 = scalar_lea.vmem %s6, %s569
      $region76: #{autoencoder_forward.1} parent=59 // pred_fallthru
        _
      // Predicated region
      $region77: #{autoencoder_forward.1} parent=59 // pred_check
        %p571 = pneg %p215
      $region78: #{autoencoder_forward.1} parent=59 // pred_check_branch
        %573 = sbr.rel (%p571) target = $region80
      $region79: #{autoencoder_forward.1} parent=59 // pred_region
        %p574 = scmp.lt.s32.totalorder %s28, 3
        %s575 = scalar_select %p574, %s28, 3
        %s576 = smul.addr %s575, 4
        %s577 = smul.addr %s576, 8
        %s578 = scalar_lea.vmem %s7, %s577
      $region80: #{autoencoder_forward.1} parent=59 // pred_fallthru
        _
      // Predicated region
      $region81: #{autoencoder_forward.1} parent=59 // pred_check
        %p579 = pneg %p241
      $region82: #{autoencoder_forward.1} parent=59 // pred_check_branch
        %581 = sbr.rel (%p579) target = $region84
      $region83: #{autoencoder_forward.1} parent=59 // pred_region
        %p582 = scmp.lt.s32.totalorder %s28, 3
        %s583 = scalar_select %p582, %s28, 3
        %s584 = smul.addr %s583, 4
        %s585 = smul.addr %s584, 8
        %s586 = scalar_lea.vmem %s8, %s585
      $region84: #{autoencoder_forward.1} parent=59 // pred_fallthru
        _
    $region60: #{autoencoder_forward.1} parent=5 // pred_fallthru
      _
    %p587 = scmp.le.s32.totalorder 1, %s28
    %p588 = scmp.lt.s32.totalorder %s28, 5
    %p589 = pnand %p587, %p588
    %p590 = pneg %p589
    // Predicated region
    $region85: #{autoencoder_forward.1} parent=5 // pred_check
      _
    $region86: #{autoencoder_forward.1} parent=5 // pred_check_branch
      %592 = sbr.rel (%p589) target = $region88
    $region87: #{autoencoder_forward.1} parent=5 // pred_region
      %s593 = ssub.s32 %s28, 1
      %p594 = pneg %p49
      %p595 = pneg %p46
      %p596 = pneg %p70
      %p597 = pneg %p67
      %p598 = pneg %p91
      %p599 = pneg %p88
      %p600 = scmp.lt.s32.totalorder %s33, 3
      %s601 = scalar_select %p600, %s33, 3
      %s602 = smul.addr %s601, 24
      %s603 = smul.addr %s602, 4
      %s604 = scalar_lea.vmem %s3, %s603
      %p605 = pneg %p117
      %p606 = pneg %p114
      %p607 = scmp.lt.s32.totalorder %s33, 3
      %s608 = scalar_select %p607, %s33, 3
      %s609 = smul.addr %s608, 8
      %s610 = smul.addr %s609, 8
      %s611 = scalar_lea.vmem %s4, %s610
      %p612 = pneg %p143
      %p613 = pneg %p140
      %p614 = scmp.lt.s32.totalorder %s33, 3
      %s615 = scalar_select %p614, %s33, 3
      %s616 = smul.addr %s615, 4
      %s617 = smul.addr %s616, 4
      %s618 = scalar_lea.vmem %s5, %s617
      %p619 = pneg %p169
      %p620 = pneg %p166
      %p621 = scmp.lt.s32.totalorder %s33, 3
      %s622 = scalar_select %p621, %s33, 3
      %s623 = smul.addr %s622, 4
      %s624 = smul.addr %s623, 8
      %s625 = scalar_lea.vmem %s6, %s624
      %p626 = pneg %p195
      %p627 = pneg %p192
      %p628 = scmp.lt.s32.totalorder %s33, 3
      %s629 = scalar_select %p628, %s33, 3
      %s630 = smul.addr %s629, 4
      %s631 = smul.addr %s630, 8
      %s632 = scalar_lea.vmem %s7, %s631
      %p633 = pneg %p221
      %p634 = pneg %p218
      %p635 = scmp.lt.s32.totalorder %s33, 3
      %s636 = scalar_select %p635, %s33, 3
      %s637 = smul.addr %s636, 4
      %s638 = smul.addr %s637, 8
      %s639 = scalar_lea.vmem %s8, %s638
      %p640 = pneg %p247
      %p641 = pneg %p244
      %p642 = pneg %p268
      %p643 = pneg %p265
      %p644 = pneg %p289
      %p645 = pneg %p286
      %p646 = pneg %p310
      %p647 = pneg %p307
      %p648 = pneg %p331
      %p649 = pneg %p328
      %p650 = pneg %p352
      %p651 = pneg %p349
      %p652 = pneg %p373
      %p653 = pneg %p370
      %p654 = pneg %p394
      %p655 = pneg %p391
      %p656 = pneg %p415
      %p657 = pneg %p412
      %p658 = pneg %p445
      %p659 = pneg %p442
      %p660 = scmp.lt.s32.totalorder %s33, 1
      %s661 = scalar_select %p660, %s33, 1
      %p662 = scmp.lt.s32.totalorder %s661, 1
      %s663 = scalar_select %p662, %s661, 1
      %s664 = smul.addr %s663, 8
      %s665 = smul.addr %s664, 8
      %s666 = scalar_lea.vmem %s17, %s665
      %p667 = pneg %p466
      %p668 = pneg %p463
      %p669 = pneg %p487
      %p670 = pneg %p484
      %p671 = scmp.lt.s32.totalorder %s33, 3
      %s672 = scalar_select %p671, %s33, 3
      %s673 = smul.addr %s672, 24
      %s674 = smul.addr %s673, 4
      %s675 = scalar_lea.vmem %s3, %s674
      %p676 = scmp.lt.s32.totalorder %s33, 3
      %s677 = scalar_select %p676, %s33, 3
      %s678 = smul.addr %s677, 8
      %s679 = smul.addr %s678, 8
      %s680 = scalar_lea.vmem %s4, %s679
      %p681 = scmp.lt.s32.totalorder %s33, 3
      %s682 = scalar_select %p681, %s33, 3
      %s683 = smul.addr %s682, 4
      %s684 = smul.addr %s683, 4
      %s685 = scalar_lea.vmem %s5, %s684
      %p686 = scmp.lt.s32.totalorder %s33, 3
      %s687 = scalar_select %p686, %s33, 3
      %s688 = smul.addr %s687, 4
      %s689 = smul.addr %s688, 8
      %s690 = scalar_lea.vmem %s6, %s689
      %p691 = scmp.lt.s32.totalorder %s33, 3
      %s692 = scalar_select %p691, %s33, 3
      %s693 = smul.addr %s692, 4
      %s694 = smul.addr %s693, 8
      %s695 = scalar_lea.vmem %s7, %s694
      %p696 = scmp.lt.s32.totalorder %s33, 3
      %s697 = scalar_select %p696, %s33, 3
      %s698 = smul.addr %s697, 4
      %s699 = smul.addr %s698, 8
      %s700 = scalar_lea.vmem %s8, %s699
      %p701 = scmp.lt.s32.totalorder %s33, 1
      %s702 = scalar_select %p701, %s33, 1
      %p703 = scmp.lt.s32.totalorder %s702, 1
      %s704 = scalar_select %p703, %s702, 1
      %s705 = smul.addr %s704, 8
      %s706 = smul.addr %s705, 8
      %s707 = scalar_lea.vmem %s17, %s706
      %p708 = scmp.lt.s32.totalorder %s33, 1
      %s709 = scalar_select %p708, %s33, 1
      %p711 = scmp.eq.s32.totalorder %s33, 0
      // Predicated region
      $region89: #{autoencoder_forward.1} parent=87 // pred_check
        %p712 = pneg %p711
      $region90: #{autoencoder_forward.1} parent=87 // pred_check_branch
        %714 = sbr.rel (%p712) target = $region92
      $region91: #{autoencoder_forward.1} parent=87 // pred_region
        %v715 = vld [vmem:[%s9] sm:$0xff]
        %v716 = vld [vmem:[%s9 + $0x8] sm:$0xff]
        %v717 = vld [vmem:[%s9 + $0x10] sm:$0xff]
        %v718 = vld [vmem:[%s9 + $0x18] sm:$0xff]
        %v719 = vld [vmem:[%s0] sm:$0x3]
        %721 = vset.pattern.permute.xlu0 0
        %722 = vperm.xlu0 %721, %v715
        %v723 = vpop.permute.xlu0 %722
        %726 = vset.pattern.permute.xlu0 0
        %727 = vperm.xlu0 %726, %v716
        %v728 = vpop.permute.xlu0 %727
        %731 = vset.pattern.permute.xlu0 0
        %732 = vperm.xlu0 %731, %v717
        %v733 = vpop.permute.xlu0 %732
        %736 = vset.pattern.permute.xlu0 0
        %737 = vperm.xlu0 %736, %v718
        %v738 = vpop.permute.xlu0 %737
        %v741 = vperm.slane %v719, 0
        %v742 = vperm.slane %v719, 1
        %v745 = vmul.f32 %v723, %v741
        %v746 = vmul.f32 %v723, %v742
        %v747 = vmul.f32 %v728, %v741
        %v748 = vmul.f32 %v728, %v742
        %v749 = vmul.f32 %v733, %v741
        %v750 = vmul.f32 %v733, %v742
        %v751 = vmul.f32 %v738, %v741
        %v752 = vmul.f32 %v738, %v742
        %v753 = vld [vmem:[%s10] sm:$0xff]
        %v754 = vld [vmem:[%s10 + $0x8] sm:$0xff]
        %v755 = vld [vmem:[%s10 + $0x10] sm:$0xff]
        %v756 = vld [vmem:[%s10 + $0x18] sm:$0xff]
        %758 = vset.pattern.permute.xlu0 0
        %759 = vperm.xlu0 %758, %v753
        %v760 = vpop.permute.xlu0 %759
        %763 = vset.pattern.permute.xlu0 0
        %764 = vperm.xlu0 %763, %v754
        %v765 = vpop.permute.xlu0 %764
        %768 = vset.pattern.permute.xlu0 0
        %769 = vperm.xlu0 %768, %v755
        %v770 = vpop.permute.xlu0 %769
        %773 = vset.pattern.permute.xlu0 0
        %774 = vperm.xlu0 %773, %v756
        %v775 = vpop.permute.xlu0 %774
        %v777 = vadd.f32 %v745, %v760
        %v778 = vadd.f32 %v746, %v760
        %v779 = vadd.f32 %v747, %v765
        %v780 = vadd.f32 %v748, %v765
        %v781 = vadd.f32 %v749, %v770
        %v782 = vadd.f32 %v750, %v770
        %v783 = vadd.f32 %v751, %v775
        %v784 = vadd.f32 %v752, %v775
        %785 = vst [vmem:[#allocation2] sm:$0xff] %v777
        %786 = vst [vmem:[#allocation2 + $0x8] sm:$0xff] %v778
        %787 = vst [vmem:[#allocation2 + $0x10] sm:$0xff] %v779
        %788 = vst [vmem:[#allocation2 + $0x18] sm:$0xff] %v780
        %789 = vst [vmem:[#allocation2 + $0x20] sm:$0xff] %v781
        %790 = vst [vmem:[#allocation2 + $0x28] sm:$0xff] %v782
        %791 = vst [vmem:[#allocation2 + $0x30] sm:$0xff] %v783
        %792 = vst [vmem:[#allocation2 + $0x38] sm:$0xff] %v784
      $region92: #{autoencoder_forward.1} parent=87 // pred_fallthru
        _
      %v793 = vld [vmem:[#allocation2] sm:$0xff]
      %v794 = vld [vmem:[#allocation2 + $0x8] sm:$0xff]
      %v795 = vld [vmem:[#allocation2 + $0x10] sm:$0xff]
      %v796 = vld [vmem:[#allocation2 + $0x18] sm:$0xff]
      %v797 = vld [vmem:[#allocation2 + $0x20] sm:$0xff]
      %v798 = vld [vmem:[#allocation2 + $0x28] sm:$0xff]
      %v799 = vld [vmem:[#allocation2 + $0x30] sm:$0xff]
      %v800 = vld [vmem:[#allocation2 + $0x38] sm:$0xff]
      %801 = vrot.lane.b32.xlu0 %v793, 4
      %v802 = vpop.permute.xlu0 %801
      %803 = vrot.lane.b32.xlu0 %v795, 4
      %v804 = vpop.permute.xlu0 %803
      %805 = vrot.lane.b32.xlu0 %v797, 4
      %v806 = vpop.permute.xlu0 %805
      %807 = vrot.lane.b32.xlu0 %v799, 4
      %v808 = vpop.permute.xlu0 %807
      %809 = vrot.lane.b32.xlu0 %v794, 4
      %v810 = vpop.permute.xlu0 %809
      %811 = vrot.lane.b32.xlu0 %v796, 4
      %v812 = vpop.permute.xlu0 %811
      %813 = vrot.lane.b32.xlu0 %v798, 4
      %v814 = vpop.permute.xlu0 %813
      %815 = vrot.lane.b32.xlu0 %v800, 4
      %v816 = vpop.permute.xlu0 %815
      %v817 = vlaneseq
      %v818 = vand.u32 %v817, 127
      %vm819 = vcmp.lt.s32.totalorder %v818, 4
      %v820 = vsel %vm819, %v802, %v810
      %v821 = vsel %vm819, %v804, %v812
      %v822 = vsel %vm819, %v806, %v814
      %v823 = vsel %vm819, %v808, %v816
      %v824 = vsel %vm819, %v810, %v802
      %v825 = vsel %vm819, %v812, %v804
      %v826 = vsel %vm819, %v814, %v806
      %v827 = vsel %vm819, %v816, %v808
      %v828 = vld [vmem:[%s1] sm:$0x3]
      %v830 = vperm.slane %v828, 0
      %v831 = vperm.slane %v828, 1
      %v834 = vmul.f32 %v824, %v830
      %v835 = vmul.f32 %v820, %v831
      %v836 = vmul.f32 %v825, %v830
      %v837 = vmul.f32 %v821, %v831
      %v838 = vmul.f32 %v826, %v830
      %v839 = vmul.f32 %v822, %v831
      %v840 = vmul.f32 %v827, %v830
      %v841 = vmul.f32 %v823, %v831
      %v842 = vpack.c.bf16 %v835, %v834
      %v843 = vpack.c.bf16 %v837, %v836
      %v844 = vpack.c.bf16 %v839, %v838
      %v845 = vpack.c.bf16 %v841, %v840
      %846 = vst [vmem:[#allocation3] sm:$0xff] %v842
      %847 = vst [vmem:[#allocation3 + $0x8] sm:$0xff] %v843
      %848 = vst [vmem:[#allocation3 + $0x10] sm:$0xff] %v844
      %849 = vst [vmem:[#allocation3 + $0x18] sm:$0xff] %v845
      %850 = vrot.lane.b32.xlu0 %v793, 3
      %v851 = vpop.permute.xlu0 %850
      %852 = vrot.lane.b32.xlu0 %v795, 3
      %v853 = vpop.permute.xlu0 %852
      %854 = vrot.lane.b32.xlu0 %v797, 3
      %v855 = vpop.permute.xlu0 %854
      %856 = vrot.lane.b32.xlu0 %v799, 3
      %v857 = vpop.permute.xlu0 %856
      %858 = vrot.lane.b32.xlu0 %v794, 3
      %v859 = vpop.permute.xlu0 %858
      %860 = vrot.lane.b32.xlu0 %v796, 3
      %v861 = vpop.permute.xlu0 %860
      %862 = vrot.lane.b32.xlu0 %v798, 3
      %v863 = vpop.permute.xlu0 %862
      %864 = vrot.lane.b32.xlu0 %v800, 3
      %v865 = vpop.permute.xlu0 %864
      %vm866 = vcmp.lt.s32.totalorder %v818, 3
      %v867 = vsel %vm866, %v851, %v859
      %v868 = vsel %vm866, %v853, %v861
      %v869 = vsel %vm866, %v855, %v863
      %v870 = vsel %vm866, %v857, %v865
      %v871 = vsel %vm866, %v859, %v851
      %v872 = vsel %vm866, %v861, %v853
      %v873 = vsel %vm866, %v863, %v855
      %v874 = vsel %vm866, %v865, %v857
      %s875 = scalar_lea.vmem %s1, 2
      %v876 = vld [vmem:[%s875] sm:$0x3]
      %v878 = vperm.slane %v876, 0
      %v879 = vperm.slane %v876, 1
      %v882 = vmul.f32 %v871, %v878
      %v883 = vmul.f32 %v867, %v879
      %v884 = vmul.f32 %v872, %v878
      %v885 = vmul.f32 %v868, %v879
      %v886 = vmul.f32 %v873, %v878
      %v887 = vmul.f32 %v869, %v879
      %v888 = vmul.f32 %v874, %v878
      %v889 = vmul.f32 %v870, %v879
      %v890 = vpack.c.bf16 %v883, %v882
      %v891 = vpack.c.bf16 %v885, %v884
      %v892 = vpack.c.bf16 %v887, %v886
      %v893 = vpack.c.bf16 %v889, %v888
      %894 = vst [vmem:[#allocation3 + $0x20] sm:$0xff] %v890
      %895 = vst [vmem:[#allocation3 + $0x28] sm:$0xff] %v891
      %896 = vst [vmem:[#allocation3 + $0x30] sm:$0xff] %v892
      %897 = vst [vmem:[#allocation3 + $0x38] sm:$0xff] %v893
      %898 = vrot.lane.b32.xlu0 %v793, 2
      %v899 = vpop.permute.xlu0 %898
      %900 = vrot.lane.b32.xlu0 %v795, 2
      %v901 = vpop.permute.xlu0 %900
      %902 = vrot.lane.b32.xlu0 %v797, 2
      %v903 = vpop.permute.xlu0 %902
      %904 = vrot.lane.b32.xlu0 %v799, 2
      %v905 = vpop.permute.xlu0 %904
      %906 = vrot.lane.b32.xlu0 %v794, 2
      %v907 = vpop.permute.xlu0 %906
      %908 = vrot.lane.b32.xlu0 %v796, 2
      %v909 = vpop.permute.xlu0 %908
      %910 = vrot.lane.b32.xlu0 %v798, 2
      %v911 = vpop.permute.xlu0 %910
      %912 = vrot.lane.b32.xlu0 %v800, 2
      %v913 = vpop.permute.xlu0 %912
      %vm914 = vcmp.lt.s32.totalorder %v818, 2
      %v915 = vsel %vm914, %v899, %v907
      %v916 = vsel %vm914, %v901, %v909
      %v917 = vsel %vm914, %v903, %v911
      %v918 = vsel %vm914, %v905, %v913
      %v919 = vsel %vm914, %v907, %v899
      %v920 = vsel %vm914, %v909, %v901
      %v921 = vsel %vm914, %v911, %v903
      %v922 = vsel %vm914, %v913, %v905
      %s923 = scalar_lea.vmem %s1, 4
      %v924 = vld [vmem:[%s923] sm:$0x3]
      %v926 = vperm.slane %v924, 0
      %v927 = vperm.slane %v924, 1
      %v930 = vmul.f32 %v919, %v926
      %v931 = vmul.f32 %v915, %v927
      %v932 = vmul.f32 %v920, %v926
      %v933 = vmul.f32 %v916, %v927
      %v934 = vmul.f32 %v921, %v926
      %v935 = vmul.f32 %v917, %v927
      %v936 = vmul.f32 %v922, %v926
      %v937 = vmul.f32 %v918, %v927
      %v938 = vpack.c.bf16 %v931, %v930
      %v939 = vpack.c.bf16 %v933, %v932
      %v940 = vpack.c.bf16 %v935, %v934
      %v941 = vpack.c.bf16 %v937, %v936
      %942 = vst [vmem:[#allocation3 + $0x40] sm:$0xff] %v938
      %943 = vst [vmem:[#allocation3 + $0x48] sm:$0xff] %v939
      %944 = vst [vmem:[#allocation3 + $0x50] sm:$0xff] %v940
      %945 = vst [vmem:[#allocation3 + $0x58] sm:$0xff] %v941
      %946 = vrot.lane.b32.xlu0 %v793, 1
      %v947 = vpop.permute.xlu0 %946
      %948 = vrot.lane.b32.xlu0 %v795, 1
      %v949 = vpop.permute.xlu0 %948
      %950 = vrot.lane.b32.xlu0 %v797, 1
      %v951 = vpop.permute.xlu0 %950
      %952 = vrot.lane.b32.xlu0 %v799, 1
      %v953 = vpop.permute.xlu0 %952
      %954 = vrot.lane.b32.xlu0 %v794, 1
      %v955 = vpop.permute.xlu0 %954
      %956 = vrot.lane.b32.xlu0 %v796, 1
      %v957 = vpop.permute.xlu0 %956
      %958 = vrot.lane.b32.xlu0 %v798, 1
      %v959 = vpop.permute.xlu0 %958
      %960 = vrot.lane.b32.xlu0 %v800, 1
      %v961 = vpop.permute.xlu0 %960
      %vm962 = vcmp.lt.s32.totalorder %v818, 1
      %v963 = vsel %vm962, %v947, %v955
      %v964 = vsel %vm962, %v949, %v957
      %v965 = vsel %vm962, %v951, %v959
      %v966 = vsel %vm962, %v953, %v961
      %v967 = vsel %vm962, %v955, %v947
      %v968 = vsel %vm962, %v957, %v949
      %v969 = vsel %vm962, %v959, %v951
      %v970 = vsel %vm962, %v961, %v953
      %s971 = scalar_lea.vmem %s1, 6
      %v972 = vld [vmem:[%s971] sm:$0x3]
      %v974 = vperm.slane %v972, 0
      %v975 = vperm.slane %v972, 1
      %v978 = vmul.f32 %v967, %v974
      %v979 = vmul.f32 %v963, %v975
      %v980 = vmul.f32 %v968, %v974
      %v981 = vmul.f32 %v964, %v975
      %v982 = vmul.f32 %v969, %v974
      %v983 = vmul.f32 %v965, %v975
      %v984 = vmul.f32 %v970, %v974
      %v985 = vmul.f32 %v966, %v975
      %v986 = vpack.c.bf16 %v979, %v978
      %v987 = vpack.c.bf16 %v981, %v980
      %v988 = vpack.c.bf16 %v983, %v982
      %v989 = vpack.c.bf16 %v985, %v984
      %990 = vst [vmem:[#allocation3 + $0x60] sm:$0xff] %v986
      %991 = vst [vmem:[#allocation3 + $0x68] sm:$0xff] %v987
      %992 = vst [vmem:[#allocation3 + $0x70] sm:$0xff] %v988
      %993 = vst [vmem:[#allocation3 + $0x78] sm:$0xff] %v989
      %s994 = scalar_lea.vmem %s1, 8
      %v995 = vld [vmem:[%s994] sm:$0x3]
      %v997 = vperm.slane %v995, 0
      %v998 = vperm.slane %v995, 1
      %v1001 = vmul.f32 %v793, %v997
      %v1002 = vmul.f32 %v794, %v998
      %v1003 = vmul.f32 %v795, %v997
      %v1004 = vmul.f32 %v796, %v998
      %v1005 = vmul.f32 %v797, %v997
      %v1006 = vmul.f32 %v798, %v998
      %v1007 = vmul.f32 %v799, %v997
      %v1008 = vmul.f32 %v800, %v998
      %v1009 = vpack.c.bf16 %v1002, %v1001
      %v1010 = vpack.c.bf16 %v1004, %v1003
      %v1011 = vpack.c.bf16 %v1006, %v1005
      %v1012 = vpack.c.bf16 %v1008, %v1007
      %1013 = vst [vmem:[#allocation3 + $0x80] sm:$0xff] %v1009
      %1014 = vst [vmem:[#allocation3 + $0x88] sm:$0xff] %v1010
      %1015 = vst [vmem:[#allocation3 + $0x90] sm:$0xff] %v1011
      %1016 = vst [vmem:[#allocation3 + $0x98] sm:$0xff] %v1012
      %1017 = vrot.lane.b32.xlu0 %v793, 127
      %v1018 = vpop.permute.xlu0 %1017
      %1019 = vrot.lane.b32.xlu0 %v795, 127
      %v1020 = vpop.permute.xlu0 %1019
      %1021 = vrot.lane.b32.xlu0 %v797, 127
      %v1022 = vpop.permute.xlu0 %1021
      %1023 = vrot.lane.b32.xlu0 %v799, 127
      %v1024 = vpop.permute.xlu0 %1023
      %1025 = vrot.lane.b32.xlu0 %v794, 127
      %v1026 = vpop.permute.xlu0 %1025
      %1027 = vrot.lane.b32.xlu0 %v796, 127
      %v1028 = vpop.permute.xlu0 %1027
      %1029 = vrot.lane.b32.xlu0 %v798, 127
      %v1030 = vpop.permute.xlu0 %1029
      %1031 = vrot.lane.b32.xlu0 %v800, 127
      %v1032 = vpop.permute.xlu0 %1031
      %vm1033 = vcmp.lt.s32.totalorder %v818, 127
      %v1034 = vsel %vm1033, %v1018, %v1026
      %v1035 = vsel %vm1033, %v1020, %v1028
      %v1036 = vsel %vm1033, %v1022, %v1030
      %v1037 = vsel %vm1033, %v1024, %v1032
      %v1038 = vsel %vm1033, %v1026, %v1018
      %v1039 = vsel %vm1033, %v1028, %v1020
      %v1040 = vsel %vm1033, %v1030, %v1022
      %v1041 = vsel %vm1033, %v1032, %v1024
      %s1042 = scalar_lea.vmem %s1, 10
      %v1043 = vld [vmem:[%s1042] sm:$0x3]
      %v1045 = vperm.slane %v1043, 0
      %v1046 = vperm.slane %v1043, 1
      %v1049 = vmul.f32 %v1034, %v1045
      %v1050 = vmul.f32 %v1038, %v1046
      %v1051 = vmul.f32 %v1035, %v1045
      %v1052 = vmul.f32 %v1039, %v1046
      %v1053 = vmul.f32 %v1036, %v1045
      %v1054 = vmul.f32 %v1040, %v1046
      %v1055 = vmul.f32 %v1037, %v1045
      %v1056 = vmul.f32 %v1041, %v1046
      %v1057 = vpack.c.bf16 %v1050, %v1049
      %v1058 = vpack.c.bf16 %v1052, %v1051
      %v1059 = vpack.c.bf16 %v1054, %v1053
      %v1060 = vpack.c.bf16 %v1056, %v1055
      %1061 = vst [vmem:[#allocation3 + $0xa0] sm:$0xff] %v1057
      %1062 = vst [vmem:[#allocation3 + $0xa8] sm:$0xff] %v1058
      %1063 = vst [vmem:[#allocation3 + $0xb0] sm:$0xff] %v1059
      %1064 = vst [vmem:[#allocation3 + $0xb8] sm:$0xff] %v1060
      %1065 = vrot.lane.b32.xlu0 %v793, 126
      %v1066 = vpop.permute.xlu0 %1065
      %1067 = vrot.lane.b32.xlu0 %v795, 126
      %v1068 = vpop.permute.xlu0 %1067
      %1069 = vrot.lane.b32.xlu0 %v797, 126
      %v1070 = vpop.permute.xlu0 %1069
      %1071 = vrot.lane.b32.xlu0 %v799, 126
      %v1072 = vpop.permute.xlu0 %1071
      %1073 = vrot.lane.b32.xlu0 %v794, 126
      %v1074 = vpop.permute.xlu0 %1073
      %1075 = vrot.lane.b32.xlu0 %v796, 126
      %v1076 = vpop.permute.xlu0 %1075
      %1077 = vrot.lane.b32.xlu0 %v798, 126
      %v1078 = vpop.permute.xlu0 %1077
      %1079 = vrot.lane.b32.xlu0 %v800, 126
      %v1080 = vpop.permute.xlu0 %1079
      %vm1081 = vcmp.lt.s32.totalorder %v818, 126
      %v1082 = vsel %vm1081, %v1066, %v1074
      %v1083 = vsel %vm1081, %v1068, %v1076
      %v1084 = vsel %vm1081, %v1070, %v1078
      %v1085 = vsel %vm1081, %v1072, %v1080
      %v1086 = vsel %vm1081, %v1074, %v1066
      %v1087 = vsel %vm1081, %v1076, %v1068
      %v1088 = vsel %vm1081, %v1078, %v1070
      %v1089 = vsel %vm1081, %v1080, %v1072
      %s1090 = scalar_lea.vmem %s1, 12
      %v1091 = vld [vmem:[%s1090] sm:$0x3]
      %v1093 = vperm.slane %v1091, 0
      %v1094 = vperm.slane %v1091, 1
      %v1097 = vmul.f32 %v1082, %v1093
      %v1098 = vmul.f32 %v1086, %v1094
      %v1099 = vmul.f32 %v1083, %v1093
      %v1100 = vmul.f32 %v1087, %v1094
      %v1101 = vmul.f32 %v1084, %v1093
      %v1102 = vmul.f32 %v1088, %v1094
      %v1103 = vmul.f32 %v1085, %v1093
      %v1104 = vmul.f32 %v1089, %v1094
      %v1105 = vpack.c.bf16 %v1098, %v1097
      %v1106 = vpack.c.bf16 %v1100, %v1099
      %v1107 = vpack.c.bf16 %v1102, %v1101
      %v1108 = vpack.c.bf16 %v1104, %v1103
      %1109 = vst [vmem:[#allocation3 + $0xc0] sm:$0xff] %v1105
      %1110 = vst [vmem:[#allocation3 + $0xc8] sm:$0xff] %v1106
      %1111 = vst [vmem:[#allocation3 + $0xd0] sm:$0xff] %v1107
      %1112 = vst [vmem:[#allocation3 + $0xd8] sm:$0xff] %v1108
      %1113 = vrot.lane.b32.xlu0 %v793, 125
      %v1114 = vpop.permute.xlu0 %1113
      %1115 = vrot.lane.b32.xlu0 %v795, 125
      %v1116 = vpop.permute.xlu0 %1115
      %1117 = vrot.lane.b32.xlu0 %v797, 125
      %v1118 = vpop.permute.xlu0 %1117
      %1119 = vrot.lane.b32.xlu0 %v799, 125
      %v1120 = vpop.permute.xlu0 %1119
      %1121 = vrot.lane.b32.xlu0 %v794, 125
      %v1122 = vpop.permute.xlu0 %1121
      %1123 = vrot.lane.b32.xlu0 %v796, 125
      %v1124 = vpop.permute.xlu0 %1123
      %1125 = vrot.lane.b32.xlu0 %v798, 125
      %v1126 = vpop.permute.xlu0 %1125
      %1127 = vrot.lane.b32.xlu0 %v800, 125
      %v1128 = vpop.permute.xlu0 %1127
      %vm1129 = vcmp.lt.s32.totalorder %v818, 125
      %v1130 = vsel %vm1129, %v1114, %v1122
      %v1131 = vsel %vm1129, %v1116, %v1124
      %v1132 = vsel %vm1129, %v1118, %v1126
      %v1133 = vsel %vm1129, %v1120, %v1128
      %v1134 = vsel %vm1129, %v1122, %v1114
      %v1135 = vsel %vm1129, %v1124, %v1116
      %v1136 = vsel %vm1129, %v1126, %v1118
      %v1137 = vsel %vm1129, %v1128, %v1120
      %s1138 = scalar_lea.vmem %s1, 14
      %v1139 = vld [vmem:[%s1138] sm:$0x3]
      %v1141 = vperm.slane %v1139, 0
      %v1142 = vperm.slane %v1139, 1
      %v1145 = vmul.f32 %v1130, %v1141
      %v1146 = vmul.f32 %v1134, %v1142
      %v1147 = vmul.f32 %v1131, %v1141
      %v1148 = vmul.f32 %v1135, %v1142
      %v1149 = vmul.f32 %v1132, %v1141
      %v1150 = vmul.f32 %v1136, %v1142
      %v1151 = vmul.f32 %v1133, %v1141
      %v1152 = vmul.f32 %v1137, %v1142
      %v1153 = vpack.c.bf16 %v1146, %v1145
      %v1154 = vpack.c.bf16 %v1148, %v1147
      %v1155 = vpack.c.bf16 %v1150, %v1149
      %v1156 = vpack.c.bf16 %v1152, %v1151
      %1157 = vst [vmem:[#allocation3 + $0xe0] sm:$0xff] %v1153
      %1158 = vst [vmem:[#allocation3 + $0xe8] sm:$0xff] %v1154
      %1159 = vst [vmem:[#allocation3 + $0xf0] sm:$0xff] %v1155
      %1160 = vst [vmem:[#allocation3 + $0xf8] sm:$0xff] %v1156
      %1161 = vrot.lane.b32.xlu0 %v793, 124
      %v1162 = vpop.permute.xlu0 %1161
      %1163 = vrot.lane.b32.xlu0 %v795, 124
      %v1164 = vpop.permute.xlu0 %1163
      %1165 = vrot.lane.b32.xlu0 %v797, 124
      %v1166 = vpop.permute.xlu0 %1165
      %1167 = vrot.lane.b32.xlu0 %v799, 124
      %v1168 = vpop.permute.xlu0 %1167
      %1169 = vrot.lane.b32.xlu0 %v794, 124
      %v1170 = vpop.permute.xlu0 %1169
      %1171 = vrot.lane.b32.xlu0 %v796, 124
      %v1172 = vpop.permute.xlu0 %1171
      %1173 = vrot.lane.b32.xlu0 %v798, 124
      %v1174 = vpop.permute.xlu0 %1173
      %1175 = vrot.lane.b32.xlu0 %v800, 124
      %v1176 = vpop.permute.xlu0 %1175
      %vm1177 = vcmp.lt.s32.totalorder %v818, 124
      %v1178 = vsel %vm1177, %v1162, %v1170
      %v1179 = vsel %vm1177, %v1164, %v1172
      %v1180 = vsel %vm1177, %v1166, %v1174
      %v1181 = vsel %vm1177, %v1168, %v1176
      %v1182 = vsel %vm1177, %v1170, %v1162
      %v1183 = vsel %vm1177, %v1172, %v1164
      %v1184 = vsel %vm1177, %v1174, %v1166
      %v1185 = vsel %vm1177, %v1176, %v1168
      %s1186 = scalar_lea.vmem %s1, 16
      %v1187 = vld [vmem:[%s1186] sm:$0x3]
      %v1189 = vperm.slane %v1187, 0
      %v1190 = vperm.slane %v1187, 1
      %v1193 = vmul.f32 %v1178, %v1189
      %v1194 = vmul.f32 %v1182, %v1190
      %v1195 = vmul.f32 %v1179, %v1189
      %v1196 = vmul.f32 %v1183, %v1190
      %v1197 = vmul.f32 %v1180, %v1189
      %v1198 = vmul.f32 %v1184, %v1190
      %v1199 = vmul.f32 %v1181, %v1189
      %v1200 = vmul.f32 %v1185, %v1190
      %v1201 = vpack.c.bf16 %v1194, %v1193
      %v1202 = vpack.c.bf16 %v1196, %v1195
      %v1203 = vpack.c.bf16 %v1198, %v1197
      %v1204 = vpack.c.bf16 %v1200, %v1199
      %1205 = vst [vmem:[#allocation3 + $0x100] sm:$0xff] %v1201
      %1206 = vst [vmem:[#allocation3 + $0x108] sm:$0xff] %v1202
      %1207 = vst [vmem:[#allocation3 + $0x110] sm:$0xff] %v1203
      %1208 = vst [vmem:[#allocation3 + $0x118] sm:$0xff] %v1204
      %v1209 = vld [vmem:[%s675] sm:$0xff]
      %v1210 = vld [vmem:[%s675 + $0x8] sm:$0xf]
      %v1211 = vld [vmem:[%s675 + $0xc] sm:$0xff]
      %v1212 = vld [vmem:[%s675 + $0x14] sm:$0xf]
      %v1213 = vld [vmem:[%s675 + $0x18] sm:$0xff]
      %v1214 = vld [vmem:[%s675 + $0x20] sm:$0xf]
      %v1215 = vld [vmem:[%s675 + $0x24] sm:$0xff]
      %v1216 = vld [vmem:[%s675 + $0x2c] sm:$0xf]
      %v1217 = vld [vmem:[%s675 + $0x30] sm:$0xff]
      %v1218 = vld [vmem:[%s675 + $0x38] sm:$0xf]
      %v1219 = vld [vmem:[%s675 + $0x3c] sm:$0xff]
      %v1220 = vld [vmem:[%s675 + $0x44] sm:$0xf]
      %v1221 = vld [vmem:[%s675 + $0x48] sm:$0xff]
      %v1222 = vld [vmem:[%s675 + $0x50] sm:$0xf]
      %v1223 = vld [vmem:[%s675 + $0x54] sm:$0xff]
      %v1224 = vld [vmem:[%s675 + $0x5c] sm:$0xf]
      %v1225 = vld [vmem:[#allocation3] sm:$0xff]
      %v1226 = vld [vmem:[#allocation3 + $0x8] sm:$0xff]
      %v1227 = vld [vmem:[#allocation3 + $0x10] sm:$0xff]
      %v1228 = vld [vmem:[#allocation3 + $0x18] sm:$0xff]
      %v1229 = vld [vmem:[#allocation3 + $0x20] sm:$0xff]
      %v1230 = vld [vmem:[#allocation3 + $0x28] sm:$0xff]
      %v1231 = vld [vmem:[#allocation3 + $0x30] sm:$0xff]
      %v1232 = vld [vmem:[#allocation3 + $0x38] sm:$0xff]
      %v1233 = vld [vmem:[#allocation3 + $0x40] sm:$0xff]
      %v1234 = vld [vmem:[#allocation3 + $0x48] sm:$0xff]
      %v1235 = vld [vmem:[#allocation3 + $0x50] sm:$0xff]
      %v1236 = vld [vmem:[#allocation3 + $0x58] sm:$0xff]
      %v1237 = vld [vmem:[#allocation3 + $0x60] sm:$0xff]
      %v1238 = vld [vmem:[#allocation3 + $0x68] sm:$0xff]
      %v1239 = vld [vmem:[#allocation3 + $0x70] sm:$0xff]
      %v1240 = vld [vmem:[#allocation3 + $0x78] sm:$0xff]
      %v1241 = vld [vmem:[#allocation3 + $0x80] sm:$0xff]
      %v1242 = vld [vmem:[#allocation3 + $0x88] sm:$0xff]
      %v1243 = vld [vmem:[#allocation3 + $0x90] sm:$0xff]
      %v1244 = vld [vmem:[#allocation3 + $0x98] sm:$0xff]
      %v1245 = vld [vmem:[#allocation3 + $0xa0] sm:$0xff]
      %v1246 = vld [vmem:[#allocation3 + $0xa8] sm:$0xff]
      %v1247 = vld [vmem:[#allocation3 + $0xb0] sm:$0xff]
      %v1248 = vld [vmem:[#allocation3 + $0xb8] sm:$0xff]
      %v1249 = vld [vmem:[#allocation3 + $0xc0] sm:$0xff]
      %v1250 = vld [vmem:[#allocation3 + $0xc8] sm:$0xff]
      %v1251 = vld [vmem:[#allocation3 + $0xd0] sm:$0xff]
      %v1252 = vld [vmem:[#allocation3 + $0xd8] sm:$0xff]
      %v1253 = vld [vmem:[#allocation3 + $0xe0] sm:$0xff]
      %v1254 = vld [vmem:[#allocation3 + $0xe8] sm:$0xff]
      %v1255 = vld [vmem:[#allocation3 + $0xf0] sm:$0xff]
      %v1256 = vld [vmem:[#allocation3 + $0xf8] sm:$0xff]
      %v1257 = vld [vmem:[#allocation3 + $0x100] sm:$0xff]
      %v1258 = vld [vmem:[#allocation3 + $0x108] sm:$0xff]
      %v1259 = vld [vmem:[#allocation3 + $0x110] sm:$0xff]
      %v1260 = vld [vmem:[#allocation3 + $0x118] sm:$0xff]
      %v1261 = vld [vmem:[%s680] sm:$0xff]
      %v1262 = vld [vmem:[%s680 + $0x8] sm:$0xff]
      %v1263 = vld [vmem:[%s680 + $0x10] sm:$0xff]
      %v1264 = vld [vmem:[%s680 + $0x18] sm:$0xff]
      %v1265 = vld [vmem:[%s680 + $0x20] sm:$0xff]
      %v1266 = vld [vmem:[%s680 + $0x28] sm:$0xff]
      %v1267 = vld [vmem:[%s680 + $0x30] sm:$0xff]
      %v1268 = vld [vmem:[%s680 + $0x38] sm:$0xff]
      %1270 = vset.pattern.permute.xlu0 0
      %1271 = vperm.xlu0 %1270, %v1261
      %v1272 = vpop.permute.xlu0 %1271
      %1275 = vset.pattern.permute.xlu0 0
      %1276 = vperm.xlu0 %1275, %v1262
      %v1277 = vpop.permute.xlu0 %1276
      %1280 = vset.pattern.permute.xlu0 0
      %1281 = vperm.xlu0 %1280, %v1263
      %v1282 = vpop.permute.xlu0 %1281
      %1285 = vset.pattern.permute.xlu0 0
      %1286 = vperm.xlu0 %1285, %v1264
      %v1287 = vpop.permute.xlu0 %1286
      %1290 = vset.pattern.permute.xlu0 0
      %1291 = vperm.xlu0 %1290, %v1265
      %v1292 = vpop.permute.xlu0 %1291
      %1295 = vset.pattern.permute.xlu0 0
      %1296 = vperm.xlu0 %1295, %v1266
      %v1297 = vpop.permute.xlu0 %1296
      %1300 = vset.pattern.permute.xlu0 0
      %1301 = vperm.xlu0 %1300, %v1267
      %v1302 = vpop.permute.xlu0 %1301
      %1305 = vset.pattern.permute.xlu0 0
      %1306 = vperm.xlu0 %1305, %v1268
      %v1307 = vpop.permute.xlu0 %1306
      %v1325 = vunpack.c.l.b16 %v1209
      %v1326 = vunpack.c.h.b16 %v1209
      %v1327 = vunpack.c.l.b16 %v1210
      %v1328 = vunpack.c.l.b16 %v1211
      %v1329 = vunpack.c.h.b16 %v1211
      %v1330 = vunpack.c.l.b16 %v1212
      %v1331 = vunpack.c.l.b16 %v1213
      %v1332 = vunpack.c.h.b16 %v1213
      %v1333 = vunpack.c.l.b16 %v1214
      %v1334 = vunpack.c.l.b16 %v1215
      %v1335 = vunpack.c.h.b16 %v1215
      %v1336 = vunpack.c.l.b16 %v1216
      %v1337 = vunpack.c.l.b16 %v1217
      %v1338 = vunpack.c.h.b16 %v1217
      %v1339 = vunpack.c.l.b16 %v1218
      %v1340 = vunpack.c.l.b16 %v1219
      %v1341 = vunpack.c.h.b16 %v1219
      %v1342 = vunpack.c.l.b16 %v1220
      %v1343 = vunpack.c.l.b16 %v1221
      %v1344 = vunpack.c.h.b16 %v1221
      %v1345 = vunpack.c.l.b16 %v1222
      %v1346 = vunpack.c.l.b16 %v1223
      %v1347 = vunpack.c.h.b16 %v1223
      %v1348 = vunpack.c.l.b16 %v1224
      %v1349 = vpack.c.b16 %v1328, %v1325
      %v1350 = vpack.c.b16 %v1329, %v1326
      %v1351 = vpack.c.b16 %v1330, %v1327
      %v1352 = vpack.c.b16 %v1334, %v1331
      %v1353 = vpack.c.b16 %v1335, %v1332
      %v1354 = vpack.c.b16 %v1336, %v1333
      %v1355 = vpack.c.b16 %v1340, %v1337
      %v1356 = vpack.c.b16 %v1341, %v1338
      %v1357 = vpack.c.b16 %v1342, %v1339
      %v1358 = vpack.c.b16 %v1346, %v1343
      %v1359 = vpack.c.b16 %v1347, %v1344
      %v1360 = vpack.c.b16 %v1348, %v1345
      %v1405 = vunpack.c.l.b16 %v1225
      %v1406 = vunpack.c.h.b16 %v1225
      %v1407 = vunpack.c.l.b16 %v1226
      %v1408 = vunpack.c.h.b16 %v1226
      %v1409 = vunpack.c.l.b16 %v1227
      %v1410 = vunpack.c.h.b16 %v1227
      %v1411 = vunpack.c.l.b16 %v1228
      %v1412 = vunpack.c.h.b16 %v1228
      %v1413 = vunpack.c.l.b16 %v1229
      %v1414 = vunpack.c.h.b16 %v1229
      %v1415 = vunpack.c.l.b16 %v1230
      %v1416 = vunpack.c.h.b16 %v1230
      %v1417 = vunpack.c.l.b16 %v1231
      %v1418 = vunpack.c.h.b16 %v1231
      %v1419 = vunpack.c.l.b16 %v1232
      %v1420 = vunpack.c.h.b16 %v1232
      %v1421 = vunpack.c.l.b16 %v1233
      %v1422 = vunpack.c.h.b16 %v1233
      %v1423 = vunpack.c.l.b16 %v1234
      %v1424 = vunpack.c.h.b16 %v1234
      %v1425 = vunpack.c.l.b16 %v1235
      %v1426 = vunpack.c.h.b16 %v1235
      %v1427 = vunpack.c.l.b16 %v1236
      %v1428 = vunpack.c.h.b16 %v1236
      %v1429 = vunpack.c.l.b16 %v1237
      %v1430 = vunpack.c.h.b16 %v1237
      %v1431 = vunpack.c.l.b16 %v1238
      %v1432 = vunpack.c.h.b16 %v1238
      %v1433 = vunpack.c.l.b16 %v1239
      %v1434 = vunpack.c.h.b16 %v1239
      %v1435 = vunpack.c.l.b16 %v1240
      %v1436 = vunpack.c.h.b16 %v1240
      %v1437 = vunpack.c.l.b16 %v1241
      %v1438 = vunpack.c.h.b16 %v1241
      %v1439 = vunpack.c.l.b16 %v1242
      %v1440 = vunpack.c.h.b16 %v1242
      %v1441 = vunpack.c.l.b16 %v1243
      %v1442 = vunpack.c.h.b16 %v1243
      %v1443 = vunpack.c.l.b16 %v1244
      %v1444 = vunpack.c.h.b16 %v1244
      %v1445 = vunpack.c.l.b16 %v1245
      %v1446 = vunpack.c.h.b16 %v1245
      %v1447 = vunpack.c.l.b16 %v1246
      %v1448 = vunpack.c.h.b16 %v1246
      %v1449 = vunpack.c.l.b16 %v1247
      %v1450 = vunpack.c.h.b16 %v1247
      %v1451 = vunpack.c.l.b16 %v1248
      %v1452 = vunpack.c.h.b16 %v1248
      %v1453 = vunpack.c.l.b16 %v1249
      %v1454 = vunpack.c.h.b16 %v1249
      %v1455 = vunpack.c.l.b16 %v1250
      %v1456 = vunpack.c.h.b16 %v1250
      %v1457 = vunpack.c.l.b16 %v1251
      %v1458 = vunpack.c.h.b16 %v1251
      %v1459 = vunpack.c.l.b16 %v1252
      %v1460 = vunpack.c.h.b16 %v1252
      %v1461 = vunpack.c.l.b16 %v1253
      %v1462 = vunpack.c.h.b16 %v1253
      %v1463 = vunpack.c.l.b16 %v1254
      %v1464 = vunpack.c.h.b16 %v1254
      %v1465 = vunpack.c.l.b16 %v1255
      %v1466 = vunpack.c.h.b16 %v1255
      %v1467 = vunpack.c.l.b16 %v1256
      %v1468 = vunpack.c.h.b16 %v1256
      %v1469 = vunpack.c.l.b16 %v1257
      %v1470 = vunpack.c.h.b16 %v1257
      %v1471 = vunpack.c.l.b16 %v1258
      %v1472 = vunpack.c.h.b16 %v1258
      %v1473 = vunpack.c.l.b16 %v1259
      %v1474 = vunpack.c.h.b16 %v1259
      %v1475 = vunpack.c.l.b16 %v1260
      %v1476 = vunpack.c.h.b16 %v1260
      %v1477 = vpack.c.b16 %v1407, %v1405
      %v1478 = vpack.c.b16 %v1408, %v1406
      %v1479 = vpack.c.b16 %v1411, %v1409
      %v1480 = vpack.c.b16 %v1412, %v1410
      %v1481 = vpack.c.b16 %v1415, %v1413
      %v1482 = vpack.c.b16 %v1416, %v1414
      %v1483 = vpack.c.b16 %v1419, %v1417
      %v1484 = vpack.c.b16 %v1420, %v1418
      %v1485 = vpack.c.b16 %v1423, %v1421
      %v1486 = vpack.c.b16 %v1424, %v1422
      %v1487 = vpack.c.b16 %v1427, %v1425
      %v1488 = vpack.c.b16 %v1428, %v1426
      %v1489 = vpack.c.b16 %v1431, %v1429
      %v1490 = vpack.c.b16 %v1432, %v1430
      %v1491 = vpack.c.b16 %v1435, %v1433
      %v1492 = vpack.c.b16 %v1436, %v1434
      %v1493 = vpack.c.b16 %v1439, %v1437
      %v1494 = vpack.c.b16 %v1440, %v1438
      %v1495 = vpack.c.b16 %v1443, %v1441
      %v1496 = vpack.c.b16 %v1444, %v1442
      %v1497 = vpack.c.b16 %v1447, %v1445
      %v1498 = vpack.c.b16 %v1448, %v1446
      %v1499 = vpack.c.b16 %v1451, %v1449
      %v1500 = vpack.c.b16 %v1452, %v1450
      %v1501 = vpack.c.b16 %v1455, %v1453
      %v1502 = vpack.c.b16 %v1456, %v1454
      %v1503 = vpack.c.b16 %v1459, %v1457
      %v1504 = vpack.c.b16 %v1460, %v1458
      %v1505 = vpack.c.b16 %v1463, %v1461
      %v1506 = vpack.c.b16 %v1464, %v1462
      %v1507 = vpack.c.b16 %v1467, %v1465
      %v1508 = vpack.c.b16 %v1468, %v1466
      %v1509 = vpack.c.b16 %v1471, %v1469
      %v1510 = vpack.c.b16 %v1472, %v1470
      %v1511 = vpack.c.b16 %v1475, %v1473
      %v1512 = vpack.c.b16 %v1476, %v1474
      %vm1549 = vcmask 261120
      %v1551 = vsel %vm1549, %v1351, 0
      %v1554 = vsel %vm1549, %v1354, 0
      %v1557 = vsel %vm1549, %v1357, 0
      %v1560 = vsel %vm1549, %v1360, 0
      %1562 = vmatpush.bf16.msra.mxu0 %v1491
      %1563 = vmatpush.bf16.msra.mxu0 %v1489
      %1564 = vmatpush.bf16.msra.mxu0 %v1487
      %1565 = vmatpush.bf16.msra.mxu0 %v1485
      %1566 = vmatpush.bf16.msra.mxu0 %v1483
      %1567 = vmatpush.bf16.msra.mxu0 %v1481
      %1568 = vmatpush.bf16.msra.mxu0 %v1479
      %1569 = vmatpush.bf16.msra.mxu0 %v1477
      %1570 = vmatmul.bf16.gmra.mxu0 %v1349
      %v1571 = vpop.f32.mrf.mxu0
      %v1572 = vadd.f32 %v1272, %v1571
      %v1573 = vpop.f32.mrf.mxu0
      %v1574 = vadd.f32 %v1277, %v1573
      %1575 = vmatmul.bf16.gmra.mxu0 %v1352
      %v1576 = vpop.f32.mrf.mxu0
      %v1577 = vadd.f32 %v1282, %v1576
      %v1578 = vpop.f32.mrf.mxu0
      %v1579 = vadd.f32 %v1287, %v1578
      %1580 = vmatmul.bf16.gmra.mxu0 %v1355
      %v1581 = vpop.f32.mrf.mxu0
      %v1582 = vadd.f32 %v1292, %v1581
      %v1583 = vpop.f32.mrf.mxu0
      %v1584 = vadd.f32 %v1297, %v1583
      %1585 = vmatmul.bf16.gmra.mxu0 %v1358
      %v1586 = vpop.f32.mrf.mxu0
      %v1587 = vadd.f32 %v1302, %v1586
      %v1588 = vpop.f32.mrf.mxu0
      %v1589 = vadd.f32 %v1307, %v1588
      %1590 = vdwg.mxu0
      %1591 = vmatpush.bf16.msra.mxu0 %v1507
      %1592 = vmatpush.bf16.msra.mxu0 %v1505
      %1593 = vmatpush.bf16.msra.mxu0 %v1503
      %1594 = vmatpush.bf16.msra.mxu0 %v1501
      %1595 = vmatpush.bf16.msra.mxu0 %v1499
      %1596 = vmatpush.bf16.msra.mxu0 %v1497
      %1597 = vmatpush.bf16.msra.mxu0 %v1495
      %1598 = vmatpush.bf16.msra.mxu0 %v1493
      %1599 = vmatmul.bf16.gmra.mxu0 %v1350
      %v1600 = vpop.f32.mrf.mxu0
      %v1601 = vadd.f32 %v1572, %v1600
      %v1602 = vpop.f32.mrf.mxu0
      %v1603 = vadd.f32 %v1574, %v1602
      %1604 = vmatmul.bf16.gmra.mxu0 %v1353
      %v1605 = vpop.f32.mrf.mxu0
      %v1606 = vadd.f32 %v1577, %v1605
      %v1607 = vpop.f32.mrf.mxu0
      %v1608 = vadd.f32 %v1579, %v1607
      %1609 = vmatmul.bf16.gmra.mxu0 %v1356
      %v1610 = vpop.f32.mrf.mxu0
      %v1611 = vadd.f32 %v1582, %v1610
      %v1612 = vpop.f32.mrf.mxu0
      %v1613 = vadd.f32 %v1584, %v1612
      %1614 = vmatmul.bf16.gmra.mxu0 %v1359
      %v1615 = vpop.f32.mrf.mxu0
      %v1616 = vadd.f32 %v1587, %v1615
      %v1617 = vpop.f32.mrf.mxu0
      %v1618 = vadd.f32 %v1589, %v1617
      %1619 = vdwg.mxu0
      %1620 = vmatpush.bf16.msra.mxu0 0
      %1621 = vmatpush.bf16.msra.mxu0 0
      %1622 = vmatpush.bf16.msra.mxu0 0
      %1623 = vmatpush.bf16.msra.mxu0 0
      %1624 = vmatpush.bf16.msra.mxu0 0
      %1625 = vmatpush.bf16.msra.mxu0 0
      %1626 = vmatpush.bf16.msra.mxu0 %v1511
      %1627 = vmatpush.bf16.msra.mxu0 %v1509
      %1628 = vmatmul.bf16.gmra.mxu0 %v1551
      %v1629 = vpop.f32.mrf.mxu0
      %v1630 = vadd.f32 %v1601, %v1629
      %v1631 = vpop.f32.mrf.mxu0
      %v1632 = vadd.f32 %v1603, %v1631
      %1633 = vmatmul.bf16.gmra.mxu0 %v1554
      %v1634 = vpop.f32.mrf.mxu0
      %v1635 = vadd.f32 %v1606, %v1634
      %v1636 = vpop.f32.mrf.mxu0
      %v1637 = vadd.f32 %v1608, %v1636
      %1638 = vmatmul.bf16.gmra.mxu0 %v1557
      %v1639 = vpop.f32.mrf.mxu0
      %v1640 = vadd.f32 %v1611, %v1639
      %v1641 = vpop.f32.mrf.mxu0
      %v1642 = vadd.f32 %v1613, %v1641
      %1643 = vmatmul.bf16.gmra.mxu0 %v1560
      %v1644 = vpop.f32.mrf.mxu0
      %v1645 = vadd.f32 %v1616, %v1644
      %v1646 = vpop.f32.mrf.mxu0
      %v1647 = vadd.f32 %v1618, %v1646
      %1648 = vdwg.mxu0
      %1649 = vmatpush.bf16.msra.mxu0 %v1492
      %1650 = vmatpush.bf16.msra.mxu0 %v1490
      %1651 = vmatpush.bf16.msra.mxu0 %v1488
      %1652 = vmatpush.bf16.msra.mxu0 %v1486
      %1653 = vmatpush.bf16.msra.mxu0 %v1484
      %1654 = vmatpush.bf16.msra.mxu0 %v1482
      %1655 = vmatpush.bf16.msra.mxu0 %v1480
      %1656 = vmatpush.bf16.msra.mxu0 %v1478
      %1657 = vmatmul.bf16.gmra.mxu0 %v1349
      %v1658 = vpop.f32.mrf.mxu0
      %v1659 = vadd.f32 %v1272, %v1658
      %v1660 = vpop.f32.mrf.mxu0
      %v1661 = vadd.f32 %v1277, %v1660
      %1662 = vmatmul.bf16.gmra.mxu0 %v1352
      %v1663 = vpop.f32.mrf.mxu0
      %v1664 = vadd.f32 %v1282, %v1663
      %v1665 = vpop.f32.mrf.mxu0
      %v1666 = vadd.f32 %v1287, %v1665
      %1667 = vmatmul.bf16.gmra.mxu0 %v1355
      %v1668 = vpop.f32.mrf.mxu0
      %v1669 = vadd.f32 %v1292, %v1668
      %v1670 = vpop.f32.mrf.mxu0
      %v1671 = vadd.f32 %v1297, %v1670
      %1672 = vmatmul.bf16.gmra.mxu0 %v1358
      %v1673 = vpop.f32.mrf.mxu0
      %v1674 = vadd.f32 %v1302, %v1673
      %v1675 = vpop.f32.mrf.mxu0
      %v1676 = vadd.f32 %v1307, %v1675
      %1677 = vdwg.mxu0
      %1678 = vmatpush.bf16.msra.mxu0 %v1508
      %1679 = vmatpush.bf16.msra.mxu0 %v1506
      %1680 = vmatpush.bf16.msra.mxu0 %v1504
      %1681 = vmatpush.bf16.msra.mxu0 %v1502
      %1682 = vmatpush.bf16.msra.mxu0 %v1500
      %1683 = vmatpush.bf16.msra.mxu0 %v1498
      %1684 = vmatpush.bf16.msra.mxu0 %v1496
      %1685 = vmatpush.bf16.msra.mxu0 %v1494
      %1686 = vmatmul.bf16.gmra.mxu0 %v1350
      %v1687 = vpop.f32.mrf.mxu0
      %v1688 = vadd.f32 %v1659, %v1687
      %v1689 = vpop.f32.mrf.mxu0
      %v1690 = vadd.f32 %v1661, %v1689
      %1691 = vmatmul.bf16.gmra.mxu0 %v1353
      %v1692 = vpop.f32.mrf.mxu0
      %v1693 = vadd.f32 %v1664, %v1692
      %v1694 = vpop.f32.mrf.mxu0
      %v1695 = vadd.f32 %v1666, %v1694
      %1696 = vmatmul.bf16.gmra.mxu0 %v1356
      %v1697 = vpop.f32.mrf.mxu0
      %v1698 = vadd.f32 %v1669, %v1697
      %v1699 = vpop.f32.mrf.mxu0
      %v1700 = vadd.f32 %v1671, %v1699
      %1701 = vmatmul.bf16.gmra.mxu0 %v1359
      %v1702 = vpop.f32.mrf.mxu0
      %v1703 = vadd.f32 %v1674, %v1702
      %v1704 = vpop.f32.mrf.mxu0
      %v1705 = vadd.f32 %v1676, %v1704
      %1706 = vdwg.mxu0
      %1707 = vmatpush.bf16.msra.mxu0 0
      %1708 = vmatpush.bf16.msra.mxu0 0
      %1709 = vmatpush.bf16.msra.mxu0 0
      %1710 = vmatpush.bf16.msra.mxu0 0
      %1711 = vmatpush.bf16.msra.mxu0 0
      %1712 = vmatpush.bf16.msra.mxu0 0
      %1713 = vmatpush.bf16.msra.mxu0 %v1512
      %1714 = vmatpush.bf16.msra.mxu0 %v1510
      %1715 = vmatmul.bf16.gmra.mxu0 %v1551
      %v1716 = vpop.f32.mrf.mxu0
      %v1717 = vadd.f32 %v1688, %v1716
      %v1718 = vpop.f32.mrf.mxu0
      %v1719 = vadd.f32 %v1690, %v1718
      %1720 = vmatmul.bf16.gmra.mxu0 %v1554
      %v1721 = vpop.f32.mrf.mxu0
      %v1722 = vadd.f32 %v1693, %v1721
      %v1723 = vpop.f32.mrf.mxu0
      %v1724 = vadd.f32 %v1695, %v1723
      %1725 = vmatmul.bf16.gmra.mxu0 %v1557
      %v1726 = vpop.f32.mrf.mxu0
      %v1727 = vadd.f32 %v1698, %v1726
      %v1728 = vpop.f32.mrf.mxu0
      %v1729 = vadd.f32 %v1700, %v1728
      %1730 = vmatmul.bf16.gmra.mxu0 %v1560
      %v1731 = vpop.f32.mrf.mxu0
      %v1732 = vadd.f32 %v1703, %v1731
      %v1733 = vpop.f32.mrf.mxu0
      %v1734 = vadd.f32 %v1705, %v1733
      %1735 = vdwg.mxu0
      %v1736 = vtanh.pop %v1630
      %v1737 = vtanh.pop %v1717
      %v1738 = vtanh.pop %v1632
      %v1739 = vtanh.pop %v1719
      %v1740 = vtanh.pop %v1635
      %v1741 = vtanh.pop %v1722
      %v1742 = vtanh.pop %v1637
      %v1743 = vtanh.pop %v1724
      %v1744 = vxor.u32 %v1640, 2147483648
      %v1745 = vxor.u32 %v1727, 2147483648
      %v1746 = vxor.u32 %v1642, 2147483648
      %v1747 = vxor.u32 %v1729, 2147483648
      %v1748 = vxor.u32 %v1645, 2147483648
      %v1749 = vxor.u32 %v1732, 2147483648
      %v1750 = vxor.u32 %v1647, 2147483648
      %v1751 = vxor.u32 %v1734, 2147483648
      %v1752 = vmul.f32 %v1744, 1.442695
      %v1753 = vpow.pop %v1752
      %v1754 = vmul.f32 %v1745, 1.442695
      %v1755 = vpow.pop %v1754
      %v1756 = vmul.f32 %v1746, 1.442695
      %v1757 = vpow.pop %v1756
      %v1758 = vmul.f32 %v1747, 1.442695
      %v1759 = vpow.pop %v1758
      %v1760 = vmul.f32 %v1748, 1.442695
      %v1761 = vpow.pop %v1760
      %v1762 = vmul.f32 %v1749, 1.442695
      %v1763 = vpow.pop %v1762
      %v1764 = vmul.f32 %v1750, 1.442695
      %v1765 = vpow.pop %v1764
      %v1766 = vmul.f32 %v1751, 1.442695
      %v1767 = vpow.pop %v1766
      %v1768 = vadd.f32 %v1753, 1.0
      %v1769 = vadd.f32 %v1755, 1.0
      %v1770 = vadd.f32 %v1757, 1.0
      %v1771 = vadd.f32 %v1759, 1.0
      %v1772 = vadd.f32 %v1761, 1.0
      %v1773 = vadd.f32 %v1763, 1.0
      %v1774 = vadd.f32 %v1765, 1.0
      %v1775 = vadd.f32 %v1767, 1.0
      %v1776 = vrcp.pop %v1768
      %v1777 = vmul.f32 %v1768, %v1776
      %v1778 = vsub.f32 1.0, %v1777
      %v1779 = vmul.f32 %v1776, %v1778
      %v1780 = vadd.f32 %v1776, %v1779
      %vm1781 = vweird.f32 %v1768
      %vm1782 = vweird.f32 %v1776
      %vm1783 = vmor %vm1781, %vm1782
      %v1784 = vsel %vm1783, %v1776, %v1780
      %v1785 = vand.u32 2147483647, %v1768
      %vm1786 = vcmp.eq.f32.partialorder %v1785, 8.507059e+37
      %v1787 = vand.u32 %v1768, 2147483648
      %v1788 = vor.u32 1.1754944e-38, %v1787
      %v1789 = vsel %vm1786, %v1788, %v1784
      %v1790 = vmul.f32 1.0, %v1789
      %v1791 = vrcp.pop %v1769
      %v1792 = vmul.f32 %v1769, %v1791
      %v1793 = vsub.f32 1.0, %v1792
      %v1794 = vmul.f32 %v1791, %v1793
      %v1795 = vadd.f32 %v1791, %v1794
      %vm1796 = vweird.f32 %v1769
      %vm1797 = vweird.f32 %v1791
      %vm1798 = vmor %vm1796, %vm1797
      %v1799 = vsel %vm1798, %v1791, %v1795
      %v1800 = vand.u32 2147483647, %v1769
      %vm1801 = vcmp.eq.f32.partialorder %v1800, 8.507059e+37
      %v1802 = vand.u32 %v1769, 2147483648
      %v1803 = vor.u32 1.1754944e-38, %v1802
      %v1804 = vsel %vm1801, %v1803, %v1799
      %v1805 = vmul.f32 1.0, %v1804
      %v1806 = vrcp.pop %v1770
      %v1807 = vmul.f32 %v1770, %v1806
      %v1808 = vsub.f32 1.0, %v1807
      %v1809 = vmul.f32 %v1806, %v1808
      %v1810 = vadd.f32 %v1806, %v1809
      %vm1811 = vweird.f32 %v1770
      %vm1812 = vweird.f32 %v1806
      %vm1813 = vmor %vm1811, %vm1812
      %v1814 = vsel %vm1813, %v1806, %v1810
      %v1815 = vand.u32 2147483647, %v1770
      %vm1816 = vcmp.eq.f32.partialorder %v1815, 8.507059e+37
      %v1817 = vand.u32 %v1770, 2147483648
      %v1818 = vor.u32 1.1754944e-38, %v1817
      %v1819 = vsel %vm1816, %v1818, %v1814
      %v1820 = vmul.f32 1.0, %v1819
      %v1821 = vrcp.pop %v1771
      %v1822 = vmul.f32 %v1771, %v1821
      %v1823 = vsub.f32 1.0, %v1822
      %v1824 = vmul.f32 %v1821, %v1823
      %v1825 = vadd.f32 %v1821, %v1824
      %vm1826 = vweird.f32 %v1771
      %vm1827 = vweird.f32 %v1821
      %vm1828 = vmor %vm1826, %vm1827
      %v1829 = vsel %vm1828, %v1821, %v1825
      %v1830 = vand.u32 2147483647, %v1771
      %vm1831 = vcmp.eq.f32.partialorder %v1830, 8.507059e+37
      %v1832 = vand.u32 %v1771, 2147483648
      %v1833 = vor.u32 1.1754944e-38, %v1832
      %v1834 = vsel %vm1831, %v1833, %v1829
      %v1835 = vmul.f32 1.0, %v1834
      %v1836 = vrcp.pop %v1772
      %v1837 = vmul.f32 %v1772, %v1836
      %v1838 = vsub.f32 1.0, %v1837
      %v1839 = vmul.f32 %v1836, %v1838
      %v1840 = vadd.f32 %v1836, %v1839
      %vm1841 = vweird.f32 %v1772
      %vm1842 = vweird.f32 %v1836
      %vm1843 = vmor %vm1841, %vm1842
      %v1844 = vsel %vm1843, %v1836, %v1840
      %v1845 = vand.u32 2147483647, %v1772
      %vm1846 = vcmp.eq.f32.partialorder %v1845, 8.507059e+37
      %v1847 = vand.u32 %v1772, 2147483648
      %v1848 = vor.u32 1.1754944e-38, %v1847
      %v1849 = vsel %vm1846, %v1848, %v1844
      %v1850 = vmul.f32 1.0, %v1849
      %v1851 = vrcp.pop %v1773
      %v1852 = vmul.f32 %v1773, %v1851
      %v1853 = vsub.f32 1.0, %v1852
      %v1854 = vmul.f32 %v1851, %v1853
      %v1855 = vadd.f32 %v1851, %v1854
      %vm1856 = vweird.f32 %v1773
      %vm1857 = vweird.f32 %v1851
      %vm1858 = vmor %vm1856, %vm1857
      %v1859 = vsel %vm1858, %v1851, %v1855
      %v1860 = vand.u32 2147483647, %v1773
      %vm1861 = vcmp.eq.f32.partialorder %v1860, 8.507059e+37
      %v1862 = vand.u32 %v1773, 2147483648
      %v1863 = vor.u32 1.1754944e-38, %v1862
      %v1864 = vsel %vm1861, %v1863, %v1859
      %v1865 = vmul.f32 1.0, %v1864
      %v1866 = vrcp.pop %v1774
      %v1867 = vmul.f32 %v1774, %v1866
      %v1868 = vsub.f32 1.0, %v1867
      %v1869 = vmul.f32 %v1866, %v1868
      %v1870 = vadd.f32 %v1866, %v1869
      %vm1871 = vweird.f32 %v1774
      %vm1872 = vweird.f32 %v1866
      %vm1873 = vmor %vm1871, %vm1872
      %v1874 = vsel %vm1873, %v1866, %v1870
      %v1875 = vand.u32 2147483647, %v1774
      %vm1876 = vcmp.eq.f32.partialorder %v1875, 8.507059e+37
      %v1877 = vand.u32 %v1774, 2147483648
      %v1878 = vor.u32 1.1754944e-38, %v1877
      %v1879 = vsel %vm1876, %v1878, %v1874
      %v1880 = vmul.f32 1.0, %v1879
      %v1881 = vrcp.pop %v1775
      %v1882 = vmul.f32 %v1775, %v1881
      %v1883 = vsub.f32 1.0, %v1882
      %v1884 = vmul.f32 %v1881, %v1883
      %v1885 = vadd.f32 %v1881, %v1884
      %vm1886 = vweird.f32 %v1775
      %vm1887 = vweird.f32 %v1881
      %vm1888 = vmor %vm1886, %vm1887
      %v1889 = vsel %vm1888, %v1881, %v1885
      %v1890 = vand.u32 2147483647, %v1775
      %vm1891 = vcmp.eq.f32.partialorder %v1890, 8.507059e+37
      %v1892 = vand.u32 %v1775, 2147483648
      %v1893 = vor.u32 1.1754944e-38, %v1892
      %v1894 = vsel %vm1891, %v1893, %v1889
      %v1895 = vmul.f32 1.0, %v1894
      %v1896 = vmul.f32 %v1736, %v1790
      %v1897 = vmul.f32 %v1737, %v1805
      %v1898 = vmul.f32 %v1738, %v1820
      %v1899 = vmul.f32 %v1739, %v1835
      %v1900 = vmul.f32 %v1740, %v1850
      %v1901 = vmul.f32 %v1741, %v1865
      %v1902 = vmul.f32 %v1742, %v1880
      %v1903 = vmul.f32 %v1743, %v1895
      %v1904 = vpack.c.bf16 %v1897, %v1896
      %v1905 = vpack.c.bf16 %v1899, %v1898
      %v1906 = vpack.c.bf16 %v1901, %v1900
      %v1907 = vpack.c.bf16 %v1903, %v1902
      %v1908 = vld [vmem:[%s2] sm:$0xf]
      %v1909 = vld [vmem:[%s2 + $0x4] sm:$0xf]
      %v1910 = vld [vmem:[%s2 + $0x8] sm:$0xf]
      %v1911 = vld [vmem:[%s2 + $0xc] sm:$0xf]
      %v1912 = vld [vmem:[%s2 + $0x10] sm:$0xf]
      %v1913 = vld [vmem:[%s2 + $0x14] sm:$0xf]
      %v1914 = vld [vmem:[%s2 + $0x18] sm:$0xf]
      %v1915 = vld [vmem:[%s2 + $0x1c] sm:$0xf]
      %v1916 = vld [vmem:[%s2 + $0x20] sm:$0xf]
      %v1917 = vld [vmem:[%s2 + $0x24] sm:$0xf]
      %v1918 = vld [vmem:[%s2 + $0x28] sm:$0xf]
      %v1919 = vld [vmem:[%s2 + $0x2c] sm:$0xf]
      %v1920 = vld [vmem:[%s2 + $0x30] sm:$0xf]
      %v1921 = vld [vmem:[%s2 + $0x34] sm:$0xf]
      %v1922 = vld [vmem:[%s2 + $0x38] sm:$0xf]
      %v1923 = vld [vmem:[%s2 + $0x3c] sm:$0xf]
      %v1928 = vunpack.c.l.b16 %v1904
      %v1929 = vunpack.c.l.b16 %v1905
      %v1930 = vunpack.c.l.b16 %v1906
      %v1931 = vunpack.c.l.b16 %v1907
      %v1932 = vpack.c.b16 %v1929, %v1928
      %v1933 = vpack.c.b16 %v1931, %v1930
      %v1952 = vunpack.c.l.b16 %v1908
      %v1953 = vunpack.c.l.b16 %v1909
      %v1954 = vunpack.c.l.b16 %v1910
      %v1955 = vunpack.c.l.b16 %v1911
      %v1956 = vunpack.c.l.b16 %v1912
      %v1957 = vunpack.c.l.b16 %v1913
      %v1958 = vunpack.c.l.b16 %v1914
      %v1959 = vunpack.c.l.b16 %v1915
      %v1960 = vunpack.c.l.b16 %v1916
      %v1961 = vunpack.c.l.b16 %v1917
      %v1962 = vunpack.c.l.b16 %v1918
      %v1963 = vunpack.c.l.b16 %v1919
      %v1964 = vunpack.c.l.b16 %v1920
      %v1965 = vunpack.c.l.b16 %v1921
      %v1966 = vunpack.c.l.b16 %v1922
      %v1967 = vunpack.c.l.b16 %v1923
      %v1968 = vpack.c.b16 %v1953, %v1952
      %v1969 = vpack.c.b16 %v1955, %v1954
      %v1970 = vpack.c.b16 %v1957, %v1956
      %v1971 = vpack.c.b16 %v1959, %v1958
      %v1972 = vpack.c.b16 %v1961, %v1960
      %v1973 = vpack.c.b16 %v1963, %v1962
      %v1974 = vpack.c.b16 %v1965, %v1964
      %v1975 = vpack.c.b16 %v1967, %v1966
      %1984 = vmatpush.bf16.msra.mxu0 %v1975
      %1985 = vmatpush.bf16.msra.mxu0 %v1974
      %1986 = vmatpush.bf16.msra.mxu0 %v1973
      %1987 = vmatpush.bf16.msra.mxu0 %v1972
      %1988 = vmatpush.bf16.msra.mxu0 %v1971
      %1989 = vmatpush.bf16.msra.mxu0 %v1970
      %1990 = vmatpush.bf16.msra.mxu0 %v1969
      %1991 = vmatpush.bf16.msra.mxu0 %v1968
      %1992 = vmatmul.bf16.gmra.mxu0 %v1932
      %v1993 = vpop.f32.mrf.mxu0
      %v1994 = vadd.f32 0.0, %v1993
      %v1995 = vpop.f32.mrf.mxu0
      %v1996 = vadd.f32 0.0, %v1995
      %1997 = vmatmul.bf16.gmra.mxu0 %v1933
      %v1998 = vpop.f32.mrf.mxu0
      %v1999 = vadd.f32 0.0, %v1998
      %v2000 = vpop.f32.mrf.mxu0
      %v2001 = vadd.f32 0.0, %v2000
      %2002 = vdwg.mxu0
      %v2003 = vpack.c.bf16 %v1996, %v1994
      %v2004 = vpack.c.bf16 %v2001, %v1999
      %2005 = vmatpush.bf16.msra.mxu0 %v1975
      %2006 = vmatpush.bf16.msra.mxu0 %v1974
      %2007 = vmatpush.bf16.msra.mxu0 %v1973
      %2008 = vmatpush.bf16.msra.mxu0 %v1972
      %2009 = vmatpush.bf16.msra.mxu0 %v1971
      %2010 = vmatpush.bf16.msra.mxu0 %v1970
      %2011 = vmatpush.bf16.msra.mxu0 %v1969
      %2012 = vmatpush.bf16.msra.mxu0 %v1968
      %2013 = vmatmul.bf16.gmra.mxu0 %v2003
      %v2014 = vpop.f32.mrf.mxu0
      %v2015 = vadd.f32 0.0, %v2014
      %v2016 = vpop.f32.mrf.mxu0
      %v2017 = vadd.f32 0.0, %v2016
      %2018 = vmatmul.bf16.gmra.mxu0 %v2004
      %v2019 = vpop.f32.mrf.mxu0
      %v2020 = vadd.f32 0.0, %v2019
      %v2021 = vpop.f32.mrf.mxu0
      %v2022 = vadd.f32 0.0, %v2021
      %2023 = vdwg.mxu0
      %s2024 = scalar_lea.vmem %s2, 64
      %v2025 = vld [vmem:[%s2024] sm:$0xf]
      %v2026 = vld [vmem:[%s2024 + $0x4] sm:$0xf]
      %v2027 = vld [vmem:[%s2024 + $0x8] sm:$0xf]
      %v2028 = vld [vmem:[%s2024 + $0xc] sm:$0xf]
      %v2029 = vld [vmem:[%s2024 + $0x10] sm:$0xf]
      %v2030 = vld [vmem:[%s2024 + $0x14] sm:$0xf]
      %v2031 = vld [vmem:[%s2024 + $0x18] sm:$0xf]
      %v2032 = vld [vmem:[%s2024 + $0x1c] sm:$0xf]
      %v2033 = vld [vmem:[%s2024 + $0x20] sm:$0xf]
      %v2034 = vld [vmem:[%s2024 + $0x24] sm:$0xf]
      %v2035 = vld [vmem:[%s2024 + $0x28] sm:$0xf]
      %v2036 = vld [vmem:[%s2024 + $0x2c] sm:$0xf]
      %v2037 = vld [vmem:[%s2024 + $0x30] sm:$0xf]
      %v2038 = vld [vmem:[%s2024 + $0x34] sm:$0xf]
      %v2039 = vld [vmem:[%s2024 + $0x38] sm:$0xf]
      %v2040 = vld [vmem:[%s2024 + $0x3c] sm:$0xf]
      %v2041 = vunpack.c.h.b16 %v1904
      %v2042 = vunpack.c.h.b16 %v1905
      %v2043 = vunpack.c.h.b16 %v1906
      %v2044 = vunpack.c.h.b16 %v1907
      %v2045 = vpack.c.b16 %v2042, %v2041
      %v2046 = vpack.c.b16 %v2044, %v2043
      %v2065 = vunpack.c.l.b16 %v2025
      %v2066 = vunpack.c.l.b16 %v2026
      %v2067 = vunpack.c.l.b16 %v2027
      %v2068 = vunpack.c.l.b16 %v2028
      %v2069 = vunpack.c.l.b16 %v2029
      %v2070 = vunpack.c.l.b16 %v2030
      %v2071 = vunpack.c.l.b16 %v2031
      %v2072 = vunpack.c.l.b16 %v2032
      %v2073 = vunpack.c.l.b16 %v2033
      %v2074 = vunpack.c.l.b16 %v2034
      %v2075 = vunpack.c.l.b16 %v2035
      %v2076 = vunpack.c.l.b16 %v2036
      %v2077 = vunpack.c.l.b16 %v2037
      %v2078 = vunpack.c.l.b16 %v2038
      %v2079 = vunpack.c.l.b16 %v2039
      %v2080 = vunpack.c.l.b16 %v2040
      %v2081 = vpack.c.b16 %v2066, %v2065
      %v2082 = vpack.c.b16 %v2068, %v2067
      %v2083 = vpack.c.b16 %v2070, %v2069
      %v2084 = vpack.c.b16 %v2072, %v2071
      %v2085 = vpack.c.b16 %v2074, %v2073
      %v2086 = vpack.c.b16 %v2076, %v2075
      %v2087 = vpack.c.b16 %v2078, %v2077
      %v2088 = vpack.c.b16 %v2080, %v2079
      %2097 = vmatpush.bf16.msra.mxu0 %v2088
      %2098 = vmatpush.bf16.msra.mxu0 %v2087
      %2099 = vmatpush.bf16.msra.mxu0 %v2086
      %2100 = vmatpush.bf16.msra.mxu0 %v2085
      %2101 = vmatpush.bf16.msra.mxu0 %v2084
      %2102 = vmatpush.bf16.msra.mxu0 %v2083
      %2103 = vmatpush.bf16.msra.mxu0 %v2082
      %2104 = vmatpush.bf16.msra.mxu0 %v2081
      %2105 = vmatmul.bf16.gmra.mxu0 %v2045
      %v2106 = vpop.f32.mrf.mxu0
      %v2107 = vadd.f32 0.0, %v2106
      %v2108 = vpop.f32.mrf.mxu0
      %v2109 = vadd.f32 0.0, %v2108
      %2110 = vmatmul.bf16.gmra.mxu0 %v2046
      %v2111 = vpop.f32.mrf.mxu0
      %v2112 = vadd.f32 0.0, %v2111
      %v2113 = vpop.f32.mrf.mxu0
      %v2114 = vadd.f32 0.0, %v2113
      %2115 = vdwg.mxu0
      %v2116 = vpack.c.bf16 %v2109, %v2107
      %v2117 = vpack.c.bf16 %v2114, %v2112
      %2118 = vmatpush.bf16.msra.mxu0 %v2088
      %2119 = vmatpush.bf16.msra.mxu0 %v2087
      %2120 = vmatpush.bf16.msra.mxu0 %v2086
      %2121 = vmatpush.bf16.msra.mxu0 %v2085
      %2122 = vmatpush.bf16.msra.mxu0 %v2084
      %2123 = vmatpush.bf16.msra.mxu0 %v2083
      %2124 = vmatpush.bf16.msra.mxu0 %v2082
      %2125 = vmatpush.bf16.msra.mxu0 %v2081
      %2126 = vmatmul.bf16.gmra.mxu0 %v2116
      %v2127 = vpop.f32.mrf.mxu0
      %v2128 = vadd.f32 0.0, %v2127
      %v2129 = vpop.f32.mrf.mxu0
      %v2130 = vadd.f32 0.0, %v2129
      %2131 = vmatmul.bf16.gmra.mxu0 %v2117
      %v2132 = vpop.f32.mrf.mxu0
      %v2133 = vadd.f32 0.0, %v2132
      %v2134 = vpop.f32.mrf.mxu0
      %v2135 = vadd.f32 0.0, %v2134
      %2136 = vdwg.mxu0
      %v2137 = vpack.c.bf16 %v2107, %v1994
      %v2138 = vpack.c.bf16 %v2109, %v1996
      %v2139 = vpack.c.bf16 %v2112, %v1999
      %v2140 = vpack.c.bf16 %v2114, %v2001
      %v2141 = vpack.c.bf16 %v2128, %v2015
      %v2142 = vpack.c.bf16 %v2130, %v2017
      %v2143 = vpack.c.bf16 %v2133, %v2020
      %v2144 = vpack.c.bf16 %v2135, %v2022
      %v2149 = vunpack.c.l.b16 %v2137
      %v2150 = vunpack.c.h.b16 %v2137
      %v2151 = vunpack.c.l.b16 %v2138
      %v2152 = vunpack.c.h.b16 %v2138
      %v2153 = vunpack.c.l.b16 %v2139
      %v2154 = vunpack.c.h.b16 %v2139
      %v2155 = vunpack.c.l.b16 %v2140
      %v2156 = vunpack.c.h.b16 %v2140
      %v2157 = vpack.c.b16 %v2151, %v2149
      %v2158 = vpack.c.b16 %v2152, %v2150
      %v2159 = vpack.c.b16 %v2155, %v2153
      %v2160 = vpack.c.b16 %v2156, %v2154
      %v2169 = vunpack.c.l.b16 %v2141
      %v2170 = vunpack.c.h.b16 %v2141
      %v2171 = vunpack.c.l.b16 %v2142
      %v2172 = vunpack.c.h.b16 %v2142
      %v2173 = vunpack.c.l.b16 %v2143
      %v2174 = vunpack.c.h.b16 %v2143
      %v2175 = vunpack.c.l.b16 %v2144
      %v2176 = vunpack.c.h.b16 %v2144
      %v2177 = vpack.c.b16 %v2171, %v2169
      %v2178 = vpack.c.b16 %v2172, %v2170
      %v2179 = vpack.c.b16 %v2175, %v2173
      %v2180 = vpack.c.b16 %v2176, %v2174
      %v2185 = vld [vmem:[%s685] sm:$0xf]
      %v2186 = vld [vmem:[%s685 + $0x4] sm:$0xf]
      %v2187 = vld [vmem:[%s685 + $0x8] sm:$0xf]
      %v2188 = vld [vmem:[%s685 + $0xc] sm:$0xf]
      %v2189 = vld [vmem:[%s690] sm:$0xff]
      %v2190 = vld [vmem:[%s690 + $0x8] sm:$0xff]
      %v2191 = vld [vmem:[%s690 + $0x10] sm:$0xff]
      %v2192 = vld [vmem:[%s690 + $0x18] sm:$0xff]
      %2194 = vset.pattern.permute.xlu0 0
      %2195 = vperm.xlu0 %2194, %v2189
      %v2196 = vpop.permute.xlu0 %2195
      %2199 = vset.pattern.permute.xlu0 0
      %2200 = vperm.xlu0 %2199, %v2190
      %v2201 = vpop.permute.xlu0 %2200
      %2204 = vset.pattern.permute.xlu0 0
      %2205 = vperm.xlu0 %2204, %v2191
      %v2206 = vpop.permute.xlu0 %2205
      %2209 = vset.pattern.permute.xlu0 0
      %2210 = vperm.xlu0 %2209, %v2192
      %v2211 = vpop.permute.xlu0 %2210
      %v2217 = vunpack.c.l.b16 %v2185
      %v2218 = vunpack.c.l.b16 %v2186
      %v2219 = vunpack.c.l.b16 %v2187
      %v2220 = vunpack.c.l.b16 %v2188
      %v2221 = vpack.c.b16 %v2218, %v2217
      %v2222 = vpack.c.b16 %v2220, %v2219
      %vm2223 = vcmask 785408
      %v2225 = vsel %vm2223, %v2221, 0
      %v2228 = vsel %vm2223, %v2222, 0
      %2230 = vmatpush.bf16.msra.mxu0 0
      %2231 = vmatpush.bf16.msra.mxu0 0
      %2232 = vmatpush.bf16.msra.mxu0 %v2179
      %2233 = vmatpush.bf16.msra.mxu0 %v2177
      %2234 = vmatpush.bf16.msra.mxu0 %v2159
      %2235 = vmatpush.bf16.msra.mxu0 %v2157
      %2236 = vmatpush.bf16.msra.mxu0 %v1933
      %2237 = vmatpush.bf16.msra.mxu0 %v1932
      %2238 = vmatmul.bf16.gmra.mxu0 %v2225
      %v2239 = vpop.f32.mrf.mxu0
      %v2240 = vadd.f32 %v2196, %v2239
      %v2241 = vpop.f32.mrf.mxu0
      %v2242 = vadd.f32 %v2201, %v2241
      %2243 = vmatmul.bf16.gmra.mxu0 %v2228
      %v2244 = vpop.f32.mrf.mxu0
      %v2245 = vadd.f32 %v2206, %v2244
      %v2246 = vpop.f32.mrf.mxu0
      %v2247 = vadd.f32 %v2211, %v2246
      %2248 = vdwg.mxu0
      %2249 = vmatpush.bf16.msra.mxu0 0
      %2250 = vmatpush.bf16.msra.mxu0 0
      %2251 = vmatpush.bf16.msra.mxu0 %v2180
      %2252 = vmatpush.bf16.msra.mxu0 %v2178
      %2253 = vmatpush.bf16.msra.mxu0 %v2160
      %2254 = vmatpush.bf16.msra.mxu0 %v2158
      %2255 = vmatpush.bf16.msra.mxu0 %v2046
      %2256 = vmatpush.bf16.msra.mxu0 %v2045
      %2257 = vmatmul.bf16.gmra.mxu0 %v2225
      %v2258 = vpop.f32.mrf.mxu0
      %v2259 = vadd.f32 %v2196, %v2258
      %v2260 = vpop.f32.mrf.mxu0
      %v2261 = vadd.f32 %v2201, %v2260
      %2262 = vmatmul.bf16.gmra.mxu0 %v2228
      %v2263 = vpop.f32.mrf.mxu0
      %v2264 = vadd.f32 %v2206, %v2263
      %v2265 = vpop.f32.mrf.mxu0
      %v2266 = vadd.f32 %v2211, %v2265
      %2267 = vdwg.mxu0
      %v2268 = vadd.f32 %v2240, %v793
      %v2269 = vadd.f32 %v2259, %v794
      %v2270 = vadd.f32 %v2242, %v795
      %v2271 = vadd.f32 %v2261, %v796
      %v2272 = vadd.f32 %v2245, %v797
      %v2273 = vadd.f32 %v2264, %v798
      %v2274 = vadd.f32 %v2247, %v799
      %v2275 = vadd.f32 %v2266, %v800
      %v2276 = vadd.f32 %v2268, %v2269
      %2277 = vadd.xlane.f32.xlu0 %v2276
      %v2278 = vpop.xlane.xlu0 %2277
      %v2279 = vadd.f32 %v2270, %v2271
      %2280 = vadd.xlane.f32.xlu0 %v2279
      %v2281 = vpop.xlane.xlu0 %2280
      %v2282 = vadd.f32 %v2272, %v2273
      %2283 = vadd.xlane.f32.xlu0 %v2282
      %v2284 = vpop.xlane.xlu0 %2283
      %v2285 = vadd.f32 %v2274, %v2275
      %2286 = vadd.xlane.f32.xlu0 %v2285
      %v2287 = vpop.xlane.xlu0 %2286
      %v2288 = vrcp.pop 256.0
      %v2289 = vmul.f32 256.0, %v2288
      %v2290 = vsub.f32 1.0, %v2289
      %v2291 = vmul.f32 %v2288, %v2290
      %v2292 = vadd.f32 %v2288, %v2291
      %vm2293 = vweird.f32 %v2288
      %v2294 = vsel %vm2293, %v2288, %v2292
      %v2295 = vmul.f32 %v2278, %v2294
      %v2296 = vmul.f32 %v2281, %v2294
      %v2297 = vmul.f32 %v2284, %v2294
      %v2298 = vmul.f32 %v2287, %v2294
      %v2299 = vsub.f32 %v2268, %v2295
      %v2300 = vsub.f32 %v2269, %v2295
      %v2301 = vsub.f32 %v2270, %v2296
      %v2302 = vsub.f32 %v2271, %v2296
      %v2303 = vsub.f32 %v2272, %v2297
      %v2304 = vsub.f32 %v2273, %v2297
      %v2305 = vsub.f32 %v2274, %v2298
      %v2306 = vsub.f32 %v2275, %v2298
      %v2307 = vmul.f32 %v2299, %v2299
      %v2308 = vmul.f32 %v2300, %v2300
      %v2309 = vmul.f32 %v2301, %v2301
      %v2310 = vmul.f32 %v2302, %v2302
      %v2311 = vmul.f32 %v2303, %v2303
      %v2312 = vmul.f32 %v2304, %v2304
      %v2313 = vmul.f32 %v2305, %v2305
      %v2314 = vmul.f32 %v2306, %v2306
      %v2315 = vadd.f32 %v2307, %v2308
      %2316 = vadd.xlane.f32.xlu0 %v2315
      %v2317 = vpop.xlane.xlu0 %2316
      %v2318 = vadd.f32 %v2309, %v2310
      %2319 = vadd.xlane.f32.xlu0 %v2318
      %v2320 = vpop.xlane.xlu0 %2319
      %v2321 = vadd.f32 %v2311, %v2312
      %2322 = vadd.xlane.f32.xlu0 %v2321
      %v2323 = vpop.xlane.xlu0 %2322
      %v2324 = vadd.f32 %v2313, %v2314
      %2325 = vadd.xlane.f32.xlu0 %v2324
      %v2326 = vpop.xlane.xlu0 %2325
      %v2327 = vmul.f32 %v2317, %v2294
      %v2328 = vmul.f32 %v2320, %v2294
      %v2329 = vmul.f32 %v2323, %v2294
      %v2330 = vmul.f32 %v2326, %v2294
      %v2331 = vadd.f32 %v2327, 1e-05
      %v2332 = vadd.f32 %v2328, 1e-05
      %v2333 = vadd.f32 %v2329, 1e-05
      %v2334 = vadd.f32 %v2330, 1e-05
      %v2335 = vrsqrt.pop %v2331
      %v2336 = vmul.f32 %v2335, %v2331
      %v2337 = vmul.f32 %v2336, %v2335
      %v2338 = vmul.f32 0.5, %v2337
      %v2339 = vsub.f32 1.5, %v2338
      %v2340 = vmul.f32 %v2335, %v2339
      %vm2341 = vweird.f32 %v2331
      %vm2342 = vweird.f32 %v2335
      %vm2343 = vmor %vm2341, %vm2342
      %v2344 = vsel %vm2343, %v2335, %v2340
      %v2345 = vrsqrt.pop %v2332
      %v2346 = vmul.f32 %v2345, %v2332
      %v2347 = vmul.f32 %v2346, %v2345
      %v2348 = vmul.f32 0.5, %v2347
      %v2349 = vsub.f32 1.5, %v2348
      %v2350 = vmul.f32 %v2345, %v2349
      %vm2351 = vweird.f32 %v2332
      %vm2352 = vweird.f32 %v2345
      %vm2353 = vmor %vm2351, %vm2352
      %v2354 = vsel %vm2353, %v2345, %v2350
      %v2355 = vrsqrt.pop %v2333
      %v2356 = vmul.f32 %v2355, %v2333
      %v2357 = vmul.f32 %v2356, %v2355
      %v2358 = vmul.f32 0.5, %v2357
      %v2359 = vsub.f32 1.5, %v2358
      %v2360 = vmul.f32 %v2355, %v2359
      %vm2361 = vweird.f32 %v2333
      %vm2362 = vweird.f32 %v2355
      %vm2363 = vmor %vm2361, %vm2362
      %v2364 = vsel %vm2363, %v2355, %v2360
      %v2365 = vrsqrt.pop %v2334
      %v2366 = vmul.f32 %v2365, %v2334
      %v2367 = vmul.f32 %v2366, %v2365
      %v2368 = vmul.f32 0.5, %v2367
      %v2369 = vsub.f32 1.5, %v2368
      %v2370 = vmul.f32 %v2365, %v2369
      %vm2371 = vweird.f32 %v2334
      %vm2372 = vweird.f32 %v2365
      %vm2373 = vmor %vm2371, %vm2372
      %v2374 = vsel %vm2373, %v2365, %v2370
      %v2375 = vmul.f32 %v2299, %v2344
      %v2376 = vmul.f32 %v2300, %v2344
      %v2377 = vmul.f32 %v2301, %v2354
      %v2378 = vmul.f32 %v2302, %v2354
      %v2379 = vmul.f32 %v2303, %v2364
      %v2380 = vmul.f32 %v2304, %v2364
      %v2381 = vmul.f32 %v2305, %v2374
      %v2382 = vmul.f32 %v2306, %v2374
      %v2383 = vld [vmem:[%s695] sm:$0xff]
      %v2384 = vld [vmem:[%s695 + $0x8] sm:$0xff]
      %v2385 = vld [vmem:[%s695 + $0x10] sm:$0xff]
      %v2386 = vld [vmem:[%s695 + $0x18] sm:$0xff]
      %2388 = vset.pattern.permute.xlu0 0
      %2389 = vperm.xlu0 %2388, %v2383
      %v2390 = vpop.permute.xlu0 %2389
      %2393 = vset.pattern.permute.xlu0 0
      %2394 = vperm.xlu0 %2393, %v2384
      %v2395 = vpop.permute.xlu0 %2394
      %2398 = vset.pattern.permute.xlu0 0
      %2399 = vperm.xlu0 %2398, %v2385
      %v2400 = vpop.permute.xlu0 %2399
      %2403 = vset.pattern.permute.xlu0 0
      %2404 = vperm.xlu0 %2403, %v2386
      %v2405 = vpop.permute.xlu0 %2404
      %v2407 = vmul.f32 %v2375, %v2390
      %v2408 = vmul.f32 %v2376, %v2390
      %v2409 = vmul.f32 %v2377, %v2395
      %v2410 = vmul.f32 %v2378, %v2395
      %v2411 = vmul.f32 %v2379, %v2400
      %v2412 = vmul.f32 %v2380, %v2400
      %v2413 = vmul.f32 %v2381, %v2405
      %v2414 = vmul.f32 %v2382, %v2405
      %v2415 = vld [vmem:[%s700] sm:$0xff]
      %v2416 = vld [vmem:[%s700 + $0x8] sm:$0xff]
      %v2417 = vld [vmem:[%s700 + $0x10] sm:$0xff]
      %v2418 = vld [vmem:[%s700 + $0x18] sm:$0xff]
      %2420 = vset.pattern.permute.xlu0 0
      %2421 = vperm.xlu0 %2420, %v2415
      %v2422 = vpop.permute.xlu0 %2421
      %2425 = vset.pattern.permute.xlu0 0
      %2426 = vperm.xlu0 %2425, %v2416
      %v2427 = vpop.permute.xlu0 %2426
      %2430 = vset.pattern.permute.xlu0 0
      %2431 = vperm.xlu0 %2430, %v2417
      %v2432 = vpop.permute.xlu0 %2431
      %2435 = vset.pattern.permute.xlu0 0
      %2436 = vperm.xlu0 %2435, %v2418
      %v2437 = vpop.permute.xlu0 %2436
      %v2439 = vadd.f32 %v2407, %v2422
      %v2440 = vadd.f32 %v2408, %v2422
      %v2441 = vadd.f32 %v2409, %v2427
      %v2442 = vadd.f32 %v2410, %v2427
      %v2443 = vadd.f32 %v2411, %v2432
      %v2444 = vadd.f32 %v2412, %v2432
      %v2445 = vadd.f32 %v2413, %v2437
      %v2446 = vadd.f32 %v2414, %v2437
      %2447 = vst [vmem:[#allocation2] sm:$0xff] %v2439
      %2448 = vst [vmem:[#allocation2 + $0x8] sm:$0xff] %v2440
      %2449 = vst [vmem:[#allocation2 + $0x10] sm:$0xff] %v2441
      %2450 = vst [vmem:[#allocation2 + $0x18] sm:$0xff] %v2442
      %2451 = vst [vmem:[#allocation2 + $0x20] sm:$0xff] %v2443
      %2452 = vst [vmem:[#allocation2 + $0x28] sm:$0xff] %v2444
      %2453 = vst [vmem:[#allocation2 + $0x30] sm:$0xff] %v2445
      %2454 = vst [vmem:[#allocation2 + $0x38] sm:$0xff] %v2446
      %p2455 = scmp.lt.s32.totalorder %s33, 2
      // Predicated region
      $region93: #{autoencoder_forward.1} parent=87 // pred_check
        %p2456 = pneg %p2455
      $region94: #{autoencoder_forward.1} parent=87 // pred_check_branch
        %2458 = sbr.rel (%p2456) target = $region96
      $region95: #{autoencoder_forward.1} parent=87 // pred_region
        %2459 = vst [vmem:[%s707] sm:$0xff] %v2439
        %2460 = vst [vmem:[%s707 + $0x8] sm:$0xff] %v2440
        %2461 = vst [vmem:[%s707 + $0x10] sm:$0xff] %v2441
        %2462 = vst [vmem:[%s707 + $0x18] sm:$0xff] %v2442
        %2463 = vst [vmem:[%s707 + $0x20] sm:$0xff] %v2443
        %2464 = vst [vmem:[%s707 + $0x28] sm:$0xff] %v2444
        %2465 = vst [vmem:[%s707 + $0x30] sm:$0xff] %v2445
        %2466 = vst [vmem:[%s707 + $0x38] sm:$0xff] %v2446
      $region96: #{autoencoder_forward.1} parent=87 // pred_fallthru
        _
      %p2467 = scmp.eq.s32.totalorder %s33, 1
      // Predicated region
      $region97: #{autoencoder_forward.1} parent=87 // pred_check
        %p2468 = pneg %p2467
      $region98: #{autoencoder_forward.1} parent=87 // pred_check_branch
        %2470 = sbr.rel (%p2468) target = $region100
      $region99: #{autoencoder_forward.1} parent=87 // pred_region
        %v2471 = vld [vmem:[%s11] sm:$0xff]
        %v2472 = vld [vmem:[%s12] sm:$0xff]
        %2474 = vset.pattern.permute.xlu0 0
        %2475 = vperm.xlu0 %2474, %v2472
        %v2476 = vpop.permute.xlu0 %2475
        %v2479 = vsel %vm1549, %v2471, 0
        %2481 = vmatpush.msra.mxu0 0.0
        %2482 = vmatpush.msra.mxu0 0.0
        %2483 = vmatpush.msra.mxu0 0.0
        %2484 = vmatpush.msra.mxu0 0.0
        %2485 = vmatpush.msra.mxu0 0.0
        %2486 = vmatpush.msra.mxu0 0.0
        %2487 = vmatpush.msra.mxu0 0.0
        %2488 = vmatpush.msra.mxu0 0.0
        %2489 = vmatpush.msra.mxu0 0.0
        %2490 = vmatpush.msra.mxu0 0.0
        %2491 = vmatpush.msra.mxu0 0.0
        %2492 = vmatpush.msra.mxu0 0.0
        %2493 = vmatpush.msra.mxu0 %v2445
        %2494 = vmatpush.msra.mxu0 %v2443
        %2495 = vmatpush.msra.mxu0 %v2441
        %2496 = vmatpush.msra.mxu0 %v2439
        %2497 = vmatmul.f32.gmra.mxu0 %v2479
        %v2498 = vpop.f32.mrf.mxu0
        %v2499 = vadd.f32 %v2476, %v2498
        %2500 = vdwg.mxu0
        %2501 = vmatpush.msra.mxu0 0.0
        %2502 = vmatpush.msra.mxu0 0.0
        %2503 = vmatpush.msra.mxu0 0.0
        %2504 = vmatpush.msra.mxu0 0.0
        %2505 = vmatpush.msra.mxu0 0.0
        %2506 = vmatpush.msra.mxu0 0.0
        %2507 = vmatpush.msra.mxu0 0.0
        %2508 = vmatpush.msra.mxu0 0.0
        %2509 = vmatpush.msra.mxu0 0.0
        %2510 = vmatpush.msra.mxu0 0.0
        %2511 = vmatpush.msra.mxu0 0.0
        %2512 = vmatpush.msra.mxu0 0.0
        %2513 = vmatpush.msra.mxu0 %v2446
        %2514 = vmatpush.msra.mxu0 %v2444
        %2515 = vmatpush.msra.mxu0 %v2442
        %2516 = vmatpush.msra.mxu0 %v2440
        %2517 = vmatmul.f32.gmra.mxu0 %v2479
        %v2518 = vpop.f32.mrf.mxu0
        %v2519 = vadd.f32 %v2476, %v2518
        %2520 = vdwg.mxu0
        %2521 = vst [vmem:[%s18] sm:$0xff] %v2499
        %2522 = vst [vmem:[%s18 + $0x8] sm:$0xff] %v2519
        %v2523 = vld [vmem:[%s13] sm:$0xff]
        %v2524 = vld [vmem:[%s13 + $0x8] sm:$0xff]
        %v2525 = vld [vmem:[%s13 + $0x10] sm:$0xff]
        %v2526 = vld [vmem:[%s13 + $0x18] sm:$0xff]
        %v2527 = vld [vmem:[%s14] sm:$0xff]
        %v2528 = vld [vmem:[%s14 + $0x8] sm:$0xff]
        %v2529 = vld [vmem:[%s14 + $0x10] sm:$0xff]
        %v2530 = vld [vmem:[%s14 + $0x18] sm:$0xff]
        %2532 = vset.pattern.permute.xlu0 0
        %2533 = vperm.xlu0 %2532, %v2527
        %v2534 = vpop.permute.xlu0 %2533
        %2537 = vset.pattern.permute.xlu0 0
        %2538 = vperm.xlu0 %2537, %v2528
        %v2539 = vpop.permute.xlu0 %2538
        %2542 = vset.pattern.permute.xlu0 0
        %2543 = vperm.xlu0 %2542, %v2529
        %v2544 = vpop.permute.xlu0 %2543
        %2547 = vset.pattern.permute.xlu0 0
        %2548 = vperm.xlu0 %2547, %v2530
        %v2549 = vpop.permute.xlu0 %2548
        %vm2551 = vcmask 64512
        %v2553 = vsel %vm2551, %v2523, 0
        %v2556 = vsel %vm2551, %v2524, 0
        %v2559 = vsel %vm2551, %v2525, 0
        %v2562 = vsel %vm2551, %v2526, 0
        %2564 = vmatpush.msra.mxu0 0.0
        %2565 = vmatpush.msra.mxu0 0.0
        %2566 = vmatpush.msra.mxu0 0.0
        %2567 = vmatpush.msra.mxu0 0.0
        %2568 = vmatpush.msra.mxu0 0.0
        %2569 = vmatpush.msra.mxu0 0.0
        %2570 = vmatpush.msra.mxu0 0.0
        %2571 = vmatpush.msra.mxu0 0.0
        %2572 = vmatpush.msra.mxu0 0.0
        %2573 = vmatpush.msra.mxu0 0.0
        %2574 = vmatpush.msra.mxu0 0.0
        %2575 = vmatpush.msra.mxu0 0.0
        %2576 = vmatpush.msra.mxu0 0.0
        %2577 = vmatpush.msra.mxu0 0.0
        %2578 = vmatpush.msra.mxu0 0.0
        %2579 = vmatpush.msra.mxu0 %v2499
        %2580 = vmatmul.f32.gmra.mxu0 %v2553
        %v2581 = vpop.f32.mrf.mxu0
        %v2582 = vadd.f32 %v2534, %v2581
        %2583 = vmatmul.f32.gmra.mxu0 %v2556
        %v2584 = vpop.f32.mrf.mxu0
        %v2585 = vadd.f32 %v2539, %v2584
        %2586 = vmatmul.f32.gmra.mxu0 %v2559
        %v2587 = vpop.f32.mrf.mxu0
        %v2588 = vadd.f32 %v2544, %v2587
        %2589 = vmatmul.f32.gmra.mxu0 %v2562
        %v2590 = vpop.f32.mrf.mxu0
        %v2591 = vadd.f32 %v2549, %v2590
        %2592 = vdwg.mxu0
        %2593 = vmatpush.msra.mxu0 0.0
        %2594 = vmatpush.msra.mxu0 0.0
        %2595 = vmatpush.msra.mxu0 0.0
        %2596 = vmatpush.msra.mxu0 0.0
        %2597 = vmatpush.msra.mxu0 0.0
        %2598 = vmatpush.msra.mxu0 0.0
        %2599 = vmatpush.msra.mxu0 0.0
        %2600 = vmatpush.msra.mxu0 0.0
        %2601 = vmatpush.msra.mxu0 0.0
        %2602 = vmatpush.msra.mxu0 0.0
        %2603 = vmatpush.msra.mxu0 0.0
        %2604 = vmatpush.msra.mxu0 0.0
        %2605 = vmatpush.msra.mxu0 0.0
        %2606 = vmatpush.msra.mxu0 0.0
        %2607 = vmatpush.msra.mxu0 0.0
        %2608 = vmatpush.msra.mxu0 %v2519
        %2609 = vmatmul.f32.gmra.mxu0 %v2553
        %v2610 = vpop.f32.mrf.mxu0
        %v2611 = vadd.f32 %v2534, %v2610
        %2612 = vmatmul.f32.gmra.mxu0 %v2556
        %v2613 = vpop.f32.mrf.mxu0
        %v2614 = vadd.f32 %v2539, %v2613
        %2615 = vmatmul.f32.gmra.mxu0 %v2559
        %v2616 = vpop.f32.mrf.mxu0
        %v2617 = vadd.f32 %v2544, %v2616
        %2618 = vmatmul.f32.gmra.mxu0 %v2562
        %v2619 = vpop.f32.mrf.mxu0
        %v2620 = vadd.f32 %v2549, %v2619
        %2621 = vdwg.mxu0
        %2622 = vst [vmem:[#allocation2] sm:$0xff] %v2582
        %2623 = vst [vmem:[#allocation2 + $0x8] sm:$0xff] %v2611
        %2624 = vst [vmem:[#allocation2 + $0x10] sm:$0xff] %v2585
        %2625 = vst [vmem:[#allocation2 + $0x18] sm:$0xff] %v2614
        %2626 = vst [vmem:[#allocation2 + $0x20] sm:$0xff] %v2588
        %2627 = vst [vmem:[#allocation2 + $0x28] sm:$0xff] %v2617
        %2628 = vst [vmem:[#allocation2 + $0x30] sm:$0xff] %v2591
        %2629 = vst [vmem:[#allocation2 + $0x38] sm:$0xff] %v2620
      $region100: #{autoencoder_forward.1} parent=87 // pred_fallthru
        _
      %p2630 = scmp.eq.s32.totalorder %s33, 3
      // Predicated region
      $region101: #{autoencoder_forward.1} parent=87 // pred_check
        %p2631 = pneg %p2630
      $region102: #{autoencoder_forward.1} parent=87 // pred_check_branch
        %2633 = sbr.rel (%p2631) target = $region104
      $region103: #{autoencoder_forward.1} parent=87 // pred_region
        %v2634 = vld [vmem:[%s15] sm:$0xff]
        %v2635 = vld [vmem:[%s15 + $0x8] sm:$0xff]
        %v2636 = vld [vmem:[%s15 + $0x10] sm:$0xff]
        %v2637 = vld [vmem:[%s15 + $0x18] sm:$0xff]
        %2639 = vset.pattern.permute.xlu0 0
        %2640 = vperm.xlu0 %2639, %v2634
        %v2641 = vpop.permute.xlu0 %2640
        %2644 = vset.pattern.permute.xlu0 0
        %2645 = vperm.xlu0 %2644, %v2635
        %v2646 = vpop.permute.xlu0 %2645
        %2649 = vset.pattern.permute.xlu0 0
        %2650 = vperm.xlu0 %2649, %v2636
        %v2651 = vpop.permute.xlu0 %2650
        %2654 = vset.pattern.permute.xlu0 0
        %2655 = vperm.xlu0 %2654, %v2637
        %v2656 = vpop.permute.xlu0 %2655
        %v2658 = vmul.f32 %v2641, %v2439
        %v2659 = vmul.f32 %v2641, %v2440
        %v2660 = vmul.f32 %v2646, %v2441
        %v2661 = vmul.f32 %v2646, %v2442
        %v2662 = vmul.f32 %v2651, %v2443
        %v2663 = vmul.f32 %v2651, %v2444
        %v2664 = vmul.f32 %v2656, %v2445
        %v2665 = vmul.f32 %v2656, %v2446
        %v2666 = vadd.f32 %v2658, %v2660
        %v2667 = vadd.f32 %v2666, %v2662
        %v2668 = vadd.f32 %v2667, %v2664
        %v2669 = vrot.slane %v2668, 4
        %v2670 = vadd.f32 %v2668, %v2669
        %v2671 = vrot.slane %v2670, 2
        %v2672 = vadd.f32 %v2670, %v2671
        %v2673 = vrot.slane %v2672, 1
        %v2674 = vadd.f32 %v2672, %v2673
        %v2675 = vadd.f32 %v2659, %v2661
        %v2676 = vadd.f32 %v2675, %v2663
        %v2677 = vadd.f32 %v2676, %v2665
        %v2678 = vrot.slane %v2677, 4
        %v2679 = vadd.f32 %v2677, %v2678
        %v2680 = vrot.slane %v2679, 2
        %v2681 = vadd.f32 %v2679, %v2680
        %v2682 = vrot.slane %v2681, 1
        %v2683 = vadd.f32 %v2681, %v2682
        %v2684 = vld [vmem:[#allocation4] sm:$0x1]
        %2686 = vset.pattern.permute.xlu0 0
        %2687 = vperm.xlu0 %2686, %v2684
        %v2688 = vpop.permute.xlu0 %2687
        %v2690 = vperm.slane %v2688, 0
        %v2691 = vadd.f32 %v2674, %v2690
        %v2692 = vadd.f32 %v2683, %v2690
        %v2695 = vrot.slane %v2692, 7
        %vm2696 = vcmask 1040384
        %v2697 = vsel %vm2696, %v2691, %v2695
        %v2699 = vlaneseq
        %vm2700 = vcmp.ge.s32.totalorder %v2699, 0
        %vm2701 = vcmp.lt.s32.totalorder %v2699, 256
        %vm2702 = vmand %vm2700, %vm2701
        %2703 = vst.msk [vmem:[%s19] sm:$0x3] %vm2702, %v2697
      $region104: #{autoencoder_forward.1} parent=87 // pred_fallthru
        _
      %p2704 = scmp.lt.s32.totalorder %s33, 1
      %s2705 = scalar_select %p2704, %s33, 1
      %p2706 = scmp.lt.s32.totalorder %s2705, 1
      %s2707 = scalar_select %p2706, %s2705, 1
      %s2708 = smul.addr %s2707, 8
      %s2709 = smul.addr %s2708, 8
      %s2710 = scalar_lea.vmem %s17, %s2709
      // Predicated region
      $region105: #{autoencoder_forward.1} parent=87 // pred_check
        %p2711 = pneg %p442
      $region106: #{autoencoder_forward.1} parent=87 // pred_check_branch
        %2713 = sbr.rel (%p2711) target = $region108
      $region107: #{autoencoder_forward.1} parent=87 // pred_region
        %p2714 = scmp.lt.s32.totalorder %s33, 1
        %s2715 = scalar_select %p2714, %s33, 1
      $region108: #{autoencoder_forward.1} parent=87 // pred_fallthru
        _
      // Predicated region
      $region109: #{autoencoder_forward.1} parent=87 // pred_check
        %p2716 = pneg %p463
      $region110: #{autoencoder_forward.1} parent=87 // pred_check_branch
        %2718 = sbr.rel (%p2716) target = $region112
      $region111: #{autoencoder_forward.1} parent=87 // pred_region
        _
      $region112: #{autoencoder_forward.1} parent=87 // pred_fallthru
        _
      // Predicated region
      $region113: #{autoencoder_forward.1} parent=87 // pred_check
        %p2719 = pneg %p484
      $region114: #{autoencoder_forward.1} parent=87 // pred_check_branch
        %2721 = sbr.rel (%p2719) target = $region116
      $region115: #{autoencoder_forward.1} parent=87 // pred_region
        _
      $region116: #{autoencoder_forward.1} parent=87 // pred_fallthru
        _
      // Predicated region
      $region117: #{autoencoder_forward.1} parent=87 // pred_check
        %p2722 = pneg %p463
      $region118: #{autoencoder_forward.1} parent=87 // pred_check_branch
        %2724 = sbr.rel (%p2722) target = $region120
      $region119: #{autoencoder_forward.1} parent=87 // pred_region
        _
      $region120: #{autoencoder_forward.1} parent=87 // pred_fallthru
        _
      // Predicated region
      $region121: #{autoencoder_forward.1} parent=87 // pred_check
        %p2725 = pneg %p484
      $region122: #{autoencoder_forward.1} parent=87 // pred_check_branch
        %2727 = sbr.rel (%p2725) target = $region124
      $region123: #{autoencoder_forward.1} parent=87 // pred_region
        _
      $region124: #{autoencoder_forward.1} parent=87 // pred_fallthru
        _
    $region88: #{autoencoder_forward.1} parent=5 // pred_fallthru
      _
    %p2728 = scmp.le.s32.totalorder 2, %s28
    // Predicated region
    $region125: #{autoencoder_forward.1} parent=5 // pred_check
      %p2729 = pneg %p2728
    $region126: #{autoencoder_forward.1} parent=5 // pred_check_branch
      %2731 = sbr.rel (%p2729) target = $region128
    $region127: #{autoencoder_forward.1} parent=5 // pred_region
      %s2732 = ssub.s32 %s28, 2
      // Predicated region
      $region129: #{autoencoder_forward.1} parent=127 // pred_check
        %p2733 = pneg %p448
      $region130: #{autoencoder_forward.1} parent=127 // pred_check_branch
        %2735 = sbr.rel (%p2733) target = $region132
      $region131: #{autoencoder_forward.1} parent=127 // pred_region
        %p2736 = scmp.lt.s32.totalorder %s34, 1
        %s2737 = scalar_select %p2736, %s34, 1
        %p2738 = scmp.lt.s32.totalorder %s2737, 1
        %s2739 = scalar_select %p2738, %s2737, 1
        %s2740 = smul.addr %s2739, 8
        %s2741 = smul.addr %s2740, 8
        %s2742 = scalar_lea.vmem %s17, %s2741
      $region132: #{autoencoder_forward.1} parent=127 // pred_fallthru
        _
    $region128: #{autoencoder_forward.1} parent=5 // pred_fallthru
      _
  $region6: #{autoencoder_forward.1} parent=0 // loop_footer
    %s32 = sadd.s32 1, %s28
  $region7: #{autoencoder_forward.1} parent=0 // loop_footer_branch
    %27 = sbr.rel target = $region3
  $region8: #{autoencoder_forward.1} parent=0 // loop_exit
    _

</llo_original>
